<compile_context>
chip_gen: v6e
topology: v6e:2x2x1
jax: 0.10.0
libtpu: 0.0.40
codegen_flags: <defaults>
</compile_context>

<pallas_src>
import math

import jax
import jax.numpy as jnp
from jax import lax
from jax.experimental import pallas as pl
from jax.experimental.pallas import tpu as pltpu

_EPS = 1e-5          # torch BatchNorm1d / LayerNorm default eps
D = 256              # linear_size == d_model == dim_feedforward (monoloco config)
NUM_STAGE = 3
OUT_PAD = 128        # lane-dense padded output width (real output_size = 2)

# ----- column layout (start, width) of the per-stage weight / bias slabs ----- #
_COLS = dict(
    w1=(0, 256),          # stage Linear w1 (bn1 folded)
    enc_wqkv=(256, 768),  # encoder self-attn packed QKV (Wq pre-scaled)
    enc_wo=(1024, 256),
    enc_f1=(1280, 256),   # encoder FFN
    enc_f2=(1536, 256),
    dec_wqkv=(1792, 768), # decoder self-attn packed QKV (Wq pre-scaled)
    dec_wo=(2560, 256),
    dec_wq=(2816, 256),   # decoder cross-attn (Wq pre-scaled)
    dec_wkv=(3072, 512),
    dec_cwo=(3584, 256),
    dec_f1=(3840, 256),   # decoder FFN
    dec_f2=(4096, 256),
)
SLAB_W = 4352            # = 34 * 128 (all offsets 128-lane aligned)

# ----- row layout of the per-stage LayerNorm slab (gamma row, beta row) ------ #
_LN_ROWS = dict(enc_n1=0, enc_n2=2, enc_norm=4, dec_n1=6, dec_n2=8,
                dec_n3=10, dec_norm=12)
LN_ROWS_PAD = 16


# --------------------------- in-kernel math helpers -------------------------- #

def _wdot(x, w_ref, name):
    """Matmul against a slab slice, loaded at the point of use (bf16 MXU, f32 acc)."""
    c0, w = _COLS[name]
    return jnp.dot(x.astype(jnp.bfloat16), w_ref[0, :, c0:c0 + w],
                   preferred_element_type=jnp.float32)


def _bias(b_ref, name):
    c0, w = _COLS[name]
    return b_ref[0, :, c0:c0 + w]                    # (1, w) f32, broadcasts over rows


def _ln(z, ln_ref, name):
    r = _LN_ROWS[name]
    g = ln_ref[0, r:r + 1, :]
    b = ln_ref[0, r + 1:r + 2, :]
    mu = jnp.mean(z, axis=-1, keepdims=True)
    zc = z - mu
    var = jnp.mean(zc * zc, axis=-1, keepdims=True)
    return zc * lax.rsqrt(var + _EPS) * g + b


def _softmax_ctx(s, v):
    # s: (B, B) f32 scores (1/sqrt(d) already folded into Wq).  softmax(s) @ v with the
    # normalization deferred past the (B, D) matmul (EUP reciprocal, approx).
    s = s - jnp.max(s, axis=-1, keepdims=True)
    p = jnp.exp(s)
    ctx = jnp.dot(p, v, preferred_element_type=jnp.float32)
    return ctx * pl.reciprocal(jnp.sum(p, axis=-1, keepdims=True), approx=True)


def _mha_self(x, w_ref, b_ref, qkv_name, wo_name):
    qkv = _wdot(x, w_ref, qkv_name) + _bias(b_ref, qkv_name)         # (B, 3D)
    q, k, v = qkv[:, :D], qkv[:, D:2 * D], qkv[:, 2 * D:]
    s = lax.dot_general(q, k, (((1,), (1,)), ((), ())),
                        preferred_element_type=jnp.float32)          # (B, B)
    return _wdot(_softmax_ctx(s, v), w_ref, wo_name) + _bias(b_ref, wo_name)


def _mha_cross(xq, xkv, w_ref, b_ref):
    q = _wdot(xq, w_ref, "dec_wq") + _bias(b_ref, "dec_wq")
    kv = _wdot(xkv, w_ref, "dec_wkv") + _bias(b_ref, "dec_wkv")      # (B, 2D)
    k, v = kv[:, :D], kv[:, D:]
    s = lax.dot_general(q, k, (((1,), (1,)), ((), ())),
                        preferred_element_type=jnp.float32)
    return _wdot(_softmax_ctx(s, v), w_ref, "dec_cwo") + _bias(b_ref, "dec_cwo")


def _ffn(x, w_ref, b_ref, n1, n2):
    h = jnp.maximum(_wdot(x, w_ref, n1) + _bias(b_ref, n1), 0.0)
    return _wdot(h, w_ref, n2) + _bias(b_ref, n2)


def _stage(y, pe, w_ref, b_ref, ln_ref):
    # TransformerLinear.forward (eval): h = relu(bn1(w1(y))) ; t = Transformer(y, h)
    # ; out = y + relu(bn2(t)).  bn1 folded into w1, bn2 folded into dec_norm.
    h = jnp.maximum(_wdot(y, w_ref, "w1") + _bias(b_ref, "w1"), 0.0)
    src = y + pe
    tgt = h + pe
    # encoder layer (post-norm) + encoder final norm
    src = _ln(src + _mha_self(src, w_ref, b_ref, "enc_wqkv", "enc_wo"), ln_ref, "enc_n1")
    src = _ln(src + _ffn(src, w_ref, b_ref, "enc_f1", "enc_f2"), ln_ref, "enc_n2")
    mem = _ln(src, ln_ref, "enc_norm")
    # decoder layer (post-norm) + decoder final norm (with bn2 folded in)
    tgt = _ln(tgt + _mha_self(tgt, w_ref, b_ref, "dec_wqkv", "dec_wo"), ln_ref, "dec_n1")
    tgt = _ln(tgt + _mha_cross(tgt, mem, w_ref, b_ref), ln_ref, "dec_n2")
    tgt = _ln(tgt + _ffn(tgt, w_ref, b_ref, "dec_f1", "dec_f2"), ln_ref, "dec_n3")
    t = _ln(tgt, ln_ref, "dec_norm")
    return y + jnp.maximum(t, 0.0)


# ------------------------------ fused kernel --------------------------------- #

def _kernel(x_ref, pe_ref, hw_ref, hb_ref, tw_ref, tb_ref,
            w_ref, b_ref, ln_ref, out_ref, y_ref):
    stage = pl.program_id(0)

    @pl.when(stage == 0)
    def _():
        # head: w1 (+ folded bn1) + ReLU   (dropout = identity at inference)
        y_ref[...] = jnp.maximum(
            jnp.dot(x_ref[...], hw_ref[...], preferred_element_type=jnp.float32)
            + hb_ref[...], 0.0)

    y_ref[...] = _stage(y_ref[...], pe_ref[...], w_ref, b_ref, ln_ref)

    @pl.when(stage == pl.num_programs(0) - 1)
    def _():
        # tail linear into a lane-dense (B, 128) block (zero-padded weights)
        out_ref[...] = (jnp.dot(y_ref[...], tw_ref[...],
                                preferred_element_type=jnp.float32)
                        + tb_ref[...]).astype(out_ref.dtype)


def positional_encoding_table(seq_len, d):
    # matches PositionalEncoding buffer pe[0, :seq_len, :d]  (computed host/XLA side,
    # passed to the kernel as a VMEM operand)
    position = jnp.arange(seq_len, dtype=jnp.float32)[:, None]
    div_term = jnp.exp(jnp.arange(0, d, 2, dtype=jnp.float32) * (-math.log(10000.0) / d))
    pe = jnp.zeros((seq_len, d), jnp.float32)
    pe = pe.at[:, 0::2].set(jnp.sin(position * div_term))
    pe = pe.at[:, 1::2].set(jnp.cos(position * div_term))
    return pe


def humann_forward(x, params, out_dim=2):
    x_color = x[:, :34]                       # forward slices x[:, :34]
    B = x_color.shape[0]
    pe = positional_encoding_table(B, D)
    num_stage = params["wslab"].shape[0]

    const2 = lambda i: (0, 0)
    stage3 = lambda i: (i, 0, 0)

    out = pl.pallas_call(
        _kernel,
        grid=(num_stage,),
        in_specs=[
            pl.BlockSpec((B, 34), const2),                 # x (stays resident)
            pl.BlockSpec((B, D), const2),                  # positional encoding
            pl.BlockSpec((34, D), const2),                 # head weight (bn1 folded)
            pl.BlockSpec((1, D), const2),                  # head bias
            pl.BlockSpec((D, OUT_PAD), const2),            # tail weight (padded)
            pl.BlockSpec((1, OUT_PAD), const2),            # tail bias (padded)
            pl.BlockSpec((1, D, SLAB_W), stage3),          # per-stage bf16 weight slab
            pl.BlockSpec((1, 1, SLAB_W), stage3),          # per-stage f32 bias slab
            pl.BlockSpec((1, LN_ROWS_PAD, D), stage3),     # per-stage f32 LN slab
        ],
        out_specs=pl.BlockSpec((B, OUT_PAD), const2),
        out_shape=jax.ShapeDtypeStruct((B, OUT_PAD), jnp.float32),
        scratch_shapes=[pltpu.VMEM((B, D), jnp.float32)],  # running activation y
        compiler_params=pltpu.CompilerParams(
            dimension_semantics=("arbitrary",)),
        cost_estimate=pl.CostEstimate(
            flops=54_000_000,
            transcendentals=6 * B * B + 16 * B,
            bytes_accessed=7_000_000),
    )(x_color, pe, params["head_w"], params["head_b"],
      params["tail_w"], params["tail_b"],
      params["wslab"], params["bslab"], params["lnslab"])

    return out[:, :out_dim]


# ------------------------- parameter init & packing -------------------------- #

def init_raw_params(key, input_size=34, linear_size=256, output_size=2, num_stage=3):
    """Torch-layout parameters: Linear weights pre-transposed to (in, out);
    BatchNorm with (gamma, beta, running_mean, running_var); LayerNorm (gamma, beta)."""
    keys = iter(jax.random.split(key, 512))

    def nrm(shape, scale=0.05):
        return scale * jax.random.normal(next(keys), shape, jnp.float32)

    def lin(din, dout):
        return dict(w=nrm((din, dout)), b=nrm((1, dout), 0.01))

    def bn(d):
        return dict(g=1.0 + nrm((1, d), 0.1), b=nrm((1, d), 0.1),
                    m=nrm((1, d), 0.1), v=1.0 + jnp.abs(nrm((1, d), 0.1)))

    def ln(d):
        return dict(g=1.0 + nrm((1, d), 0.05), b=nrm((1, d), 0.05))

    def attn(d):
        return dict(wq=nrm((d, d)), wk=nrm((d, d)), wv=nrm((d, d)), wo=nrm((d, d)),
                    bq=nrm((1, d), 0.01), bk=nrm((1, d), 0.01),
                    bv=nrm((1, d), 0.01), bo=nrm((1, d), 0.01))

    def ffn(d, h):
        return dict(w1=nrm((d, h)), b1=nrm((1, h), 0.01),
                    w2=nrm((h, d)), b2=nrm((1, d), 0.01))

    def tm(d, h):    # nn.Transformer(d_model=d, nhead=1, 1 enc / 1 dec layer, dim_ff=h)
        return dict(
            enc=dict(self_attn=attn(d), norm1=ln(d), ffn=ffn(d, h), norm2=ln(d)),
            enc_norm=ln(d),
            dec=dict(self_attn=attn(d), norm1=ln(d), cross_attn=attn(d), norm2=ln(d),
                     ffn=ffn(d, h), norm3=ln(d)),
            dec_norm=ln(d))

    d = linear_size
    return dict(
        w1=lin(input_size, d), bn1=bn(d),
        stages=[dict(w1=lin(d, d), bn1=bn(d), tm=tm(d, d), bn2=bn(d))
                for _ in range(num_stage)],
        w2=lin(d, output_size))


def prepare_params(raw, output_size=2):
    """Fold BatchNorm(eval) + attention scale into weights, pack everything into
    per-stage slabs (bf16 weights / f32 biases / f32 LN params) + head/tail."""
    scale = 1.0 / math.sqrt(D)
    bf16 = jnp.bfloat16

    def fold_lin_bn(lin, bn_):
        s = bn_["g"] / jnp.sqrt(bn_["v"] + _EPS)
        return lin["w"] * s, (lin["b"] - bn_["m"]) * s + bn_["b"]

    def fold_ln_bn(ln_, bn_):
        s = bn_["g"] / jnp.sqrt(bn_["v"] + _EPS)
        return ln_["g"] * s, ln_["b"] * s - bn_["m"] * s + bn_["b"]

    wslabs, bslabs, lnslabs = [], [], []
    for sp in raw["stages"]:
        t = sp["tm"]
        w1, b1 = fold_lin_bn(sp["w1"], sp["bn1"])
        ea = t["enc"]["self_attn"]
        da = t["dec"]["self_attn"]
        ca = t["dec"]["cross_attn"]
        ef, df = t["enc"]["ffn"], t["dec"]["ffn"]

        # order must match _COLS
        wparts = [
            w1,
            jnp.concatenate([ea["wq"] * scale, ea["wk"], ea["wv"]], axis=1),
            ea["wo"], ef["w1"], ef["w2"],
            jnp.concatenate([da["wq"] * scale, da["wk"], da["wv"]], axis=1),
            da["wo"],
            ca["wq"] * scale,
            jnp.concatenate([ca["wk"], ca["wv"]], axis=1),
            ca["wo"], df["w1"], df["w2"],
        ]
        bparts = [
            b1,
            jnp.concatenate([ea["bq"] * scale, ea["bk"], ea["bv"]], axis=1),
            ea["bo"], ef["b1"], ef["b2"],
            jnp.concatenate([da["bq"] * scale, da["bk"], da["bv"]], axis=1),
            da["bo"],
            ca["bq"] * scale,
            jnp.concatenate([ca["bk"], ca["bv"]], axis=1),
            ca["bo"], df["b1"], df["b2"],
        ]
        wslabs.append(jnp.concatenate(wparts, axis=1).astype(bf16))      # (256, 4352)
        bslabs.append(jnp.concatenate(bparts, axis=1))                   # (1, 4352)

        dn_g, dn_b = fold_ln_bn(t["dec_norm"], sp["bn2"])
        ln_rows = [
            t["enc"]["norm1"]["g"], t["enc"]["norm1"]["b"],
            t["enc"]["norm2"]["g"], t["enc"]["norm2"]["b"],
            t["enc_norm"]["g"], t["enc_norm"]["b"],
            t["dec"]["norm1"]["g"], t["dec"]["norm1"]["b"],
            t["dec"]["norm2"]["g"], t["dec"]["norm2"]["b"],
            t["dec"]["norm3"]["g"], t["dec"]["norm3"]["b"],
            dn_g, dn_b,
            jnp.zeros((1, D), jnp.float32), jnp.zeros((1, D), jnp.float32),  # pad to 16
        ]
        lnslabs.append(jnp.concatenate(ln_rows, axis=0))                 # (16, 256)

    hw, hb = fold_lin_bn(raw["w1"], raw["bn1"])          # head (34,256) — tiny, keep f32
    tw = jnp.zeros((D, OUT_PAD), jnp.float32).at[:, :output_size].set(raw["w2"]["w"])
    tb = jnp.zeros((1, OUT_PAD), jnp.float32).at[:, :output_size].set(raw["w2"]["b"])

    return dict(
        head_w=hw, head_b=hb, tail_w=tw, tail_b=tb,
        wslab=jnp.stack(wslabs, axis=0),     # (3, 256, 4352) bf16
        bslab=jnp.stack(bslabs, axis=0),     # (3, 1, 4352)   f32
        lnslab=jnp.stack(lnslabs, axis=0),   # (3, 16, 256)   f32
    )


# ---------------------------------- main ------------------------------------- #

if __name__ == "__main__":
    B = 8                       # batch (== transformer "sequence" length after permute)
    IN_FEATS = 48               # forward slices x[:, :34]
    key = jax.random.PRNGKey(0)
    kx, kp = jax.random.split(key)
    x = jax.random.normal(kx, (B, IN_FEATS), jnp.float32)

    raw_params = init_raw_params(kp, input_size=34, linear_size=D,
                                 output_size=2, num_stage=NUM_STAGE)
    params = prepare_params(raw_params, output_size=2)

    fwd = jax.jit(humann_forward)
    out = fwd(x, params)
    jax.block_until_ready(out)

    assert out.shape == (B, 2) and out.dtype == jnp.float32
    assert bool(jnp.all(jnp.isfinite(out)))
    print("KERNEL_OK")
</pallas_src>

<mosaic_0001>
module attributes {stable_mosaic.version = 11 : i64} {
  func.func @_kernel(%arg0: i32, %arg1: memref<8x34xf32, #tpu.memory_space<vmem>>, %arg2: memref<8x256xf32, #tpu.memory_space<vmem>>, %arg3: memref<34x256xf32, #tpu.memory_space<vmem>>, %arg4: memref<1x256xf32, #tpu.memory_space<vmem>>, %arg5: memref<256x128xf32, #tpu.memory_space<vmem>>, %arg6: memref<1x128xf32, #tpu.memory_space<vmem>>, %arg7: memref<1x256x4352xbf16, #tpu.memory_space<vmem>>, %arg8: memref<1x1x4352xf32, #tpu.memory_space<vmem>>, %arg9: memref<1x16x256xf32, #tpu.memory_space<vmem>>, %arg10: memref<8x128xf32, #tpu.memory_space<vmem>>, %arg11: memref<8x256xf32, #tpu.memory_space<vmem>>) attributes {dimension_semantics = [#tpu.dimension_semantics<arbitrary>], iteration_bounds = array<i64: 3>, scalar_prefetch = 0 : i64, scratch_operands = 1 : i64, tpu.core_type = #tpu.core_type<tc>, window_params = [{pipeline_mode = #tpu.pipeline_mode<synchronous>, transform_indices = @transform_0, window_bounds = array<i64: 8, 34>}, {pipeline_mode = #tpu.pipeline_mode<synchronous>, transform_indices = @transform_1, window_bounds = array<i64: 8, 256>}, {pipeline_mode = #tpu.pipeline_mode<synchronous>, transform_indices = @transform_2, window_bounds = array<i64: 34, 256>}, {pipeline_mode = #tpu.pipeline_mode<synchronous>, transform_indices = @transform_3, window_bounds = array<i64: 1, 256>}, {pipeline_mode = #tpu.pipeline_mode<synchronous>, transform_indices = @transform_4, window_bounds = array<i64: 256, 128>}, {pipeline_mode = #tpu.pipeline_mode<synchronous>, transform_indices = @transform_5, window_bounds = array<i64: 1, 128>}, {transform_indices = @transform_6, window_bounds = array<i64: 1, 256, 4352>}, {transform_indices = @transform_7, window_bounds = array<i64: 1, 1, 4352>}, {transform_indices = @transform_8, window_bounds = array<i64: 1, 16, 256>}, {pipeline_mode = #tpu.pipeline_mode<synchronous>, transform_indices = @transform_9, window_bounds = array<i64: 8, 128>}]} {
    %c0_i32 = arith.constant 0 : i32
    %0 = arith.cmpi eq, %arg0, %c0_i32 : i32
    %1 = arith.extui %0 : i1 to i32
    %c0_i32_0 = arith.constant 0 : i32
    %2 = arith.cmpi ne, %1, %c0_i32_0 : i32
    scf.if %2 {
      %c0_159 = arith.constant 0 : index
      %c0_160 = arith.constant 0 : index
      %333 = vector.load %arg1[%c0_159, %c0_160] : memref<8x34xf32, #tpu.memory_space<vmem>>, vector<8x34xf32>
      %c0_161 = arith.constant 0 : index
      %c0_162 = arith.constant 0 : index
      %334 = vector.load %arg3[%c0_161, %c0_162] : memref<34x256xf32, #tpu.memory_space<vmem>>, vector<34x256xf32>
      %cst_163 = arith.constant dense<0.000000e+00> : vector<8x256xf32>
      %335 = tpu.matmul %333, %334, %cst_163 {dimension_numbers = #tpu.dot_dimension_numbers<[1], [0], [0], [1], [0, 0, 1, 1], [], []>} : vector<8x34xf32>, vector<34x256xf32>, vector<8x256xf32> -> vector<8x256xf32>
      %c0_164 = arith.constant 0 : index
      %c0_165 = arith.constant 0 : index
      %336 = vector.load %arg4[%c0_164, %c0_165] : memref<1x256xf32, #tpu.memory_space<vmem>>, vector<1x256xf32>
      %337 = vector.broadcast %336 : vector<1x256xf32> to vector<8x256xf32>
      %338 = arith.addf %335, %337 : vector<8x256xf32>
      %cst_166 = arith.constant 0.000000e+00 : f32
      %339 = vector.broadcast %cst_166 : f32 to vector<8x256xf32>
      %340 = arith.maximumf %338, %339 : vector<8x256xf32>
      %c0_167 = arith.constant 0 : index
      %c0_168 = arith.constant 0 : index
      %341 = vector.load %arg11[%c0_167, %c0_168] : memref<8x256xf32, #tpu.memory_space<vmem>>, vector<8x256xf32>
      tpu.vector_store %arg11[%c0_167, %c0_168], %340 {strides = array<i32>} : memref<8x256xf32, #tpu.memory_space<vmem>>, vector<8x256xf32>,
    } else {
    }
    %c0 = arith.constant 0 : index
    %c0_1 = arith.constant 0 : index
    %3 = vector.load %arg11[%c0, %c0_1] : memref<8x256xf32, #tpu.memory_space<vmem>>, vector<8x256xf32>
    %c0_2 = arith.constant 0 : index
    %c0_3 = arith.constant 0 : index
    %4 = vector.load %arg2[%c0_2, %c0_3] : memref<8x256xf32, #tpu.memory_space<vmem>>, vector<8x256xf32>
    %5 = arith.truncf %3 : vector<8x256xf32> to vector<8x256xbf16>
    %c0_4 = arith.constant 0 : index
    %c0_5 = arith.constant 0 : index
    %c0_6 = arith.constant 0 : index
    %6 = vector.load %arg7[%c0_4, %c0_5, %c0_6] : memref<1x256x4352xbf16, #tpu.memory_space<vmem>>, vector<1x256x256xbf16>
    %7 = vector.shape_cast %6 : vector<1x256x256xbf16> to vector<256x256xbf16>
    %cst = arith.constant dense<0.000000e+00> : vector<8x256xf32>
    %8 = tpu.matmul %5, %7, %cst {dimension_numbers = #tpu.dot_dimension_numbers<[1], [0], [0], [1], [0, 0, 1, 1], [], []>} : vector<8x256xbf16>, vector<256x256xbf16>, vector<8x256xf32> -> vector<8x256xf32>
    %c0_7 = arith.constant 0 : index
    %c0_8 = arith.constant 0 : index
    %c0_9 = arith.constant 0 : index
    %9 = vector.load %arg8[%c0_7, %c0_8, %c0_9] : memref<1x1x4352xf32, #tpu.memory_space<vmem>>, vector<1x1x256xf32>
    %10 = vector.shape_cast %9 : vector<1x1x256xf32> to vector<1x256xf32>
    %11 = vector.broadcast %10 : vector<1x256xf32> to vector<8x256xf32>
    %12 = arith.addf %8, %11 : vector<8x256xf32>
    %cst_10 = arith.constant 0.000000e+00 : f32
    %13 = vector.broadcast %cst_10 : f32 to vector<8x256xf32>
    %14 = arith.maximumf %12, %13 : vector<8x256xf32>
    %15 = arith.addf %3, %4 : vector<8x256xf32>
    %16 = arith.addf %14, %4 : vector<8x256xf32>
    %17 = arith.truncf %15 : vector<8x256xf32> to vector<8x256xbf16>
    %c0_11 = arith.constant 0 : index
    %c0_12 = arith.constant 0 : index
    %c256 = arith.constant 256 : index
    %18 = vector.load %arg7[%c0_11, %c0_12, %c256] : memref<1x256x4352xbf16, #tpu.memory_space<vmem>>, vector<1x256x768xbf16>
    %19 = vector.shape_cast %18 : vector<1x256x768xbf16> to vector<256x768xbf16>
    %cst_13 = arith.constant dense<0.000000e+00> : vector<8x768xf32>
    %20 = tpu.matmul %17, %19, %cst_13 {dimension_numbers = #tpu.dot_dimension_numbers<[1], [0], [0], [1], [0, 0, 1, 1], [], []>} : vector<8x256xbf16>, vector<256x768xbf16>, vector<8x768xf32> -> vector<8x768xf32>
    %c0_14 = arith.constant 0 : index
    %c0_15 = arith.constant 0 : index
    %c256_16 = arith.constant 256 : index
    %21 = vector.load %arg8[%c0_14, %c0_15, %c256_16] : memref<1x1x4352xf32, #tpu.memory_space<vmem>>, vector<1x1x768xf32>
    %22 = vector.shape_cast %21 : vector<1x1x768xf32> to vector<1x768xf32>
    %23 = vector.broadcast %22 : vector<1x768xf32> to vector<8x768xf32>
    %24 = arith.addf %20, %23 : vector<8x768xf32>
    %25 = vector.extract_strided_slice %24 {offsets = [0, 0], sizes = [8, 256], strides = [1, 1]} : vector<8x768xf32> to vector<8x256xf32>
    %26 = vector.extract_strided_slice %24 {offsets = [0, 256], sizes = [8, 256], strides = [1, 1]} : vector<8x768xf32> to vector<8x256xf32>
    %27 = vector.extract_strided_slice %24 {offsets = [0, 512], sizes = [8, 256], strides = [1, 1]} : vector<8x768xf32> to vector<8x256xf32>
    %cst_17 = arith.constant dense<0.000000e+00> : vector<8x8xf32>
    %28 = tpu.matmul %25, %26, %cst_17 {dimension_numbers = #tpu.dot_dimension_numbers<[1], [1], [0], [0], [0, 0, 1, 0], [], []>} : vector<8x256xf32>, vector<8x256xf32>, vector<8x8xf32> -> vector<8x8xf32>
    %cst_18 = arith.constant dense<0xFF800000> : vector<8xf32>
    %29 = vector.multi_reduction <maximumf>, %28, %cst_18 [1] : vector<8x8xf32> to vector<8xf32>
    %30 = vector.shape_cast %29 : vector<8xf32> to vector<8x1xf32>
    %31 = vector.broadcast %30 : vector<8x1xf32> to vector<8x8xf32>
    %32 = arith.subf %28, %31 : vector<8x8xf32>
    %33 = math.exp %32 : vector<8x8xf32>
    %cst_19 = arith.constant dense<0.000000e+00> : vector<8x256xf32>
    %34 = tpu.matmul %33, %27, %cst_19 {dimension_numbers = #tpu.dot_dimension_numbers<[1], [0], [0], [1], [0, 0, 1, 1], [], []>} : vector<8x8xf32>, vector<8x256xf32>, vector<8x256xf32> -> vector<8x256xf32>
    %cst_20 = arith.constant dense<0.000000e+00> : vector<8xf32>
    %35 = vector.multi_reduction <add>, %33, %cst_20 [1] : vector<8x8xf32> to vector<8xf32>
    %36 = vector.shape_cast %35 : vector<8xf32> to vector<8x1xf32>
    %37 = tpu.reciprocal %36 {approx = true} : vector<8x1xf32> -> vector<8x1xf32>
    %38 = vector.broadcast %37 : vector<8x1xf32> to vector<8x256xf32>
    %39 = arith.mulf %34, %38 : vector<8x256xf32>
    %40 = arith.truncf %39 : vector<8x256xf32> to vector<8x256xbf16>
    %c0_21 = arith.constant 0 : index
    %c0_22 = arith.constant 0 : index
    %c1024 = arith.constant 1024 : index
    %41 = vector.load %arg7[%c0_21, %c0_22, %c1024] : memref<1x256x4352xbf16, #tpu.memory_space<vmem>>, vector<1x256x256xbf16>
    %42 = vector.shape_cast %41 : vector<1x256x256xbf16> to vector<256x256xbf16>
    %cst_23 = arith.constant dense<0.000000e+00> : vector<8x256xf32>
    %43 = tpu.matmul %40, %42, %cst_23 {dimension_numbers = #tpu.dot_dimension_numbers<[1], [0], [0], [1], [0, 0, 1, 1], [], []>} : vector<8x256xbf16>, vector<256x256xbf16>, vector<8x256xf32> -> vector<8x256xf32>
    %c0_24 = arith.constant 0 : index
    %c0_25 = arith.constant 0 : index
    %c1024_26 = arith.constant 1024 : index
    %44 = vector.load %arg8[%c0_24, %c0_25, %c1024_26] : memref<1x1x4352xf32, #tpu.memory_space<vmem>>, vector<1x1x256xf32>
    %45 = vector.shape_cast %44 : vector<1x1x256xf32> to vector<1x256xf32>
    %46 = vector.broadcast %45 : vector<1x256xf32> to vector<8x256xf32>
    %47 = arith.addf %43, %46 : vector<8x256xf32>
    %48 = arith.addf %15, %47 : vector<8x256xf32>
    %c0_27 = arith.constant 0 : index
    %c0_28 = arith.constant 0 : index
    %c0_29 = arith.constant 0 : index
    %49 = vector.load %arg9[%c0_27, %c0_28, %c0_29] : memref<1x16x256xf32, #tpu.memory_space<vmem>>, vector<1x1x256xf32>
    %50 = vector.shape_cast %49 : vector<1x1x256xf32> to vector<1x256xf32>
    %c0_30 = arith.constant 0 : index
    %c1 = arith.constant 1 : index
    %c0_31 = arith.constant 0 : index
    %51 = vector.load %arg9[%c0_30, %c1, %c0_31] : memref<1x16x256xf32, #tpu.memory_space<vmem>>, vector<1x1x256xf32>
    %52 = vector.shape_cast %51 : vector<1x1x256xf32> to vector<1x256xf32>
    %cst_32 = arith.constant dense<0.000000e+00> : vector<8xf32>
    %53 = vector.multi_reduction <add>, %48, %cst_32 [1] : vector<8x256xf32> to vector<8xf32>
    %54 = vector.shape_cast %53 : vector<8xf32> to vector<8x1xf32>
    %cst_33 = arith.constant 2.560000e+02 : f32
    %55 = vector.broadcast %cst_33 : f32 to vector<8x1xf32>
    %56 = arith.divf %54, %55 : vector<8x1xf32>
    %57 = vector.broadcast %56 : vector<8x1xf32> to vector<8x256xf32>
    %58 = arith.subf %48, %57 : vector<8x256xf32>
    %59 = arith.mulf %58, %58 : vector<8x256xf32>
    %cst_34 = arith.constant dense<0.000000e+00> : vector<8xf32>
    %60 = vector.multi_reduction <add>, %59, %cst_34 [1] : vector<8x256xf32> to vector<8xf32>
    %61 = vector.shape_cast %60 : vector<8xf32> to vector<8x1xf32>
    %cst_35 = arith.constant 2.560000e+02 : f32
    %62 = vector.broadcast %cst_35 : f32 to vector<8x1xf32>
    %63 = arith.divf %61, %62 : vector<8x1xf32>
    %cst_36 = arith.constant 9.99999974E-6 : f32
    %64 = vector.broadcast %cst_36 : f32 to vector<8x1xf32>
    %65 = arith.addf %63, %64 : vector<8x1xf32>
    %66 = math.rsqrt %65 : vector<8x1xf32>
    %67 = vector.broadcast %66 : vector<8x1xf32> to vector<8x256xf32>
    %68 = arith.mulf %58, %67 : vector<8x256xf32>
    %69 = vector.broadcast %50 : vector<1x256xf32> to vector<8x256xf32>
    %70 = arith.mulf %68, %69 : vector<8x256xf32>
    %71 = vector.broadcast %52 : vector<1x256xf32> to vector<8x256xf32>
    %72 = arith.addf %70, %71 : vector<8x256xf32>
    %73 = arith.truncf %72 : vector<8x256xf32> to vector<8x256xbf16>
    %c0_37 = arith.constant 0 : index
    %c0_38 = arith.constant 0 : index
    %c1280 = arith.constant 1280 : index
    %74 = vector.load %arg7[%c0_37, %c0_38, %c1280] : memref<1x256x4352xbf16, #tpu.memory_space<vmem>>, vector<1x256x256xbf16>
    %75 = vector.shape_cast %74 : vector<1x256x256xbf16> to vector<256x256xbf16>
    %cst_39 = arith.constant dense<0.000000e+00> : vector<8x256xf32>
    %76 = tpu.matmul %73, %75, %cst_39 {dimension_numbers = #tpu.dot_dimension_numbers<[1], [0], [0], [1], [0, 0, 1, 1], [], []>} : vector<8x256xbf16>, vector<256x256xbf16>, vector<8x256xf32> -> vector<8x256xf32>
    %c0_40 = arith.constant 0 : index
    %c0_41 = arith.constant 0 : index
    %c1280_42 = arith.constant 1280 : index
    %77 = vector.load %arg8[%c0_40, %c0_41, %c1280_42] : memref<1x1x4352xf32, #tpu.memory_space<vmem>>, vector<1x1x256xf32>
    %78 = vector.shape_cast %77 : vector<1x1x256xf32> to vector<1x256xf32>
    %79 = vector.broadcast %78 : vector<1x256xf32> to vector<8x256xf32>
    %80 = arith.addf %76, %79 : vector<8x256xf32>
    %cst_43 = arith.constant 0.000000e+00 : f32
    %81 = vector.broadcast %cst_43 : f32 to vector<8x256xf32>
    %82 = arith.maximumf %80, %81 : vector<8x256xf32>
    %83 = arith.truncf %82 : vector<8x256xf32> to vector<8x256xbf16>
    %c0_44 = arith.constant 0 : index
    %c0_45 = arith.constant 0 : index
    %c1536 = arith.constant 1536 : index
    %84 = vector.load %arg7[%c0_44, %c0_45, %c1536] : memref<1x256x4352xbf16, #tpu.memory_space<vmem>>, vector<1x256x256xbf16>
    %85 = vector.shape_cast %84 : vector<1x256x256xbf16> to vector<256x256xbf16>
    %cst_46 = arith.constant dense<0.000000e+00> : vector<8x256xf32>
    %86 = tpu.matmul %83, %85, %cst_46 {dimension_numbers = #tpu.dot_dimension_numbers<[1], [0], [0], [1], [0, 0, 1, 1], [], []>} : vector<8x256xbf16>, vector<256x256xbf16>, vector<8x256xf32> -> vector<8x256xf32>
    %c0_47 = arith.constant 0 : index
    %c0_48 = arith.constant 0 : index
    %c1536_49 = arith.constant 1536 : index
    %87 = vector.load %arg8[%c0_47, %c0_48, %c1536_49] : memref<1x1x4352xf32, #tpu.memory_space<vmem>>, vector<1x1x256xf32>
    %88 = vector.shape_cast %87 : vector<1x1x256xf32> to vector<1x256xf32>
    %89 = vector.broadcast %88 : vector<1x256xf32> to vector<8x256xf32>
    %90 = arith.addf %86, %89 : vector<8x256xf32>
    %91 = arith.addf %72, %90 : vector<8x256xf32>
    %c0_50 = arith.constant 0 : index
    %c2 = arith.constant 2 : index
    %c0_51 = arith.constant 0 : index
    %92 = vector.load %arg9[%c0_50, %c2, %c0_51] : memref<1x16x256xf32, #tpu.memory_space<vmem>>, vector<1x1x256xf32>
    %93 = vector.shape_cast %92 : vector<1x1x256xf32> to vector<1x256xf32>
    %c0_52 = arith.constant 0 : index
    %c3 = arith.constant 3 : index
    %c0_53 = arith.constant 0 : index
    %94 = vector.load %arg9[%c0_52, %c3, %c0_53] : memref<1x16x256xf32, #tpu.memory_space<vmem>>, vector<1x1x256xf32>
    %95 = vector.shape_cast %94 : vector<1x1x256xf32> to vector<1x256xf32>
    %cst_54 = arith.constant dense<0.000000e+00> : vector<8xf32>
    %96 = vector.multi_reduction <add>, %91, %cst_54 [1] : vector<8x256xf32> to vector<8xf32>
    %97 = vector.shape_cast %96 : vector<8xf32> to vector<8x1xf32>
    %cst_55 = arith.constant 2.560000e+02 : f32
    %98 = vector.broadcast %cst_55 : f32 to vector<8x1xf32>
    %99 = arith.divf %97, %98 : vector<8x1xf32>
    %100 = vector.broadcast %99 : vector<8x1xf32> to vector<8x256xf32>
    %101 = arith.subf %91, %100 : vector<8x256xf32>
    %102 = arith.mulf %101, %101 : vector<8x256xf32>
    %cst_56 = arith.constant dense<0.000000e+00> : vector<8xf32>
    %103 = vector.multi_reduction <add>, %102, %cst_56 [1] : vector<8x256xf32> to vector<8xf32>
    %104 = vector.shape_cast %103 : vector<8xf32> to vector<8x1xf32>
    %cst_57 = arith.constant 2.560000e+02 : f32
    %105 = vector.broadcast %cst_57 : f32 to vector<8x1xf32>
    %106 = arith.divf %104, %105 : vector<8x1xf32>
    %cst_58 = arith.constant 9.99999974E-6 : f32
    %107 = vector.broadcast %cst_58 : f32 to vector<8x1xf32>
    %108 = arith.addf %106, %107 : vector<8x1xf32>
    %109 = math.rsqrt %108 : vector<8x1xf32>
    %110 = vector.broadcast %109 : vector<8x1xf32> to vector<8x256xf32>
    %111 = arith.mulf %101, %110 : vector<8x256xf32>
    %112 = vector.broadcast %93 : vector<1x256xf32> to vector<8x256xf32>
    %113 = arith.mulf %111, %112 : vector<8x256xf32>
    %114 = vector.broadcast %95 : vector<1x256xf32> to vector<8x256xf32>
    %115 = arith.addf %113, %114 : vector<8x256xf32>
    %c0_59 = arith.constant 0 : index
    %c4 = arith.constant 4 : index
    %c0_60 = arith.constant 0 : index
    %116 = vector.load %arg9[%c0_59, %c4, %c0_60] : memref<1x16x256xf32, #tpu.memory_space<vmem>>, vector<1x1x256xf32>
    %117 = vector.shape_cast %116 : vector<1x1x256xf32> to vector<1x256xf32>
    %c0_61 = arith.constant 0 : index
    %c5 = arith.constant 5 : index
    %c0_62 = arith.constant 0 : index
    %118 = vector.load %arg9[%c0_61, %c5, %c0_62] : memref<1x16x256xf32, #tpu.memory_space<vmem>>, vector<1x1x256xf32>
    %119 = vector.shape_cast %118 : vector<1x1x256xf32> to vector<1x256xf32>
    %cst_63 = arith.constant dense<0.000000e+00> : vector<8xf32>
    %120 = vector.multi_reduction <add>, %115, %cst_63 [1] : vector<8x256xf32> to vector<8xf32>
    %121 = vector.shape_cast %120 : vector<8xf32> to vector<8x1xf32>
    %cst_64 = arith.constant 2.560000e+02 : f32
    %122 = vector.broadcast %cst_64 : f32 to vector<8x1xf32>
    %123 = arith.divf %121, %122 : vector<8x1xf32>
    %124 = vector.broadcast %123 : vector<8x1xf32> to vector<8x256xf32>
    %125 = arith.subf %115, %124 : vector<8x256xf32>
    %126 = arith.mulf %125, %125 : vector<8x256xf32>
    %cst_65 = arith.constant dense<0.000000e+00> : vector<8xf32>
    %127 = vector.multi_reduction <add>, %126, %cst_65 [1] : vector<8x256xf32> to vector<8xf32>
    %128 = vector.shape_cast %127 : vector<8xf32> to vector<8x1xf32>
    %cst_66 = arith.constant 2.560000e+02 : f32
    %129 = vector.broadcast %cst_66 : f32 to vector<8x1xf32>
    %130 = arith.divf %128, %129 : vector<8x1xf32>
    %cst_67 = arith.constant 9.99999974E-6 : f32
    %131 = vector.broadcast %cst_67 : f32 to vector<8x1xf32>
    %132 = arith.addf %130, %131 : vector<8x1xf32>
    %133 = math.rsqrt %132 : vector<8x1xf32>
    %134 = vector.broadcast %133 : vector<8x1xf32> to vector<8x256xf32>
    %135 = arith.mulf %125, %134 : vector<8x256xf32>
    %136 = vector.broadcast %117 : vector<1x256xf32> to vector<8x256xf32>
    %137 = arith.mulf %135, %136 : vector<8x256xf32>
    %138 = vector.broadcast %119 : vector<1x256xf32> to vector<8x256xf32>
    %139 = arith.addf %137, %138 : vector<8x256xf32>
    %140 = arith.truncf %16 : vector<8x256xf32> to vector<8x256xbf16>
    %c0_68 = arith.constant 0 : index
    %c0_69 = arith.constant 0 : index
    %c1792 = arith.constant 1792 : index
    %141 = vector.load %arg7[%c0_68, %c0_69, %c1792] : memref<1x256x4352xbf16, #tpu.memory_space<vmem>>, vector<1x256x768xbf16>
    %142 = vector.shape_cast %141 : vector<1x256x768xbf16> to vector<256x768xbf16>
    %cst_70 = arith.constant dense<0.000000e+00> : vector<8x768xf32>
    %143 = tpu.matmul %140, %142, %cst_70 {dimension_numbers = #tpu.dot_dimension_numbers<[1], [0], [0], [1], [0, 0, 1, 1], [], []>} : vector<8x256xbf16>, vector<256x768xbf16>, vector<8x768xf32> -> vector<8x768xf32>
    %c0_71 = arith.constant 0 : index
    %c0_72 = arith.constant 0 : index
    %c1792_73 = arith.constant 1792 : index
    %144 = vector.load %arg8[%c0_71, %c0_72, %c1792_73] : memref<1x1x4352xf32, #tpu.memory_space<vmem>>, vector<1x1x768xf32>
    %145 = vector.shape_cast %144 : vector<1x1x768xf32> to vector<1x768xf32>
    %146 = vector.broadcast %145 : vector<1x768xf32> to vector<8x768xf32>
    %147 = arith.addf %143, %146 : vector<8x768xf32>
    %148 = vector.extract_strided_slice %147 {offsets = [0, 0], sizes = [8, 256], strides = [1, 1]} : vector<8x768xf32> to vector<8x256xf32>
    %149 = vector.extract_strided_slice %147 {offsets = [0, 256], sizes = [8, 256], strides = [1, 1]} : vector<8x768xf32> to vector<8x256xf32>
    %150 = vector.extract_strided_slice %147 {offsets = [0, 512], sizes = [8, 256], strides = [1, 1]} : vector<8x768xf32> to vector<8x256xf32>
    %cst_74 = arith.constant dense<0.000000e+00> : vector<8x8xf32>
    %151 = tpu.matmul %148, %149, %cst_74 {dimension_numbers = #tpu.dot_dimension_numbers<[1], [1], [0], [0], [0, 0, 1, 0], [], []>} : vector<8x256xf32>, vector<8x256xf32>, vector<8x8xf32> -> vector<8x8xf32>
    %cst_75 = arith.constant dense<0xFF800000> : vector<8xf32>
    %152 = vector.multi_reduction <maximumf>, %151, %cst_75 [1] : vector<8x8xf32> to vector<8xf32>
    %153 = vector.shape_cast %152 : vector<8xf32> to vector<8x1xf32>
    %154 = vector.broadcast %153 : vector<8x1xf32> to vector<8x8xf32>
    %155 = arith.subf %151, %154 : vector<8x8xf32>
    %156 = math.exp %155 : vector<8x8xf32>
    %cst_76 = arith.constant dense<0.000000e+00> : vector<8x256xf32>
    %157 = tpu.matmul %156, %150, %cst_76 {dimension_numbers = #tpu.dot_dimension_numbers<[1], [0], [0], [1], [0, 0, 1, 1], [], []>} : vector<8x8xf32>, vector<8x256xf32>, vector<8x256xf32> -> vector<8x256xf32>
    %cst_77 = arith.constant dense<0.000000e+00> : vector<8xf32>
    %158 = vector.multi_reduction <add>, %156, %cst_77 [1] : vector<8x8xf32> to vector<8xf32>
    %159 = vector.shape_cast %158 : vector<8xf32> to vector<8x1xf32>
    %160 = tpu.reciprocal %159 {approx = true} : vector<8x1xf32> -> vector<8x1xf32>
    %161 = vector.broadcast %160 : vector<8x1xf32> to vector<8x256xf32>
    %162 = arith.mulf %157, %161 : vector<8x256xf32>
    %163 = arith.truncf %162 : vector<8x256xf32> to vector<8x256xbf16>
    %c0_78 = arith.constant 0 : index
    %c0_79 = arith.constant 0 : index
    %c2560 = arith.constant 2560 : index
    %164 = vector.load %arg7[%c0_78, %c0_79, %c2560] : memref<1x256x4352xbf16, #tpu.memory_space<vmem>>, vector<1x256x256xbf16>
    %165 = vector.shape_cast %164 : vector<1x256x256xbf16> to vector<256x256xbf16>
    %cst_80 = arith.constant dense<0.000000e+00> : vector<8x256xf32>
    %166 = tpu.matmul %163, %165, %cst_80 {dimension_numbers = #tpu.dot_dimension_numbers<[1], [0], [0], [1], [0, 0, 1, 1], [], []>} : vector<8x256xbf16>, vector<256x256xbf16>, vector<8x256xf32> -> vector<8x256xf32>
    %c0_81 = arith.constant 0 : index
    %c0_82 = arith.constant 0 : index
    %c2560_83 = arith.constant 2560 : index
    %167 = vector.load %arg8[%c0_81, %c0_82, %c2560_83] : memref<1x1x4352xf32, #tpu.memory_space<vmem>>, vector<1x1x256xf32>
    %168 = vector.shape_cast %167 : vector<1x1x256xf32> to vector<1x256xf32>
    %169 = vector.broadcast %168 : vector<1x256xf32> to vector<8x256xf32>
    %170 = arith.addf %166, %169 : vector<8x256xf32>
    %171 = arith.addf %16, %170 : vector<8x256xf32>
    %c0_84 = arith.constant 0 : index
    %c6 = arith.constant 6 : index
    %c0_85 = arith.constant 0 : index
    %172 = vector.load %arg9[%c0_84, %c6, %c0_85] : memref<1x16x256xf32, #tpu.memory_space<vmem>>, vector<1x1x256xf32>
    %173 = vector.shape_cast %172 : vector<1x1x256xf32> to vector<1x256xf32>
    %c0_86 = arith.constant 0 : index
    %c7 = arith.constant 7 : index
    %c0_87 = arith.constant 0 : index
    %174 = vector.load %arg9[%c0_86, %c7, %c0_87] : memref<1x16x256xf32, #tpu.memory_space<vmem>>, vector<1x1x256xf32>
    %175 = vector.shape_cast %174 : vector<1x1x256xf32> to vector<1x256xf32>
    %cst_88 = arith.constant dense<0.000000e+00> : vector<8xf32>
    %176 = vector.multi_reduction <add>, %171, %cst_88 [1] : vector<8x256xf32> to vector<8xf32>
    %177 = vector.shape_cast %176 : vector<8xf32> to vector<8x1xf32>
    %cst_89 = arith.constant 2.560000e+02 : f32
    %178 = vector.broadcast %cst_89 : f32 to vector<8x1xf32>
    %179 = arith.divf %177, %178 : vector<8x1xf32>
    %180 = vector.broadcast %179 : vector<8x1xf32> to vector<8x256xf32>
    %181 = arith.subf %171, %180 : vector<8x256xf32>
    %182 = arith.mulf %181, %181 : vector<8x256xf32>
    %cst_90 = arith.constant dense<0.000000e+00> : vector<8xf32>
    %183 = vector.multi_reduction <add>, %182, %cst_90 [1] : vector<8x256xf32> to vector<8xf32>
    %184 = vector.shape_cast %183 : vector<8xf32> to vector<8x1xf32>
    %cst_91 = arith.constant 2.560000e+02 : f32
    %185 = vector.broadcast %cst_91 : f32 to vector<8x1xf32>
    %186 = arith.divf %184, %185 : vector<8x1xf32>
    %cst_92 = arith.constant 9.99999974E-6 : f32
    %187 = vector.broadcast %cst_92 : f32 to vector<8x1xf32>
    %188 = arith.addf %186, %187 : vector<8x1xf32>
    %189 = math.rsqrt %188 : vector<8x1xf32>
    %190 = vector.broadcast %189 : vector<8x1xf32> to vector<8x256xf32>
    %191 = arith.mulf %181, %190 : vector<8x256xf32>
    %192 = vector.broadcast %173 : vector<1x256xf32> to vector<8x256xf32>
    %193 = arith.mulf %191, %192 : vector<8x256xf32>
    %194 = vector.broadcast %175 : vector<1x256xf32> to vector<8x256xf32>
    %195 = arith.addf %193, %194 : vector<8x256xf32>
    %196 = arith.truncf %195 : vector<8x256xf32> to vector<8x256xbf16>
    %c0_93 = arith.constant 0 : index
    %c0_94 = arith.constant 0 : index
    %c2816 = arith.constant 2816 : index
    %197 = vector.load %arg7[%c0_93, %c0_94, %c2816] : memref<1x256x4352xbf16, #tpu.memory_space<vmem>>, vector<1x256x256xbf16>
    %198 = vector.shape_cast %197 : vector<1x256x256xbf16> to vector<256x256xbf16>
    %cst_95 = arith.constant dense<0.000000e+00> : vector<8x256xf32>
    %199 = tpu.matmul %196, %198, %cst_95 {dimension_numbers = #tpu.dot_dimension_numbers<[1], [0], [0], [1], [0, 0, 1, 1], [], []>} : vector<8x256xbf16>, vector<256x256xbf16>, vector<8x256xf32> -> vector<8x256xf32>
    %c0_96 = arith.constant 0 : index
    %c0_97 = arith.constant 0 : index
    %c2816_98 = arith.constant 2816 : index
    %200 = vector.load %arg8[%c0_96, %c0_97, %c2816_98] : memref<1x1x4352xf32, #tpu.memory_space<vmem>>, vector<1x1x256xf32>
    %201 = vector.shape_cast %200 : vector<1x1x256xf32> to vector<1x256xf32>
    %202 = vector.broadcast %201 : vector<1x256xf32> to vector<8x256xf32>
    %203 = arith.addf %199, %202 : vector<8x256xf32>
    %204 = arith.truncf %139 : vector<8x256xf32> to vector<8x256xbf16>
    %c0_99 = arith.constant 0 : index
    %c0_100 = arith.constant 0 : index
    %c3072 = arith.constant 3072 : index
    %205 = vector.load %arg7[%c0_99, %c0_100, %c3072] : memref<1x256x4352xbf16, #tpu.memory_space<vmem>>, vector<1x256x512xbf16>
    %206 = vector.shape_cast %205 : vector<1x256x512xbf16> to vector<256x512xbf16>
    %cst_101 = arith.constant dense<0.000000e+00> : vector<8x512xf32>
    %207 = tpu.matmul %204, %206, %cst_101 {dimension_numbers = #tpu.dot_dimension_numbers<[1], [0], [0], [1], [0, 0, 1, 1], [], []>} : vector<8x256xbf16>, vector<256x512xbf16>, vector<8x512xf32> -> vector<8x512xf32>
    %c0_102 = arith.constant 0 : index
    %c0_103 = arith.constant 0 : index
    %c3072_104 = arith.constant 3072 : index
    %208 = vector.load %arg8[%c0_102, %c0_103, %c3072_104] : memref<1x1x4352xf32, #tpu.memory_space<vmem>>, vector<1x1x512xf32>
    %209 = vector.shape_cast %208 : vector<1x1x512xf32> to vector<1x512xf32>
    %210 = vector.broadcast %209 : vector<1x512xf32> to vector<8x512xf32>
    %211 = arith.addf %207, %210 : vector<8x512xf32>
    %212 = vector.extract_strided_slice %211 {offsets = [0, 0], sizes = [8, 256], strides = [1, 1]} : vector<8x512xf32> to vector<8x256xf32>
    %213 = vector.extract_strided_slice %211 {offsets = [0, 256], sizes = [8, 256], strides = [1, 1]} : vector<8x512xf32> to vector<8x256xf32>
    %cst_105 = arith.constant dense<0.000000e+00> : vector<8x8xf32>
    %214 = tpu.matmul %203, %212, %cst_105 {dimension_numbers = #tpu.dot_dimension_numbers<[1], [1], [0], [0], [0, 0, 1, 0], [], []>} : vector<8x256xf32>, vector<8x256xf32>, vector<8x8xf32> -> vector<8x8xf32>
    %cst_106 = arith.constant dense<0xFF800000> : vector<8xf32>
    %215 = vector.multi_reduction <maximumf>, %214, %cst_106 [1] : vector<8x8xf32> to vector<8xf32>
    %216 = vector.shape_cast %215 : vector<8xf32> to vector<8x1xf32>
    %217 = vector.broadcast %216 : vector<8x1xf32> to vector<8x8xf32>
    %218 = arith.subf %214, %217 : vector<8x8xf32>
    %219 = math.exp %218 : vector<8x8xf32>
    %cst_107 = arith.constant dense<0.000000e+00> : vector<8x256xf32>
    %220 = tpu.matmul %219, %213, %cst_107 {dimension_numbers = #tpu.dot_dimension_numbers<[1], [0], [0], [1], [0, 0, 1, 1], [], []>} : vector<8x8xf32>, vector<8x256xf32>, vector<8x256xf32> -> vector<8x256xf32>
    %cst_108 = arith.constant dense<0.000000e+00> : vector<8xf32>
    %221 = vector.multi_reduction <add>, %219, %cst_108 [1] : vector<8x8xf32> to vector<8xf32>
    %222 = vector.shape_cast %221 : vector<8xf32> to vector<8x1xf32>
    %223 = tpu.reciprocal %222 {approx = true} : vector<8x1xf32> -> vector<8x1xf32>
    %224 = vector.broadcast %223 : vector<8x1xf32> to vector<8x256xf32>
    %225 = arith.mulf %220, %224 : vector<8x256xf32>
    %226 = arith.truncf %225 : vector<8x256xf32> to vector<8x256xbf16>
    %c0_109 = arith.constant 0 : index
    %c0_110 = arith.constant 0 : index
    %c3584 = arith.constant 3584 : index
    %227 = vector.load %arg7[%c0_109, %c0_110, %c3584] : memref<1x256x4352xbf16, #tpu.memory_space<vmem>>, vector<1x256x256xbf16>
    %228 = vector.shape_cast %227 : vector<1x256x256xbf16> to vector<256x256xbf16>
    %cst_111 = arith.constant dense<0.000000e+00> : vector<8x256xf32>
    %229 = tpu.matmul %226, %228, %cst_111 {dimension_numbers = #tpu.dot_dimension_numbers<[1], [0], [0], [1], [0, 0, 1, 1], [], []>} : vector<8x256xbf16>, vector<256x256xbf16>, vector<8x256xf32> -> vector<8x256xf32>
    %c0_112 = arith.constant 0 : index
    %c0_113 = arith.constant 0 : index
    %c3584_114 = arith.constant 3584 : index
    %230 = vector.load %arg8[%c0_112, %c0_113, %c3584_114] : memref<1x1x4352xf32, #tpu.memory_space<vmem>>, vector<1x1x256xf32>
    %231 = vector.shape_cast %230 : vector<1x1x256xf32> to vector<1x256xf32>
    %232 = vector.broadcast %231 : vector<1x256xf32> to vector<8x256xf32>
    %233 = arith.addf %229, %232 : vector<8x256xf32>
    %234 = arith.addf %195, %233 : vector<8x256xf32>
    %c0_115 = arith.constant 0 : index
    %c8 = arith.constant 8 : index
    %c0_116 = arith.constant 0 : index
    %235 = vector.load %arg9[%c0_115, %c8, %c0_116] : memref<1x16x256xf32, #tpu.memory_space<vmem>>, vector<1x1x256xf32>
    %236 = vector.shape_cast %235 : vector<1x1x256xf32> to vector<1x256xf32>
    %c0_117 = arith.constant 0 : index
    %c9 = arith.constant 9 : index
    %c0_118 = arith.constant 0 : index
    %237 = vector.load %arg9[%c0_117, %c9, %c0_118] : memref<1x16x256xf32, #tpu.memory_space<vmem>>, vector<1x1x256xf32>
    %238 = vector.shape_cast %237 : vector<1x1x256xf32> to vector<1x256xf32>
    %cst_119 = arith.constant dense<0.000000e+00> : vector<8xf32>
    %239 = vector.multi_reduction <add>, %234, %cst_119 [1] : vector<8x256xf32> to vector<8xf32>
    %240 = vector.shape_cast %239 : vector<8xf32> to vector<8x1xf32>
    %cst_120 = arith.constant 2.560000e+02 : f32
    %241 = vector.broadcast %cst_120 : f32 to vector<8x1xf32>
    %242 = arith.divf %240, %241 : vector<8x1xf32>
    %243 = vector.broadcast %242 : vector<8x1xf32> to vector<8x256xf32>
    %244 = arith.subf %234, %243 : vector<8x256xf32>
    %245 = arith.mulf %244, %244 : vector<8x256xf32>
    %cst_121 = arith.constant dense<0.000000e+00> : vector<8xf32>
    %246 = vector.multi_reduction <add>, %245, %cst_121 [1] : vector<8x256xf32> to vector<8xf32>
    %247 = vector.shape_cast %246 : vector<8xf32> to vector<8x1xf32>
    %cst_122 = arith.constant 2.560000e+02 : f32
    %248 = vector.broadcast %cst_122 : f32 to vector<8x1xf32>
    %249 = arith.divf %247, %248 : vector<8x1xf32>
    %cst_123 = arith.constant 9.99999974E-6 : f32
    %250 = vector.broadcast %cst_123 : f32 to vector<8x1xf32>
    %251 = arith.addf %249, %250 : vector<8x1xf32>
    %252 = math.rsqrt %251 : vector<8x1xf32>
    %253 = vector.broadcast %252 : vector<8x1xf32> to vector<8x256xf32>
    %254 = arith.mulf %244, %253 : vector<8x256xf32>
    %255 = vector.broadcast %236 : vector<1x256xf32> to vector<8x256xf32>
    %256 = arith.mulf %254, %255 : vector<8x256xf32>
    %257 = vector.broadcast %238 : vector<1x256xf32> to vector<8x256xf32>
    %258 = arith.addf %256, %257 : vector<8x256xf32>
    %259 = arith.truncf %258 : vector<8x256xf32> to vector<8x256xbf16>
    %c0_124 = arith.constant 0 : index
    %c0_125 = arith.constant 0 : index
    %c3840 = arith.constant 3840 : index
    %260 = vector.load %arg7[%c0_124, %c0_125, %c3840] : memref<1x256x4352xbf16, #tpu.memory_space<vmem>>, vector<1x256x256xbf16>
    %261 = vector.shape_cast %260 : vector<1x256x256xbf16> to vector<256x256xbf16>
    %cst_126 = arith.constant dense<0.000000e+00> : vector<8x256xf32>
    %262 = tpu.matmul %259, %261, %cst_126 {dimension_numbers = #tpu.dot_dimension_numbers<[1], [0], [0], [1], [0, 0, 1, 1], [], []>} : vector<8x256xbf16>, vector<256x256xbf16>, vector<8x256xf32> -> vector<8x256xf32>
    %c0_127 = arith.constant 0 : index
    %c0_128 = arith.constant 0 : index
    %c3840_129 = arith.constant 3840 : index
    %263 = vector.load %arg8[%c0_127, %c0_128, %c3840_129] : memref<1x1x4352xf32, #tpu.memory_space<vmem>>, vector<1x1x256xf32>
    %264 = vector.shape_cast %263 : vector<1x1x256xf32> to vector<1x256xf32>
    %265 = vector.broadcast %264 : vector<1x256xf32> to vector<8x256xf32>
    %266 = arith.addf %262, %265 : vector<8x256xf32>
    %cst_130 = arith.constant 0.000000e+00 : f32
    %267 = vector.broadcast %cst_130 : f32 to vector<8x256xf32>
    %268 = arith.maximumf %266, %267 : vector<8x256xf32>
    %269 = arith.truncf %268 : vector<8x256xf32> to vector<8x256xbf16>
    %c0_131 = arith.constant 0 : index
    %c0_132 = arith.constant 0 : index
    %c4096 = arith.constant 4096 : index
    %270 = vector.load %arg7[%c0_131, %c0_132, %c4096] : memref<1x256x4352xbf16, #tpu.memory_space<vmem>>, vector<1x256x256xbf16>
    %271 = vector.shape_cast %270 : vector<1x256x256xbf16> to vector<256x256xbf16>
    %cst_133 = arith.constant dense<0.000000e+00> : vector<8x256xf32>
    %272 = tpu.matmul %269, %271, %cst_133 {dimension_numbers = #tpu.dot_dimension_numbers<[1], [0], [0], [1], [0, 0, 1, 1], [], []>} : vector<8x256xbf16>, vector<256x256xbf16>, vector<8x256xf32> -> vector<8x256xf32>
    %c0_134 = arith.constant 0 : index
    %c0_135 = arith.constant 0 : index
    %c4096_136 = arith.constant 4096 : index
    %273 = vector.load %arg8[%c0_134, %c0_135, %c4096_136] : memref<1x1x4352xf32, #tpu.memory_space<vmem>>, vector<1x1x256xf32>
    %274 = vector.shape_cast %273 : vector<1x1x256xf32> to vector<1x256xf32>
    %275 = vector.broadcast %274 : vector<1x256xf32> to vector<8x256xf32>
    %276 = arith.addf %272, %275 : vector<8x256xf32>
    %277 = arith.addf %258, %276 : vector<8x256xf32>
    %c0_137 = arith.constant 0 : index
    %c10 = arith.constant 10 : index
    %c0_138 = arith.constant 0 : index
    %278 = vector.load %arg9[%c0_137, %c10, %c0_138] : memref<1x16x256xf32, #tpu.memory_space<vmem>>, vector<1x1x256xf32>
    %279 = vector.shape_cast %278 : vector<1x1x256xf32> to vector<1x256xf32>
    %c0_139 = arith.constant 0 : index
    %c11 = arith.constant 11 : index
    %c0_140 = arith.constant 0 : index
    %280 = vector.load %arg9[%c0_139, %c11, %c0_140] : memref<1x16x256xf32, #tpu.memory_space<vmem>>, vector<1x1x256xf32>
    %281 = vector.shape_cast %280 : vector<1x1x256xf32> to vector<1x256xf32>
    %cst_141 = arith.constant dense<0.000000e+00> : vector<8xf32>
    %282 = vector.multi_reduction <add>, %277, %cst_141 [1] : vector<8x256xf32> to vector<8xf32>
    %283 = vector.shape_cast %282 : vector<8xf32> to vector<8x1xf32>
    %cst_142 = arith.constant 2.560000e+02 : f32
    %284 = vector.broadcast %cst_142 : f32 to vector<8x1xf32>
    %285 = arith.divf %283, %284 : vector<8x1xf32>
    %286 = vector.broadcast %285 : vector<8x1xf32> to vector<8x256xf32>
    %287 = arith.subf %277, %286 : vector<8x256xf32>
    %288 = arith.mulf %287, %287 : vector<8x256xf32>
    %cst_143 = arith.constant dense<0.000000e+00> : vector<8xf32>
    %289 = vector.multi_reduction <add>, %288, %cst_143 [1] : vector<8x256xf32> to vector<8xf32>
    %290 = vector.shape_cast %289 : vector<8xf32> to vector<8x1xf32>
    %cst_144 = arith.constant 2.560000e+02 : f32
    %291 = vector.broadcast %cst_144 : f32 to vector<8x1xf32>
    %292 = arith.divf %290, %291 : vector<8x1xf32>
    %cst_145 = arith.constant 9.99999974E-6 : f32
    %293 = vector.broadcast %cst_145 : f32 to vector<8x1xf32>
    %294 = arith.addf %292, %293 : vector<8x1xf32>
    %295 = math.rsqrt %294 : vector<8x1xf32>
    %296 = vector.broadcast %295 : vector<8x1xf32> to vector<8x256xf32>
    %297 = arith.mulf %287, %296 : vector<8x256xf32>
    %298 = vector.broadcast %279 : vector<1x256xf32> to vector<8x256xf32>
    %299 = arith.mulf %297, %298 : vector<8x256xf32>
    %300 = vector.broadcast %281 : vector<1x256xf32> to vector<8x256xf32>
    %301 = arith.addf %299, %300 : vector<8x256xf32>
    %c0_146 = arith.constant 0 : index
    %c12 = arith.constant 12 : index
    %c0_147 = arith.constant 0 : index
    %302 = vector.load %arg9[%c0_146, %c12, %c0_147] : memref<1x16x256xf32, #tpu.memory_space<vmem>>, vector<1x1x256xf32>
    %303 = vector.shape_cast %302 : vector<1x1x256xf32> to vector<1x256xf32>
    %c0_148 = arith.constant 0 : index
    %c13 = arith.constant 13 : index
    %c0_149 = arith.constant 0 : index
    %304 = vector.load %arg9[%c0_148, %c13, %c0_149] : memref<1x16x256xf32, #tpu.memory_space<vmem>>, vector<1x1x256xf32>
    %305 = vector.shape_cast %304 : vector<1x1x256xf32> to vector<1x256xf32>
    %cst_150 = arith.constant dense<0.000000e+00> : vector<8xf32>
    %306 = vector.multi_reduction <add>, %301, %cst_150 [1] : vector<8x256xf32> to vector<8xf32>
    %307 = vector.shape_cast %306 : vector<8xf32> to vector<8x1xf32>
    %cst_151 = arith.constant 2.560000e+02 : f32
    %308 = vector.broadcast %cst_151 : f32 to vector<8x1xf32>
    %309 = arith.divf %307, %308 : vector<8x1xf32>
    %310 = vector.broadcast %309 : vector<8x1xf32> to vector<8x256xf32>
    %311 = arith.subf %301, %310 : vector<8x256xf32>
    %312 = arith.mulf %311, %311 : vector<8x256xf32>
    %cst_152 = arith.constant dense<0.000000e+00> : vector<8xf32>
    %313 = vector.multi_reduction <add>, %312, %cst_152 [1] : vector<8x256xf32> to vector<8xf32>
    %314 = vector.shape_cast %313 : vector<8xf32> to vector<8x1xf32>
    %cst_153 = arith.constant 2.560000e+02 : f32
    %315 = vector.broadcast %cst_153 : f32 to vector<8x1xf32>
    %316 = arith.divf %314, %315 : vector<8x1xf32>
    %cst_154 = arith.constant 9.99999974E-6 : f32
    %317 = vector.broadcast %cst_154 : f32 to vector<8x1xf32>
    %318 = arith.addf %316, %317 : vector<8x1xf32>
    %319 = math.rsqrt %318 : vector<8x1xf32>
    %320 = vector.broadcast %319 : vector<8x1xf32> to vector<8x256xf32>
    %321 = arith.mulf %311, %320 : vector<8x256xf32>
    %322 = vector.broadcast %303 : vector<1x256xf32> to vector<8x256xf32>
    %323 = arith.mulf %321, %322 : vector<8x256xf32>
    %324 = vector.broadcast %305 : vector<1x256xf32> to vector<8x256xf32>
    %325 = arith.addf %323, %324 : vector<8x256xf32>
    %cst_155 = arith.constant 0.000000e+00 : f32
    %326 = vector.broadcast %cst_155 : f32 to vector<8x256xf32>
    %327 = arith.maximumf %325, %326 : vector<8x256xf32>
    %328 = arith.addf %3, %327 : vector<8x256xf32>
    %c0_156 = arith.constant 0 : index
    %c0_157 = arith.constant 0 : index
    %329 = vector.load %arg11[%c0_156, %c0_157] : memref<8x256xf32, #tpu.memory_space<vmem>>, vector<8x256xf32>
    tpu.vector_store %arg11[%c0_156, %c0_157], %328 {strides = array<i32>} : memref<8x256xf32, #tpu.memory_space<vmem>>, vector<8x256xf32>,
    %c2_i32 = arith.constant 2 : i32
    %330 = arith.cmpi eq, %arg0, %c2_i32 : i32
    %331 = arith.extui %330 : i1 to i32
    %c0_i32_158 = arith.constant 0 : i32
    %332 = arith.cmpi ne, %331, %c0_i32_158 : i32
    scf.if %332 {
      %c0_159 = arith.constant 0 : index
      %c0_160 = arith.constant 0 : index
      %333 = vector.load %arg11[%c0_159, %c0_160] : memref<8x256xf32, #tpu.memory_space<vmem>>, vector<8x256xf32>
      %c0_161 = arith.constant 0 : index
      %c0_162 = arith.constant 0 : index
      %334 = vector.load %arg5[%c0_161, %c0_162] : memref<256x128xf32, #tpu.memory_space<vmem>>, vector<256x128xf32>
      %cst_163 = arith.constant dense<0.000000e+00> : vector<8x128xf32>
      %335 = tpu.matmul %333, %334, %cst_163 {dimension_numbers = #tpu.dot_dimension_numbers<[1], [0], [0], [1], [0, 0, 1, 1], [], []>} : vector<8x256xf32>, vector<256x128xf32>, vector<8x128xf32> -> vector<8x128xf32>
      %c0_164 = arith.constant 0 : index
      %c0_165 = arith.constant 0 : index
      %336 = vector.load %arg6[%c0_164, %c0_165] : memref<1x128xf32, #tpu.memory_space<vmem>>, vector<1x128xf32>
      %337 = vector.broadcast %336 : vector<1x128xf32> to vector<8x128xf32>
      %338 = arith.addf %335, %337 : vector<8x128xf32>
      %c0_166 = arith.constant 0 : index
      %c0_167 = arith.constant 0 : index
      %339 = vector.load %arg10[%c0_166, %c0_167] : memref<8x128xf32, #tpu.memory_space<vmem>>, vector<8x128xf32>
      tpu.vector_store %arg10[%c0_166, %c0_167], %338 {strides = array<i32>} : memref<8x128xf32, #tpu.memory_space<vmem>>, vector<8x128xf32>,
    } else {
    }
    return
  }
  func.func @transform_0(%arg0: i32) -> (i32, i32) {
    %c0_i32 = arith.constant 0 : i32
    %c0_i32_0 = arith.constant 0 : i32
    %c0_i32_1 = arith.constant 0 : i32
    return %c0_i32, %c0_i32_0 : i32, i32
  }
  func.func @transform_1(%arg0: i32) -> (i32, i32) {
    %c0_i32 = arith.constant 0 : i32
    %c0_i32_0 = arith.constant 0 : i32
    %c0_i32_1 = arith.constant 0 : i32
    return %c0_i32, %c0_i32_0 : i32, i32
  }
  func.func @transform_2(%arg0: i32) -> (i32, i32) {
    %c0_i32 = arith.constant 0 : i32
    %c0_i32_0 = arith.constant 0 : i32
    %c0_i32_1 = arith.constant 0 : i32
    return %c0_i32, %c0_i32_0 : i32, i32
  }
  func.func @transform_3(%arg0: i32) -> (i32, i32) {
    %c0_i32 = arith.constant 0 : i32
    %c0_i32_0 = arith.constant 0 : i32
    %c0_i32_1 = arith.constant 0 : i32
    return %c0_i32, %c0_i32_0 : i32, i32
  }
  func.func @transform_4(%arg0: i32) -> (i32, i32) {
    %c0_i32 = arith.constant 0 : i32
    %c0_i32_0 = arith.constant 0 : i32
    %c0_i32_1 = arith.constant 0 : i32
    return %c0_i32, %c0_i32_0 : i32, i32
  }
  func.func @transform_5(%arg0: i32) -> (i32, i32) {
    %c0_i32 = arith.constant 0 : i32
    %c0_i32_0 = arith.constant 0 : i32
    %c0_i32_1 = arith.constant 0 : i32
    return %c0_i32, %c0_i32_0 : i32, i32
  }
  func.func @transform_6(%arg0: i32) -> (i32, i32, i32) {
    %c0_i32 = arith.constant 0 : i32
    %c0_i32_0 = arith.constant 0 : i32
    %c0_i32_1 = arith.constant 0 : i32
    return %arg0, %c0_i32, %c0_i32_0 : i32, i32, i32
  }
  func.func @transform_7(%arg0: i32) -> (i32, i32, i32) {
    %c0_i32 = arith.constant 0 : i32
    %c0_i32_0 = arith.constant 0 : i32
    %c0_i32_1 = arith.constant 0 : i32
    return %arg0, %c0_i32, %c0_i32_0 : i32, i32, i32
  }
  func.func @transform_8(%arg0: i32) -> (i32, i32, i32) {
    %c0_i32 = arith.constant 0 : i32
    %c0_i32_0 = arith.constant 0 : i32
    %c0_i32_1 = arith.constant 0 : i32
    return %arg0, %c0_i32, %c0_i32_0 : i32, i32, i32
  }
  func.func @transform_9(%arg0: i32) -> (i32, i32) {
    %c0_i32 = arith.constant 0 : i32
    %c0_i32_0 = arith.constant 0 : i32
    %c0_i32_1 = arith.constant 0 : i32
    return %c0_i32, %c0_i32_0 : i32, i32
  }
}

</mosaic_0001>

<llo_original>
// kernel: humann_forward.1
$region0: #{humann_forward.1}
  #allocation0 [shape = 'u32[]', space=smem, size = 0x4, offset = 0x4, fixed_abs, tag = 'smem constant byte address 0x4 - core index']
  #allocation1 [shape = 'u32[144,128]{1,0:T(1,128)}', space=vmem, size = 0x12000, scoped, tag = 'internal scratch']
  #allocation2 [shape = 'f32[8,256]{1,0:T(8,128)}', space=vmem, size = 0x2000, scoped, tag = 'scratch operand']
  %s0 = inlined_call_operand.hbm [shape: f32[8,34], index: 0, kind: input, shape index: {}]
  %s1 = inlined_call_operand.vmem [shape: f32[8,256], index: 1, kind: input, shape index: {}]
  %s2 = inlined_call_operand.hbm [shape: f32[34,256], index: 2, kind: input, shape index: {}]
  %s3 = inlined_call_operand.hbm [shape: f32[1,256], index: 3, kind: input, shape index: {}]
  %s4 = inlined_call_operand.hbm [shape: f32[256,128], index: 4, kind: input, shape index: {}]
  %s5 = inlined_call_operand.hbm [shape: f32[1,128], index: 5, kind: input, shape index: {}]
  %s6 = inlined_call_operand.hbm [shape: bf16[3,256,4352], index: 6, kind: input, shape index: {}]
  %s7 = inlined_call_operand.hbm [shape: f32[3,1,4352], index: 7, kind: input, shape index: {}]
  %s8 = inlined_call_operand.hbm [shape: f32[3,16,256], index: 8, kind: input, shape index: {}]
  %s9 = inlined_call_operand.vmem [shape: f32[8,128], index: 9, kind: output, shape index: {}]
  %s10 = sld [smem:[#allocation0]]
  $region109: #{humann_forward.1} parent=0
    _
  %s12 = ssub.s32 1, %s10
  %s13 = scalar_select 0, %s12, %s10
  $region1: #{humann_forward.1} parent=0
    #allocation3 [shape = 'u8[4096]{0}', space=vmem, size = 0x1000, scoped, tag = 'input window, operand 0, single buffered']
    #allocation4 [shape = 's32[2]{0}', space=sflag, size = 0x8, scoped, tag = 'scoped memory for humann_forward.1']
    #allocation5 [shape = 'u8[40960]{0}', space=vmem, size = 0xa000, scoped, tag = 'input window, operand 2, single buffered']
    #allocation6 [shape = 's32[1]{0}', space=sflag, size = 0x4, scoped, tag = 'scoped memory for humann_forward.1']
    #allocation7 [shape = 'u8[1024]{0}', space=vmem, size = 0x400, scoped, tag = 'input window, operand 3, single buffered']
    #allocation8 [shape = 'u8[131072]{0}', space=vmem, size = 0x20000, scoped, tag = 'input window, operand 4, single buffered']
    #allocation9 [shape = 's32[1]{0}', space=sflag, size = 0x4, scoped, tag = 'scoped memory for humann_forward.1']
    #allocation10 [shape = 'u8[512]{0}', space=vmem, size = 0x400, scoped, tag = 'input window, operand 5, single buffered']
    #allocation11 [shape = 'u8[4456448]{0}', space=vmem, size = 0x440000, scoped, tag = 'input window, operand 6']
    #allocation12 [shape = 's32[2]{0}', space=sflag, size = 0x8, scoped, tag = 'scoped memory for humann_forward.1']
    #allocation13 [shape = 'u8[34816]{0}', space=vmem, size = 0x8800, scoped, tag = 'input window, operand 7']
    #allocation14 [shape = 'u8[32768]{0}', space=vmem, size = 0x8000, scoped, tag = 'input window, operand 8']
    #allocation15 [shape = 's32[2]{0}', space=sflag, size = 0x8, scoped, tag = 'scoped memory for humann_forward.1']
    %14 = vsyncpa [#allocation4], 0
    %15 = vsyncpa [#allocation6], 0
    %16 = vsyncpa [#allocation9], 0
    %17 = vsyncpa [#allocation12], 0
    %s18 = scalar_lea.sflag [#allocation12], 1
    %19 = vsyncpa %s18, 0
    %20 = vsyncpa [#allocation15], 0
    %s21 = scalar_lea.sflag [#allocation15], 1
    %22 = vsyncpa %s21, 0
    loop: start=0, step=1, limit=5
    $region2: #{humann_forward.1} parent=1 // loop_pre_header
      _
    $region3: #{humann_forward.1} parent=1 // loop_header
      %s24 = sphi 0, %s28
      %p25 = scmp.ge.s32.totalorder %s24, 5
      %s32 = sphi 0, %s32
      %s34 = sphi 0, %s32
      %s35 = sphi 0, %s34
      %s49 = sphi 0, %s35
      %s53 = sphi 0, %s53
      %s55 = sphi 0, %s53
      %s56 = sphi 0, %s55
      %s70 = sphi 0, %s56
      %s74 = sphi 0, %s74
      %s76 = sphi 0, %s74
      %s77 = sphi 0, %s76
      %s91 = sphi 0, %s77
      %s95 = sphi 0, %s95
      %s97 = sphi 0, %s95
      %s98 = sphi 0, %s97
      %s112 = sphi 0, %s98
      %s116 = sphi 0, %s116
      %s118 = sphi 0, %s116
      %s119 = sphi 0, %s118
      %s133 = sphi 0, %s119
      %s137 = sphi 0, %s137
      %s139 = sphi 0, %s137
      %s140 = sphi 0, %s139
      %s154 = sphi 0, %s140
      %s160 = sphi 0, %s162
      %s163 = sphi 0, %s160
      %s164 = sphi 0, %s163
      %s180 = sphi 0, %s164
      %s186 = sphi 0, %s188
      %s189 = sphi 0, %s186
      %s190 = sphi 0, %s189
      %s206 = sphi 0, %s190
      %s212 = sphi 0, %s214
      %s215 = sphi 0, %s212
      %s216 = sphi 0, %s215
      %s232 = sphi 0, %s216
      %s236 = sphi 0, %s236
      %s238 = sphi 0, %s236
      %s239 = sphi 0, %s238
      %s253 = sphi 0, %s239
    $region4: #{humann_forward.1} parent=1 // loop_header_branch
      %27 = sbr.rel (%p25) target = $region8
    $region5: #{humann_forward.1} parent=1 // loop_body
      %s29 = ssub.s32 %s24, 1
      %s30 = ssub.s32 %s24, 2
      %s31 = sadd.s32 %s24, 1
      %s33 = sadd.s32 %s32, 1
      %p36 = scmp.eq.s32.totalorder %s24, 2
      %p37 = scmp.ne.s32.totalorder %s32, %s34
      %p38 = scmp.eq.s32.totalorder %s24, 0
      %p39 = por %p37, %p38
      %p40 = scmp.ne.s32.totalorder %s32, %s34
      %p41 = scmp.eq.s32.totalorder %s29, 2
      %p42 = por %p40, %p41
      %p43 = scmp.ne.s32.totalorder %s34, %s35
      %p44 = scmp.eq.s32.totalorder %s29, 0
      %p45 = por %p43, %p44
      %p46 = scmp.ne.s32.totalorder %s34, %s35
      %p47 = scmp.eq.s32.totalorder %s30, 2
      %p48 = por %p46, %p47
      %p50 = scmp.ne.s32.totalorder %s35, %s49
      %p51 = scmp.eq.s32.totalorder %s30, 0
      %p52 = por %p50, %p51
      %s54 = sadd.s32 %s53, 1
      %p57 = scmp.eq.s32.totalorder %s24, 2
      %p58 = scmp.ne.s32.totalorder %s53, %s55
      %p59 = scmp.eq.s32.totalorder %s24, 0
      %p60 = por %p58, %p59
      %p61 = scmp.ne.s32.totalorder %s53, %s55
      %p62 = scmp.eq.s32.totalorder %s29, 2
      %p63 = por %p61, %p62
      %p64 = scmp.ne.s32.totalorder %s55, %s56
      %p65 = scmp.eq.s32.totalorder %s29, 0
      %p66 = por %p64, %p65
      %p67 = scmp.ne.s32.totalorder %s55, %s56
      %p68 = scmp.eq.s32.totalorder %s30, 2
      %p69 = por %p67, %p68
      %p71 = scmp.ne.s32.totalorder %s56, %s70
      %p72 = scmp.eq.s32.totalorder %s30, 0
      %p73 = por %p71, %p72
      %s75 = sadd.s32 %s74, 1
      %p78 = scmp.eq.s32.totalorder %s24, 2
      %p79 = scmp.ne.s32.totalorder %s74, %s76
      %p80 = scmp.eq.s32.totalorder %s24, 0
      %p81 = por %p79, %p80
      %p82 = scmp.ne.s32.totalorder %s74, %s76
      %p83 = scmp.eq.s32.totalorder %s29, 2
      %p84 = por %p82, %p83
      %p85 = scmp.ne.s32.totalorder %s76, %s77
      %p86 = scmp.eq.s32.totalorder %s29, 0
      %p87 = por %p85, %p86
      %p88 = scmp.ne.s32.totalorder %s76, %s77
      %p89 = scmp.eq.s32.totalorder %s30, 2
      %p90 = por %p88, %p89
      %p92 = scmp.ne.s32.totalorder %s77, %s91
      %p93 = scmp.eq.s32.totalorder %s30, 0
      %p94 = por %p92, %p93
      %s96 = sadd.s32 %s95, 1
      %p99 = scmp.eq.s32.totalorder %s24, 2
      %p100 = scmp.ne.s32.totalorder %s95, %s97
      %p101 = scmp.eq.s32.totalorder %s24, 0
      %p102 = por %p100, %p101
      %p103 = scmp.ne.s32.totalorder %s95, %s97
      %p104 = scmp.eq.s32.totalorder %s29, 2
      %p105 = por %p103, %p104
      %p106 = scmp.ne.s32.totalorder %s97, %s98
      %p107 = scmp.eq.s32.totalorder %s29, 0
      %p108 = por %p106, %p107
      %p109 = scmp.ne.s32.totalorder %s97, %s98
      %p110 = scmp.eq.s32.totalorder %s30, 2
      %p111 = por %p109, %p110
      %p113 = scmp.ne.s32.totalorder %s98, %s112
      %p114 = scmp.eq.s32.totalorder %s30, 0
      %p115 = por %p113, %p114
      %s117 = sadd.s32 %s116, 1
      %p120 = scmp.eq.s32.totalorder %s24, 2
      %p121 = scmp.ne.s32.totalorder %s116, %s118
      %p122 = scmp.eq.s32.totalorder %s24, 0
      %p123 = por %p121, %p122
      %p124 = scmp.ne.s32.totalorder %s116, %s118
      %p125 = scmp.eq.s32.totalorder %s29, 2
      %p126 = por %p124, %p125
      %p127 = scmp.ne.s32.totalorder %s118, %s119
      %p128 = scmp.eq.s32.totalorder %s29, 0
      %p129 = por %p127, %p128
      %p130 = scmp.ne.s32.totalorder %s118, %s119
      %p131 = scmp.eq.s32.totalorder %s30, 2
      %p132 = por %p130, %p131
      %p134 = scmp.ne.s32.totalorder %s119, %s133
      %p135 = scmp.eq.s32.totalorder %s30, 0
      %p136 = por %p134, %p135
      %s138 = sadd.s32 %s137, 1
      %p141 = scmp.eq.s32.totalorder %s24, 2
      %p142 = scmp.ne.s32.totalorder %s137, %s139
      %p143 = scmp.eq.s32.totalorder %s24, 0
      %p144 = por %p142, %p143
      %p145 = scmp.ne.s32.totalorder %s137, %s139
      %p146 = scmp.eq.s32.totalorder %s29, 2
      %p147 = por %p145, %p146
      %p148 = scmp.ne.s32.totalorder %s139, %s140
      %p149 = scmp.eq.s32.totalorder %s29, 0
      %p150 = por %p148, %p149
      %p151 = scmp.ne.s32.totalorder %s139, %s140
      %p152 = scmp.eq.s32.totalorder %s30, 2
      %p153 = por %p151, %p152
      %p155 = scmp.ne.s32.totalorder %s140, %s154
      %p156 = scmp.eq.s32.totalorder %s30, 0
      %p157 = por %p155, %p156
      %s158 = ssub.s32 %s24, %s31
      %p159 = scmp.eq.s32.totalorder %s158, 0
      %s161 = sadd.s32 %s160, 1
      %s162 = scalar_select %p159, %s160, %s161
      %p165 = pneg %p159
      %p166 = scmp.eq.s32.totalorder %s24, 2
      %p167 = por %p165, %p166
      %p168 = scmp.ne.s32.totalorder %s160, %s163
      %p169 = scmp.eq.s32.totalorder %s24, 0
      %p170 = por %p168, %p169
      %p171 = scmp.ne.s32.totalorder %s160, %s163
      %p172 = scmp.eq.s32.totalorder %s29, 2
      %p173 = por %p171, %p172
      %p174 = scmp.ne.s32.totalorder %s163, %s164
      %p175 = scmp.eq.s32.totalorder %s29, 0
      %p176 = por %p174, %p175
      %p177 = scmp.ne.s32.totalorder %s163, %s164
      %p178 = scmp.eq.s32.totalorder %s30, 2
      %p179 = por %p177, %p178
      %p181 = scmp.ne.s32.totalorder %s164, %s180
      %p182 = scmp.eq.s32.totalorder %s30, 0
      %p183 = por %p181, %p182
      %s184 = ssub.s32 %s24, %s31
      %p185 = scmp.eq.s32.totalorder %s184, 0
      %s187 = sadd.s32 %s186, 1
      %s188 = scalar_select %p185, %s186, %s187
      %p191 = pneg %p185
      %p192 = scmp.eq.s32.totalorder %s24, 2
      %p193 = por %p191, %p192
      %p194 = scmp.ne.s32.totalorder %s186, %s189
      %p195 = scmp.eq.s32.totalorder %s24, 0
      %p196 = por %p194, %p195
      %p197 = scmp.ne.s32.totalorder %s186, %s189
      %p198 = scmp.eq.s32.totalorder %s29, 2
      %p199 = por %p197, %p198
      %p200 = scmp.ne.s32.totalorder %s189, %s190
      %p201 = scmp.eq.s32.totalorder %s29, 0
      %p202 = por %p200, %p201
      %p203 = scmp.ne.s32.totalorder %s189, %s190
      %p204 = scmp.eq.s32.totalorder %s30, 2
      %p205 = por %p203, %p204
      %p207 = scmp.ne.s32.totalorder %s190, %s206
      %p208 = scmp.eq.s32.totalorder %s30, 0
      %p209 = por %p207, %p208
      %s210 = ssub.s32 %s24, %s31
      %p211 = scmp.eq.s32.totalorder %s210, 0
      %s213 = sadd.s32 %s212, 1
      %s214 = scalar_select %p211, %s212, %s213
      %p217 = pneg %p211
      %p218 = scmp.eq.s32.totalorder %s24, 2
      %p219 = por %p217, %p218
      %p220 = scmp.ne.s32.totalorder %s212, %s215
      %p221 = scmp.eq.s32.totalorder %s24, 0
      %p222 = por %p220, %p221
      %p223 = scmp.ne.s32.totalorder %s212, %s215
      %p224 = scmp.eq.s32.totalorder %s29, 2
      %p225 = por %p223, %p224
      %p226 = scmp.ne.s32.totalorder %s215, %s216
      %p227 = scmp.eq.s32.totalorder %s29, 0
      %p228 = por %p226, %p227
      %p229 = scmp.ne.s32.totalorder %s215, %s216
      %p230 = scmp.eq.s32.totalorder %s30, 2
      %p231 = por %p229, %p230
      %p233 = scmp.ne.s32.totalorder %s216, %s232
      %p234 = scmp.eq.s32.totalorder %s30, 0
      %p235 = por %p233, %p234
      %s237 = sadd.s32 %s236, 1
      %p240 = scmp.eq.s32.totalorder %s24, 2
      %p241 = scmp.ne.s32.totalorder %s236, %s238
      %p242 = scmp.eq.s32.totalorder %s24, 0
      %p243 = por %p241, %p242
      %p244 = scmp.ne.s32.totalorder %s236, %s238
      %p245 = scmp.eq.s32.totalorder %s29, 2
      %p246 = por %p244, %p245
      %p247 = scmp.ne.s32.totalorder %s238, %s239
      %p248 = scmp.eq.s32.totalorder %s29, 0
      %p249 = por %p247, %p248
      %p250 = scmp.ne.s32.totalorder %s238, %s239
      %p251 = scmp.eq.s32.totalorder %s30, 2
      %p252 = por %p250, %p251
      %p254 = scmp.ne.s32.totalorder %s239, %s253
      %p255 = scmp.eq.s32.totalorder %s30, 0
      %p256 = por %p254, %p255
      %p257 = scmp.le.s32.totalorder 1, %s24
      %p258 = scmp.lt.s32.totalorder %s24, 4
      %p259 = pnand %p257, %p258
      %p260 = pneg %p259
      // Predicated region
      $region9: #{humann_forward.1} parent=5 // pred_check
        _
      $region10: #{humann_forward.1} parent=5 // pred_check_branch
        %262 = sbr.rel (%p259) target = $region12
      $region11: #{humann_forward.1} parent=5 // pred_region
        %s263 = ssub.s32 %s24, 1
        // Predicated region
        $region13: #{humann_forward.1} parent=11 // pred_check
          %p264 = pneg %p45
        $region14: #{humann_forward.1} parent=11 // pred_check_branch
          %266 = sbr.rel (%p264) target = $region16
        $region15: #{humann_forward.1} parent=11 // pred_region
          %s268 = ssub.s32 128, 128
          %269 = vsyncadd [#allocation4], %s268
          %s271 = sshll.u32 [#allocation3], 4
          %s272 = int_to_ptr.vmem [resolvable:$true] %s271
          %274 = dma.hbm_to_vmem [thread:$0]  %s0, 128, %s272, [#allocation4]
        $region16: #{humann_forward.1} parent=11 // pred_fallthru
          _
        // Predicated region
        $region17: #{humann_forward.1} parent=11 // pred_check
          %p275 = pneg %p66
        $region18: #{humann_forward.1} parent=11 // pred_check_branch
          %277 = sbr.rel (%p275) target = $region20
        $region19: #{humann_forward.1} parent=11 // pred_region
          _
        $region20: #{humann_forward.1} parent=11 // pred_fallthru
          _
        // Predicated region
        $region21: #{humann_forward.1} parent=11 // pred_check
          %p278 = pneg %p87
        $region22: #{humann_forward.1} parent=11 // pred_check_branch
          %280 = sbr.rel (%p278) target = $region24
        $region23: #{humann_forward.1} parent=11 // pred_region
          %s282 = ssub.s32 1280, 1280
          %283 = vsyncadd [#allocation6], %s282
          %s284 = sshll.u32 [#allocation5], 4
          %s285 = int_to_ptr.vmem [resolvable:$true] %s284
          %290 = dma.hbm_to_vmem [thread:$0]  %s2, 1280, %s285, [#allocation6], 256, 256, 16
        $region24: #{humann_forward.1} parent=11 // pred_fallthru
          _
        // Predicated region
        $region25: #{humann_forward.1} parent=11 // pred_check
          %p291 = pneg %p108
        $region26: #{humann_forward.1} parent=11 // pred_check_branch
          %293 = sbr.rel (%p291) target = $region28
        $region27: #{humann_forward.1} parent=11 // pred_region
          %s295 = ssub.s32 32, 32
          %296 = vsyncadd [#allocation6], %s295
          %s298 = sshll.u32 [#allocation7], 4
          %s299 = int_to_ptr.vmem [resolvable:$true] %s298
          %301 = dma.hbm_to_vmem [thread:$0]  %s3, 32, %s299, [#allocation6]
        $region28: #{humann_forward.1} parent=11 // pred_fallthru
          _
        // Predicated region
        $region29: #{humann_forward.1} parent=11 // pred_check
          %p302 = pneg %p129
        $region30: #{humann_forward.1} parent=11 // pred_check_branch
          %304 = sbr.rel (%p302) target = $region32
        $region31: #{humann_forward.1} parent=11 // pred_region
          %s306 = ssub.s32 4096, 4096
          %307 = vsyncadd [#allocation9], %s306
          %s308 = sshll.u32 [#allocation8], 4
          %s309 = int_to_ptr.vmem [resolvable:$true] %s308
          %314 = dma.hbm_to_vmem [thread:$0]  %s4, 4096, %s309, [#allocation9], 128, 128, 8
        $region32: #{humann_forward.1} parent=11 // pred_fallthru
          _
        // Predicated region
        $region33: #{humann_forward.1} parent=11 // pred_check
          %p315 = pneg %p150
        $region34: #{humann_forward.1} parent=11 // pred_check_branch
          %317 = sbr.rel (%p315) target = $region36
        $region35: #{humann_forward.1} parent=11 // pred_region
          %s319 = ssub.s32 16, 16
          %320 = vsyncadd [#allocation9], %s319
          %s322 = sshll.u32 [#allocation10], 4
          %s323 = int_to_ptr.vmem [resolvable:$true] %s322
          %325 = dma.hbm_to_vmem [thread:$0]  %s5, 16, %s323, [#allocation9]
        $region36: #{humann_forward.1} parent=11 // pred_fallthru
          _
      $region12: #{humann_forward.1} parent=5 // pred_fallthru
        _
      %p326 = scmp.lt.s32.totalorder %s24, 3
      // Predicated region
      $region37: #{humann_forward.1} parent=5 // pred_check
        %p327 = pneg %p326
      $region38: #{humann_forward.1} parent=5 // pred_check_branch
        %329 = sbr.rel (%p327) target = $region40
      $region39: #{humann_forward.1} parent=5 // pred_region
        // Predicated region
        $region41: #{humann_forward.1} parent=39 // pred_check
          %p330 = pneg %p170
        $region42: #{humann_forward.1} parent=39 // pred_check_branch
          %332 = sbr.rel (%p330) target = $region44
        $region43: #{humann_forward.1} parent=39 // pred_region
          %s333 = sand.u32 %s24, 1
          %s334 = scalar_lea.sflag [#allocation12], %s333
          %s335 = sand.u32 %s160, 1
          %s336 = smul.addr %s335, 4352
          %s337 = scalar_lea.vmem [#allocation11], %s336
          %s339 = ssub.s32 69632, 69632
          %340 = vsyncadd %s334, %s339
          %s341 = smul.addr %s24, 1088
          %s342 = smul.addr %s341, 64
          %s343 = scalar_lea.hbm %s6, %s342
          %s344 = sshll.u32 %s337, 4
          %s345 = int_to_ptr.vmem [resolvable:$true] %s344
          %350 = dma.hbm_to_vmem [thread:$0]  %s343, 69632, %s345, %s334, 2176, 2176, 136
        $region44: #{humann_forward.1} parent=39 // pred_fallthru
          _
        // Predicated region
        $region45: #{humann_forward.1} parent=39 // pred_check
          %p351 = pneg %p196
        $region46: #{humann_forward.1} parent=39 // pred_check_branch
          %353 = sbr.rel (%p351) target = $region48
        $region47: #{humann_forward.1} parent=39 // pred_region
          %s354 = sand.u32 %s24, 1
          %s355 = scalar_lea.sflag [#allocation12], %s354
          %s356 = sand.u32 %s186, 1
          %s357 = smul.addr %s356, 34
          %s358 = scalar_lea.vmem [#allocation13], %s357
          %s360 = ssub.s32 544, 544
          %361 = vsyncadd %s355, %s360
          %s362 = smul.addr %s24, 34
          %s363 = smul.addr %s362, 16
          %s364 = scalar_lea.hbm %s7, %s363
          %s366 = sshll.u32 %s358, 4
          %s367 = int_to_ptr.vmem [resolvable:$true] %s366
          %369 = dma.hbm_to_vmem [thread:$0]  %s364, 544, %s367, %s355
        $region48: #{humann_forward.1} parent=39 // pred_fallthru
          _
        // Predicated region
        $region49: #{humann_forward.1} parent=39 // pred_check
          %p370 = pneg %p222
        $region50: #{humann_forward.1} parent=39 // pred_check_branch
          %372 = sbr.rel (%p370) target = $region52
        $region51: #{humann_forward.1} parent=39 // pred_region
          %s373 = sand.u32 %s212, 1
          %s374 = scalar_lea.sflag [#allocation15], %s373
          %s375 = sand.u32 %s212, 1
          %s376 = smul.addr %s375, 32
          %s377 = scalar_lea.vmem [#allocation14], %s376
          %s379 = ssub.s32 512, 512
          %380 = vsyncadd %s374, %s379
          %s381 = smul.addr %s24, 4
          %s382 = smul.addr %s381, 128
          %s383 = scalar_lea.hbm %s8, %s382
          %s384 = sshll.u32 %s377, 4
          %s385 = int_to_ptr.vmem [resolvable:$true] %s384
          %390 = dma.hbm_to_vmem [thread:$0]  %s383, 512, %s385, %s374, 256, 256, 16
        $region52: #{humann_forward.1} parent=39 // pred_fallthru
          _
      $region40: #{humann_forward.1} parent=5 // pred_fallthru
        _
      %p391 = scmp.le.s32.totalorder 1, %s24
      %p392 = scmp.lt.s32.totalorder %s24, 4
      %p393 = pnand %p391, %p392
      %p394 = pneg %p393
      // Predicated region
      $region53: #{humann_forward.1} parent=5 // pred_check
        _
      $region54: #{humann_forward.1} parent=5 // pred_check_branch
        %396 = sbr.rel (%p393) target = $region56
      $region55: #{humann_forward.1} parent=5 // pred_region
        %s397 = ssub.s32 %s24, 1
        // Predicated region
        $region57: #{humann_forward.1} parent=55 // pred_check
          %p398 = pneg %p45
        $region58: #{humann_forward.1} parent=55 // pred_check_branch
          %400 = sbr.rel (%p398) target = $region60
        $region59: #{humann_forward.1} parent=55 // pred_region
          %401 = dma.done [#allocation4], 128
        $region60: #{humann_forward.1} parent=55 // pred_fallthru
          _
        // Predicated region
        $region61: #{humann_forward.1} parent=55 // pred_check
          %p402 = pneg %p87
        $region62: #{humann_forward.1} parent=55 // pred_check_branch
          %404 = sbr.rel (%p402) target = $region64
        $region63: #{humann_forward.1} parent=55 // pred_region
          %405 = dma.done [#allocation6], 1280
        $region64: #{humann_forward.1} parent=55 // pred_fallthru
          _
        // Predicated region
        $region65: #{humann_forward.1} parent=55 // pred_check
          %p406 = pneg %p108
        $region66: #{humann_forward.1} parent=55 // pred_check_branch
          %408 = sbr.rel (%p406) target = $region68
        $region67: #{humann_forward.1} parent=55 // pred_region
          %409 = dma.done [#allocation6], 32
        $region68: #{humann_forward.1} parent=55 // pred_fallthru
          _
        // Predicated region
        $region69: #{humann_forward.1} parent=55 // pred_check
          %p410 = pneg %p129
        $region70: #{humann_forward.1} parent=55 // pred_check_branch
          %412 = sbr.rel (%p410) target = $region72
        $region71: #{humann_forward.1} parent=55 // pred_region
          %413 = dma.done [#allocation9], 4096
        $region72: #{humann_forward.1} parent=55 // pred_fallthru
          _
        // Predicated region
        $region73: #{humann_forward.1} parent=55 // pred_check
          %p414 = pneg %p150
        $region74: #{humann_forward.1} parent=55 // pred_check_branch
          %416 = sbr.rel (%p414) target = $region76
        $region75: #{humann_forward.1} parent=55 // pred_region
          %417 = dma.done [#allocation9], 16
        $region76: #{humann_forward.1} parent=55 // pred_fallthru
          _
        %s418 = sand.u32 %s29, 1
        %s419 = scalar_lea.sflag [#allocation12], %s418
        %s420 = sand.u32 %s163, 1
        %s421 = smul.addr %s420, 4352
        %s422 = scalar_lea.vmem [#allocation11], %s421
        // Predicated region
        $region77: #{humann_forward.1} parent=55 // pred_check
          %p423 = pneg %p176
        $region78: #{humann_forward.1} parent=55 // pred_check_branch
          %425 = sbr.rel (%p423) target = $region80
        $region79: #{humann_forward.1} parent=55 // pred_region
          %426 = dma.done %s419, 69632
        $region80: #{humann_forward.1} parent=55 // pred_fallthru
          _
        %s427 = sand.u32 %s29, 1
        %s428 = scalar_lea.sflag [#allocation12], %s427
        %s429 = sand.u32 %s189, 1
        %s430 = smul.addr %s429, 34
        %s431 = scalar_lea.vmem [#allocation13], %s430
        // Predicated region
        $region81: #{humann_forward.1} parent=55 // pred_check
          %p432 = pneg %p202
        $region82: #{humann_forward.1} parent=55 // pred_check_branch
          %434 = sbr.rel (%p432) target = $region84
        $region83: #{humann_forward.1} parent=55 // pred_region
          %435 = dma.done %s428, 544
        $region84: #{humann_forward.1} parent=55 // pred_fallthru
          _
        %s436 = sand.u32 %s215, 1
        %s437 = scalar_lea.sflag [#allocation15], %s436
        %s438 = sand.u32 %s215, 1
        %s439 = smul.addr %s438, 32
        %s440 = scalar_lea.vmem [#allocation14], %s439
        // Predicated region
        $region85: #{humann_forward.1} parent=55 // pred_check
          %p441 = pneg %p228
        $region86: #{humann_forward.1} parent=55 // pred_check_branch
          %443 = sbr.rel (%p441) target = $region88
        $region87: #{humann_forward.1} parent=55 // pred_region
          %444 = dma.done %s437, 512
        $region88: #{humann_forward.1} parent=55 // pred_fallthru
          _
        %p445 = pneg %p45
        %p446 = pneg %p42
        %p447 = pneg %p66
        %p448 = pneg %p63
        %p449 = pneg %p87
        %p450 = pneg %p84
        %p451 = pneg %p108
        %p452 = pneg %p105
        %p453 = pneg %p129
        %p454 = pneg %p126
        %p455 = pneg %p150
        %p456 = pneg %p147
        %s457 = sand.u32 %s29, 1
        %s458 = scalar_lea.sflag [#allocation12], %s457
        %s459 = sand.u32 %s163, 1
        %s460 = smul.addr %s459, 4352
        %s461 = scalar_lea.vmem [#allocation11], %s460
        %p462 = pneg %p176
        %p463 = pneg %p173
        %s464 = sand.u32 %s29, 1
        %s465 = scalar_lea.sflag [#allocation12], %s464
        %s466 = sand.u32 %s189, 1
        %s467 = smul.addr %s466, 34
        %s468 = scalar_lea.vmem [#allocation13], %s467
        %p469 = pneg %p202
        %p470 = pneg %p199
        %s471 = sand.u32 %s215, 1
        %s472 = scalar_lea.sflag [#allocation15], %s471
        %s473 = sand.u32 %s215, 1
        %s474 = smul.addr %s473, 32
        %s475 = scalar_lea.vmem [#allocation14], %s474
        %p476 = pneg %p228
        %p477 = pneg %p225
        %p478 = pneg %p249
        %p479 = pneg %p246
        %p480 = scmp.eq.s32.totalorder %s29, 0
        // Predicated region
        $region89: #{humann_forward.1} parent=55 // pred_check
          %p481 = pneg %p480
        $region90: #{humann_forward.1} parent=55 // pred_check_branch
          %483 = sbr.rel (%p481) target = $region92
        $region91: #{humann_forward.1} parent=55 // pred_region
          %v484 = vld [vmem:[#allocation3] sm:$0xff]
          %v485 = vld [vmem:[#allocation5] sm:$0xff]
          %v486 = vld [vmem:[#allocation5 + $0x8] sm:$0xff]
          %v487 = vld [vmem:[#allocation5 + $0x10] sm:$0xff]
          %v488 = vld [vmem:[#allocation5 + $0x18] sm:$0xff]
          %v489 = vld [vmem:[#allocation5 + $0x20] sm:$0xff]
          %v490 = vld [vmem:[#allocation5 + $0x28] sm:$0xff]
          %v491 = vld [vmem:[#allocation5 + $0x30] sm:$0xff]
          %v492 = vld [vmem:[#allocation5 + $0x38] sm:$0xff]
          %v493 = vld [vmem:[#allocation5 + $0x40] sm:$0x3]
          %v494 = vld [vmem:[#allocation5 + $0x48] sm:$0x3]
          %v495 = vld [vmem:[#allocation7] sm:$0x3]
          %v497 = vlaneseq
          %v498 = vshrl.u32 %v497, 7
          %v499 = vsub.s32 0, %v498
          %v500 = vrot.slane %v495, %v499
          %v501 = vlaneseq
          %v502 = vshrl.u32 %v501, 7
          %v503 = vsub.s32 1, %v502
          %v504 = vrot.slane %v495, %v503
          %vm507 = vcmask 277504
          %v509 = vsel %vm507, %v484, 0
          %vm511 = vcmask 1041408
          %v513 = vsel %vm511, %v493, 0
          %v516 = vsel %vm511, %v494, 0
          %518 = vmatprep.subr.mxu0 0.0
          %519 = vmatpush1.msra.mxu0 0.0
          %520 = vmatprep.subr.mxu0 0.0
          %521 = vmatpush1.msra.mxu0 0.0
          %522 = vmatprep.subr.mxu0 0.0
          %523 = vmatpush1.msra.mxu0 0.0
          %524 = vmatprep.subr.mxu0 0.0
          %525 = vmatpush1.msra.mxu0 0.0
          %526 = vmatprep.subr.mxu0 0.0
          %527 = vmatpush1.msra.mxu0 0.0
          %528 = vmatprep.subr.mxu0 0.0
          %529 = vmatpush1.msra.mxu0 0.0
          %530 = vmatprep.subr.mxu0 0.0
          %531 = vmatpush1.msra.mxu0 0.0
          %532 = vmatprep.subr.mxu0 0.0
          %533 = vmatpush1.msra.mxu0 0.0
          %534 = vmatprep.subr.mxu0 0.0
          %535 = vmatpush1.msra.mxu0 0.0
          %536 = vmatprep.subr.mxu0 0.0
          %537 = vmatpush1.msra.mxu0 0.0
          %538 = vmatprep.subr.mxu0 0.0
          %539 = vmatpush1.msra.mxu0 0.0
          %540 = vmatprep.subr.mxu0 %v516
          %541 = vmatpush1.msra.mxu0 %v513
          %542 = vmatprep.subr.mxu0 %v492
          %543 = vmatpush1.msra.mxu0 %v491
          %544 = vmatprep.subr.mxu0 %v490
          %545 = vmatpush1.msra.mxu0 %v489
          %546 = vmatprep.subr.mxu0 %v488
          %547 = vmatpush1.msra.mxu0 %v487
          %548 = vmatprep.subr.mxu0 %v486
          %549 = vmatpush1.msra.mxu0 %v485
          %550 = vmatprep.subr.mxu0 0.0
          %551 = vmatpush2.msra.mxu0 0.0
          %552 = vmatprep.subr.mxu0 0.0
          %553 = vmatpush2.msra.mxu0 0.0
          %554 = vmatprep.subr.mxu0 0.0
          %555 = vmatpush2.msra.mxu0 0.0
          %556 = vmatprep.subr.mxu0 0.0
          %557 = vmatpush2.msra.mxu0 0.0
          %558 = vmatprep.subr.mxu0 0.0
          %559 = vmatpush2.msra.mxu0 0.0
          %560 = vmatprep.subr.mxu0 0.0
          %561 = vmatpush2.msra.mxu0 0.0
          %562 = vmatprep.subr.mxu0 0.0
          %563 = vmatpush2.msra.mxu0 0.0
          %564 = vmatprep.subr.mxu0 0.0
          %565 = vmatpush2.msra.mxu0 0.0
          %566 = vmatprep.subr.mxu0 0.0
          %567 = vmatpush2.msra.mxu0 0.0
          %568 = vmatprep.subr.mxu0 0.0
          %569 = vmatpush2.msra.mxu0 0.0
          %570 = vmatprep.subr.mxu0 0.0
          %571 = vmatpush2.msra.mxu0 0.0
          %572 = vmatprep.subr.mxu0 0.0
          %573 = vmatpush2.msra.mxu0 0.0
          %574 = vmatprep.subr.mxu0 0.0
          %575 = vmatpush2.msra.mxu0 0.0
          %576 = vmatprep.subr.mxu0 0.0
          %577 = vmatpush2.msra.mxu0 0.0
          %578 = vmatprep.subr.mxu0 0.0
          %579 = vmatpush2.msra.mxu0 0.0
          %580 = vmatprep.subr.mxu0 0.0
          %581 = vmatpush2.msra.mxu0 0.0
          %582 = vmatprep.mubr.f32.mxu0 0.0
          %583 = vmatmul.mubr.f32.gmra.mxu0 %v509
          %v584 = vpop.f32.mrf.mxu0
          %v585 = vadd.f32 %v500, %v584
          %v586 = vpop.f32.mrf.mxu0
          %v587 = vadd.f32 %v504, %v586
          %588 = vdwg.mxu0
          %v589 = vmax.f32 %v585, 0.0
          %v590 = vmax.f32 %v587, 0.0
          %591 = vst [vmem:[#allocation2] sm:$0xff] %v589
          %592 = vst [vmem:[#allocation2 + $0x8] sm:$0xff] %v590
        $region92: #{humann_forward.1} parent=55 // pred_fallthru
          _
        %v593 = vld [vmem:[#allocation2] sm:$0xff]
        %v594 = vld [vmem:[#allocation2 + $0x8] sm:$0xff]
        %v595 = vld [vmem:[%s1] sm:$0xff]
        %v596 = vld [vmem:[%s1 + $0x8] sm:$0xff]
        %v597 = vpack.c.bf16 %v593, %v593
        %v598 = vpack.c.bf16 %v594, %v594
        %v599 = vld [vmem:[%s422] sm:$0xff]
        %v600 = vld [vmem:[%s422 + $0x88] sm:$0xff]
        %v601 = vld [vmem:[%s422 + $0x110] sm:$0xff]
        %v602 = vld [vmem:[%s422 + $0x198] sm:$0xff]
        %v603 = vld [vmem:[%s422 + $0x220] sm:$0xff]
        %v604 = vld [vmem:[%s422 + $0x2a8] sm:$0xff]
        %v605 = vld [vmem:[%s422 + $0x330] sm:$0xff]
        %v606 = vld [vmem:[%s422 + $0x3b8] sm:$0xff]
        %v607 = vld [vmem:[%s422 + $0x440] sm:$0xff]
        %v608 = vld [vmem:[%s422 + $0x4c8] sm:$0xff]
        %v609 = vld [vmem:[%s422 + $0x550] sm:$0xff]
        %v610 = vld [vmem:[%s422 + $0x5d8] sm:$0xff]
        %v611 = vld [vmem:[%s422 + $0x660] sm:$0xff]
        %v612 = vld [vmem:[%s422 + $0x6e8] sm:$0xff]
        %v613 = vld [vmem:[%s422 + $0x770] sm:$0xff]
        %v614 = vld [vmem:[%s422 + $0x7f8] sm:$0xff]
        %v615 = vld [vmem:[%s422 + $0x880] sm:$0xff]
        %v616 = vld [vmem:[%s422 + $0x908] sm:$0xff]
        %v617 = vld [vmem:[%s422 + $0x990] sm:$0xff]
        %v618 = vld [vmem:[%s422 + $0xa18] sm:$0xff]
        %v619 = vld [vmem:[%s422 + $0xaa0] sm:$0xff]
        %v620 = vld [vmem:[%s422 + $0xb28] sm:$0xff]
        %v621 = vld [vmem:[%s422 + $0xbb0] sm:$0xff]
        %v622 = vld [vmem:[%s422 + $0xc38] sm:$0xff]
        %v623 = vld [vmem:[%s422 + $0xcc0] sm:$0xff]
        %v624 = vld [vmem:[%s422 + $0xd48] sm:$0xff]
        %v625 = vld [vmem:[%s422 + $0xdd0] sm:$0xff]
        %v626 = vld [vmem:[%s422 + $0xe58] sm:$0xff]
        %v627 = vld [vmem:[%s422 + $0xee0] sm:$0xff]
        %v628 = vld [vmem:[%s422 + $0xf68] sm:$0xff]
        %v629 = vld [vmem:[%s422 + $0xff0] sm:$0xff]
        %v630 = vld [vmem:[%s422 + $0x1078] sm:$0xff]
        %v631 = vld [vmem:[%s431] sm:$0x3]
        %v633 = vlaneseq
        %v634 = vshrl.u32 %v633, 7
        %v635 = vsub.s32 0, %v634
        %v636 = vrot.slane %v631, %v635
        %v637 = vlaneseq
        %v638 = vshrl.u32 %v637, 7
        %v639 = vsub.s32 1, %v638
        %v640 = vrot.slane %v631, %v639
        %v675 = vunpack.c.l.b16 %v599
        %v676 = vunpack.c.h.b16 %v599
        %v677 = vunpack.c.l.b16 %v600
        %v678 = vunpack.c.h.b16 %v600
        %v679 = vunpack.c.l.b16 %v601
        %v680 = vunpack.c.h.b16 %v601
        %v681 = vunpack.c.l.b16 %v602
        %v682 = vunpack.c.h.b16 %v602
        %v683 = vunpack.c.l.b16 %v603
        %v684 = vunpack.c.h.b16 %v603
        %v685 = vunpack.c.l.b16 %v604
        %v686 = vunpack.c.h.b16 %v604
        %v687 = vunpack.c.l.b16 %v605
        %v688 = vunpack.c.h.b16 %v605
        %v689 = vunpack.c.l.b16 %v606
        %v690 = vunpack.c.h.b16 %v606
        %v691 = vunpack.c.l.b16 %v607
        %v692 = vunpack.c.h.b16 %v607
        %v693 = vunpack.c.l.b16 %v608
        %v694 = vunpack.c.h.b16 %v608
        %v695 = vunpack.c.l.b16 %v609
        %v696 = vunpack.c.h.b16 %v609
        %v697 = vunpack.c.l.b16 %v610
        %v698 = vunpack.c.h.b16 %v610
        %v699 = vunpack.c.l.b16 %v611
        %v700 = vunpack.c.h.b16 %v611
        %v701 = vunpack.c.l.b16 %v612
        %v702 = vunpack.c.h.b16 %v612
        %v703 = vunpack.c.l.b16 %v613
        %v704 = vunpack.c.h.b16 %v613
        %v705 = vunpack.c.l.b16 %v614
        %v706 = vunpack.c.h.b16 %v614
        %v707 = vunpack.c.l.b16 %v615
        %v708 = vunpack.c.h.b16 %v615
        %v709 = vunpack.c.l.b16 %v616
        %v710 = vunpack.c.h.b16 %v616
        %v711 = vunpack.c.l.b16 %v617
        %v712 = vunpack.c.h.b16 %v617
        %v713 = vunpack.c.l.b16 %v618
        %v714 = vunpack.c.h.b16 %v618
        %v715 = vunpack.c.l.b16 %v619
        %v716 = vunpack.c.h.b16 %v619
        %v717 = vunpack.c.l.b16 %v620
        %v718 = vunpack.c.h.b16 %v620
        %v719 = vunpack.c.l.b16 %v621
        %v720 = vunpack.c.h.b16 %v621
        %v721 = vunpack.c.l.b16 %v622
        %v722 = vunpack.c.h.b16 %v622
        %v723 = vunpack.c.l.b16 %v623
        %v724 = vunpack.c.h.b16 %v623
        %v725 = vunpack.c.l.b16 %v624
        %v726 = vunpack.c.h.b16 %v624
        %v727 = vunpack.c.l.b16 %v625
        %v728 = vunpack.c.h.b16 %v625
        %v729 = vunpack.c.l.b16 %v626
        %v730 = vunpack.c.h.b16 %v626
        %v731 = vunpack.c.l.b16 %v627
        %v732 = vunpack.c.h.b16 %v627
        %v733 = vunpack.c.l.b16 %v628
        %v734 = vunpack.c.h.b16 %v628
        %v735 = vunpack.c.l.b16 %v629
        %v736 = vunpack.c.h.b16 %v629
        %v737 = vunpack.c.l.b16 %v630
        %v738 = vunpack.c.h.b16 %v630
        %v739 = vpack.c.b16 %v677, %v675
        %v740 = vpack.c.b16 %v678, %v676
        %v741 = vpack.c.b16 %v681, %v679
        %v742 = vpack.c.b16 %v682, %v680
        %v743 = vpack.c.b16 %v685, %v683
        %v744 = vpack.c.b16 %v686, %v684
        %v745 = vpack.c.b16 %v689, %v687
        %v746 = vpack.c.b16 %v690, %v688
        %v747 = vpack.c.b16 %v693, %v691
        %v748 = vpack.c.b16 %v694, %v692
        %v749 = vpack.c.b16 %v697, %v695
        %v750 = vpack.c.b16 %v698, %v696
        %v751 = vpack.c.b16 %v701, %v699
        %v752 = vpack.c.b16 %v702, %v700
        %v753 = vpack.c.b16 %v705, %v703
        %v754 = vpack.c.b16 %v706, %v704
        %v755 = vpack.c.b16 %v709, %v707
        %v756 = vpack.c.b16 %v710, %v708
        %v757 = vpack.c.b16 %v713, %v711
        %v758 = vpack.c.b16 %v714, %v712
        %v759 = vpack.c.b16 %v717, %v715
        %v760 = vpack.c.b16 %v718, %v716
        %v761 = vpack.c.b16 %v721, %v719
        %v762 = vpack.c.b16 %v722, %v720
        %v763 = vpack.c.b16 %v725, %v723
        %v764 = vpack.c.b16 %v726, %v724
        %v765 = vpack.c.b16 %v729, %v727
        %v766 = vpack.c.b16 %v730, %v728
        %v767 = vpack.c.b16 %v733, %v731
        %v768 = vpack.c.b16 %v734, %v732
        %v769 = vpack.c.b16 %v737, %v735
        %v770 = vpack.c.b16 %v738, %v736
        %803 = vmatprep.subr.bf16.mxu0 %v754
        %804 = vmatpush1.bf16.msra.mxu0 %v753
        %805 = vmatprep.subr.bf16.mxu0 %v752
        %806 = vmatpush1.bf16.msra.mxu0 %v751
        %807 = vmatprep.subr.bf16.mxu0 %v750
        %808 = vmatpush1.bf16.msra.mxu0 %v749
        %809 = vmatprep.subr.bf16.mxu0 %v748
        %810 = vmatpush1.bf16.msra.mxu0 %v747
        %811 = vmatprep.subr.bf16.mxu0 %v746
        %812 = vmatpush1.bf16.msra.mxu0 %v745
        %813 = vmatprep.subr.bf16.mxu0 %v744
        %814 = vmatpush1.bf16.msra.mxu0 %v743
        %815 = vmatprep.subr.bf16.mxu0 %v742
        %816 = vmatpush1.bf16.msra.mxu0 %v741
        %817 = vmatprep.subr.bf16.mxu0 %v740
        %818 = vmatpush1.bf16.msra.mxu0 %v739
        %819 = vmatprep.subr.bf16.mxu0 %v770
        %820 = vmatpush2.bf16.msra.mxu0 %v769
        %821 = vmatprep.subr.bf16.mxu0 %v768
        %822 = vmatpush2.bf16.msra.mxu0 %v767
        %823 = vmatprep.subr.bf16.mxu0 %v766
        %824 = vmatpush2.bf16.msra.mxu0 %v765
        %825 = vmatprep.subr.bf16.mxu0 %v764
        %826 = vmatpush2.bf16.msra.mxu0 %v763
        %827 = vmatprep.subr.bf16.mxu0 %v762
        %828 = vmatpush2.bf16.msra.mxu0 %v761
        %829 = vmatprep.subr.bf16.mxu0 %v760
        %830 = vmatpush2.bf16.msra.mxu0 %v759
        %831 = vmatprep.subr.bf16.mxu0 %v758
        %832 = vmatpush2.bf16.msra.mxu0 %v757
        %833 = vmatprep.subr.bf16.mxu0 %v756
        %834 = vmatpush2.bf16.msra.mxu0 %v755
        %835 = vmatprep.mubr.bf16.mxu0 %v598
        %836 = vmatmul.mubr.bf16.gmra.mxu0 %v597
        %v837 = vpop.f32.mrf.mxu0
        %v838 = vadd.f32 %v636, %v837
        %v839 = vpop.f32.mrf.mxu0
        %v840 = vadd.f32 %v640, %v839
        %v841 = vpop.f32.mrf.mxu0
        %v842 = vpop.f32.mrf.mxu0
        %843 = vdwg.mxu0
        %v844 = vmax.f32 %v838, 0.0
        %v845 = vmax.f32 %v840, 0.0
        %v846 = vadd.f32 %v593, %v595
        %v847 = vadd.f32 %v594, %v596
        %v848 = vadd.f32 %v844, %v595
        %v849 = vadd.f32 %v845, %v596
        %v850 = vpack.c.bf16 %v846, %v846
        %v851 = vpack.c.bf16 %v847, %v847
        %v852 = vld [vmem:[%s422 + $0x8] sm:$0xff]
        %v853 = vld [vmem:[%s422 + $0x10] sm:$0xff]
        %v854 = vld [vmem:[%s422 + $0x18] sm:$0xff]
        %v855 = vld [vmem:[%s422 + $0x90] sm:$0xff]
        %v856 = vld [vmem:[%s422 + $0x98] sm:$0xff]
        %v857 = vld [vmem:[%s422 + $0xa0] sm:$0xff]
        %v858 = vld [vmem:[%s422 + $0x118] sm:$0xff]
        %v859 = vld [vmem:[%s422 + $0x120] sm:$0xff]
        %v860 = vld [vmem:[%s422 + $0x128] sm:$0xff]
        %v861 = vld [vmem:[%s422 + $0x1a0] sm:$0xff]
        %v862 = vld [vmem:[%s422 + $0x1a8] sm:$0xff]
        %v863 = vld [vmem:[%s422 + $0x1b0] sm:$0xff]
        %v864 = vld [vmem:[%s422 + $0x228] sm:$0xff]
        %v865 = vld [vmem:[%s422 + $0x230] sm:$0xff]
        %v866 = vld [vmem:[%s422 + $0x238] sm:$0xff]
        %v867 = vld [vmem:[%s422 + $0x2b0] sm:$0xff]
        %v868 = vld [vmem:[%s422 + $0x2b8] sm:$0xff]
        %v869 = vld [vmem:[%s422 + $0x2c0] sm:$0xff]
        %v870 = vld [vmem:[%s422 + $0x338] sm:$0xff]
        %v871 = vld [vmem:[%s422 + $0x340] sm:$0xff]
        %v872 = vld [vmem:[%s422 + $0x348] sm:$0xff]
        %v873 = vld [vmem:[%s422 + $0x3c0] sm:$0xff]
        %v874 = vld [vmem:[%s422 + $0x3c8] sm:$0xff]
        %v875 = vld [vmem:[%s422 + $0x3d0] sm:$0xff]
        %v876 = vld [vmem:[%s422 + $0x448] sm:$0xff]
        %v877 = vld [vmem:[%s422 + $0x450] sm:$0xff]
        %v878 = vld [vmem:[%s422 + $0x458] sm:$0xff]
        %v879 = vld [vmem:[%s422 + $0x4d0] sm:$0xff]
        %v880 = vld [vmem:[%s422 + $0x4d8] sm:$0xff]
        %v881 = vld [vmem:[%s422 + $0x4e0] sm:$0xff]
        %v882 = vld [vmem:[%s422 + $0x558] sm:$0xff]
        %v883 = vld [vmem:[%s422 + $0x560] sm:$0xff]
        %v884 = vld [vmem:[%s422 + $0x568] sm:$0xff]
        %v885 = vld [vmem:[%s422 + $0x5e0] sm:$0xff]
        %v886 = vld [vmem:[%s422 + $0x5e8] sm:$0xff]
        %v887 = vld [vmem:[%s422 + $0x5f0] sm:$0xff]
        %v888 = vld [vmem:[%s422 + $0x668] sm:$0xff]
        %v889 = vld [vmem:[%s422 + $0x670] sm:$0xff]
        %v890 = vld [vmem:[%s422 + $0x678] sm:$0xff]
        %v891 = vld [vmem:[%s422 + $0x6f0] sm:$0xff]
        %v892 = vld [vmem:[%s422 + $0x6f8] sm:$0xff]
        %v893 = vld [vmem:[%s422 + $0x700] sm:$0xff]
        %v894 = vld [vmem:[%s422 + $0x778] sm:$0xff]
        %v895 = vld [vmem:[%s422 + $0x780] sm:$0xff]
        %v896 = vld [vmem:[%s422 + $0x788] sm:$0xff]
        %v897 = vld [vmem:[%s422 + $0x800] sm:$0xff]
        %v898 = vld [vmem:[%s422 + $0x808] sm:$0xff]
        %v899 = vld [vmem:[%s422 + $0x810] sm:$0xff]
        %v900 = vld [vmem:[%s422 + $0x888] sm:$0xff]
        %v901 = vld [vmem:[%s422 + $0x890] sm:$0xff]
        %v902 = vld [vmem:[%s422 + $0x898] sm:$0xff]
        %v903 = vld [vmem:[%s422 + $0x910] sm:$0xff]
        %v904 = vld [vmem:[%s422 + $0x918] sm:$0xff]
        %v905 = vld [vmem:[%s422 + $0x920] sm:$0xff]
        %v906 = vld [vmem:[%s422 + $0x998] sm:$0xff]
        %v907 = vld [vmem:[%s422 + $0x9a0] sm:$0xff]
        %v908 = vld [vmem:[%s422 + $0x9a8] sm:$0xff]
        %v909 = vld [vmem:[%s422 + $0xa20] sm:$0xff]
        %v910 = vld [vmem:[%s422 + $0xa28] sm:$0xff]
        %v911 = vld [vmem:[%s422 + $0xa30] sm:$0xff]
        %v912 = vld [vmem:[%s422 + $0xaa8] sm:$0xff]
        %v913 = vld [vmem:[%s422 + $0xab0] sm:$0xff]
        %v914 = vld [vmem:[%s422 + $0xab8] sm:$0xff]
        %v915 = vld [vmem:[%s422 + $0xb30] sm:$0xff]
        %v916 = vld [vmem:[%s422 + $0xb38] sm:$0xff]
        %v917 = vld [vmem:[%s422 + $0xb40] sm:$0xff]
        %v918 = vld [vmem:[%s422 + $0xbb8] sm:$0xff]
        %v919 = vld [vmem:[%s422 + $0xbc0] sm:$0xff]
        %v920 = vld [vmem:[%s422 + $0xbc8] sm:$0xff]
        %v921 = vld [vmem:[%s422 + $0xc40] sm:$0xff]
        %v922 = vld [vmem:[%s422 + $0xc48] sm:$0xff]
        %v923 = vld [vmem:[%s422 + $0xc50] sm:$0xff]
        %v924 = vld [vmem:[%s422 + $0xcc8] sm:$0xff]
        %v925 = vld [vmem:[%s422 + $0xcd0] sm:$0xff]
        %v926 = vld [vmem:[%s422 + $0xcd8] sm:$0xff]
        %v927 = vld [vmem:[%s422 + $0xd50] sm:$0xff]
        %v928 = vld [vmem:[%s422 + $0xd58] sm:$0xff]
        %v929 = vld [vmem:[%s422 + $0xd60] sm:$0xff]
        %v930 = vld [vmem:[%s422 + $0xdd8] sm:$0xff]
        %v931 = vld [vmem:[%s422 + $0xde0] sm:$0xff]
        %v932 = vld [vmem:[%s422 + $0xde8] sm:$0xff]
        %v933 = vld [vmem:[%s422 + $0xe60] sm:$0xff]
        %v934 = vld [vmem:[%s422 + $0xe68] sm:$0xff]
        %v935 = vld [vmem:[%s422 + $0xe70] sm:$0xff]
        %v936 = vld [vmem:[%s422 + $0xee8] sm:$0xff]
        %v937 = vld [vmem:[%s422 + $0xef0] sm:$0xff]
        %v938 = vld [vmem:[%s422 + $0xef8] sm:$0xff]
        %v939 = vld [vmem:[%s422 + $0xf70] sm:$0xff]
        %v940 = vld [vmem:[%s422 + $0xf78] sm:$0xff]
        %v941 = vld [vmem:[%s422 + $0xf80] sm:$0xff]
        %v942 = vld [vmem:[%s422 + $0xff8] sm:$0xff]
        %v943 = vld [vmem:[%s422 + $0x1000] sm:$0xff]
        %v944 = vld [vmem:[%s422 + $0x1008] sm:$0xff]
        %v945 = vld [vmem:[%s422 + $0x1080] sm:$0xff]
        %v946 = vld [vmem:[%s422 + $0x1088] sm:$0xff]
        %v947 = vld [vmem:[%s422 + $0x1090] sm:$0xff]
        %v948 = vld [vmem:[%s431 + $0x2] sm:$0x3f]
        %v950 = vlaneseq
        %v951 = vshrl.u32 %v950, 7
        %v952 = vsub.s32 0, %v951
        %v953 = vrot.slane %v948, %v952
        %v954 = vlaneseq
        %v955 = vshrl.u32 %v954, 7
        %v956 = vsub.s32 1, %v955
        %v957 = vrot.slane %v948, %v956
        %v958 = vlaneseq
        %v959 = vshrl.u32 %v958, 7
        %v960 = vsub.s32 2, %v959
        %v961 = vrot.slane %v948, %v960
        %v962 = vlaneseq
        %v963 = vshrl.u32 %v962, 7
        %v964 = vsub.s32 3, %v963
        %v965 = vrot.slane %v948, %v964
        %v966 = vlaneseq
        %v967 = vshrl.u32 %v966, 7
        %v968 = vsub.s32 4, %v967
        %v969 = vrot.slane %v948, %v968
        %v970 = vlaneseq
        %v971 = vshrl.u32 %v970, 7
        %v972 = vsub.s32 5, %v971
        %v973 = vrot.slane %v948, %v972
        %v1076 = vunpack.c.l.b16 %v852
        %v1077 = vunpack.c.h.b16 %v852
        %v1078 = vunpack.c.l.b16 %v853
        %v1079 = vunpack.c.h.b16 %v853
        %v1080 = vunpack.c.l.b16 %v854
        %v1081 = vunpack.c.h.b16 %v854
        %v1082 = vunpack.c.l.b16 %v855
        %v1083 = vunpack.c.h.b16 %v855
        %v1084 = vunpack.c.l.b16 %v856
        %v1085 = vunpack.c.h.b16 %v856
        %v1086 = vunpack.c.l.b16 %v857
        %v1087 = vunpack.c.h.b16 %v857
        %v1088 = vunpack.c.l.b16 %v858
        %v1089 = vunpack.c.h.b16 %v858
        %v1090 = vunpack.c.l.b16 %v859
        %v1091 = vunpack.c.h.b16 %v859
        %v1092 = vunpack.c.l.b16 %v860
        %v1093 = vunpack.c.h.b16 %v860
        %v1094 = vunpack.c.l.b16 %v861
        %v1095 = vunpack.c.h.b16 %v861
        %v1096 = vunpack.c.l.b16 %v862
        %v1097 = vunpack.c.h.b16 %v862
        %v1098 = vunpack.c.l.b16 %v863
        %v1099 = vunpack.c.h.b16 %v863
        %v1100 = vunpack.c.l.b16 %v864
        %v1101 = vunpack.c.h.b16 %v864
        %v1102 = vunpack.c.l.b16 %v865
        %v1103 = vunpack.c.h.b16 %v865
        %v1104 = vunpack.c.l.b16 %v866
        %v1105 = vunpack.c.h.b16 %v866
        %v1106 = vunpack.c.l.b16 %v867
        %v1107 = vunpack.c.h.b16 %v867
        %v1108 = vunpack.c.l.b16 %v868
        %v1109 = vunpack.c.h.b16 %v868
        %v1110 = vunpack.c.l.b16 %v869
        %v1111 = vunpack.c.h.b16 %v869
        %v1112 = vunpack.c.l.b16 %v870
        %v1113 = vunpack.c.h.b16 %v870
        %v1114 = vunpack.c.l.b16 %v871
        %v1115 = vunpack.c.h.b16 %v871
        %v1116 = vunpack.c.l.b16 %v872
        %v1117 = vunpack.c.h.b16 %v872
        %v1118 = vunpack.c.l.b16 %v873
        %v1119 = vunpack.c.h.b16 %v873
        %v1120 = vunpack.c.l.b16 %v874
        %v1121 = vunpack.c.h.b16 %v874
        %v1122 = vunpack.c.l.b16 %v875
        %v1123 = vunpack.c.h.b16 %v875
        %v1124 = vunpack.c.l.b16 %v876
        %v1125 = vunpack.c.h.b16 %v876
        %v1126 = vunpack.c.l.b16 %v877
        %v1127 = vunpack.c.h.b16 %v877
        %v1128 = vunpack.c.l.b16 %v878
        %v1129 = vunpack.c.h.b16 %v878
        %v1130 = vunpack.c.l.b16 %v879
        %v1131 = vunpack.c.h.b16 %v879
        %v1132 = vunpack.c.l.b16 %v880
        %v1133 = vunpack.c.h.b16 %v880
        %v1134 = vunpack.c.l.b16 %v881
        %v1135 = vunpack.c.h.b16 %v881
        %v1136 = vunpack.c.l.b16 %v882
        %v1137 = vunpack.c.h.b16 %v882
        %v1138 = vunpack.c.l.b16 %v883
        %v1139 = vunpack.c.h.b16 %v883
        %v1140 = vunpack.c.l.b16 %v884
        %v1141 = vunpack.c.h.b16 %v884
        %v1142 = vunpack.c.l.b16 %v885
        %v1143 = vunpack.c.h.b16 %v885
        %v1144 = vunpack.c.l.b16 %v886
        %v1145 = vunpack.c.h.b16 %v886
        %v1146 = vunpack.c.l.b16 %v887
        %v1147 = vunpack.c.h.b16 %v887
        %v1148 = vunpack.c.l.b16 %v888
        %v1149 = vunpack.c.h.b16 %v888
        %v1150 = vunpack.c.l.b16 %v889
        %v1151 = vunpack.c.h.b16 %v889
        %v1152 = vunpack.c.l.b16 %v890
        %v1153 = vunpack.c.h.b16 %v890
        %v1154 = vunpack.c.l.b16 %v891
        %v1155 = vunpack.c.h.b16 %v891
        %v1156 = vunpack.c.l.b16 %v892
        %v1157 = vunpack.c.h.b16 %v892
        %v1158 = vunpack.c.l.b16 %v893
        %v1159 = vunpack.c.h.b16 %v893
        %v1160 = vunpack.c.l.b16 %v894
        %v1161 = vunpack.c.h.b16 %v894
        %v1162 = vunpack.c.l.b16 %v895
        %v1163 = vunpack.c.h.b16 %v895
        %v1164 = vunpack.c.l.b16 %v896
        %v1165 = vunpack.c.h.b16 %v896
        %v1166 = vunpack.c.l.b16 %v897
        %v1167 = vunpack.c.h.b16 %v897
        %v1168 = vunpack.c.l.b16 %v898
        %v1169 = vunpack.c.h.b16 %v898
        %v1170 = vunpack.c.l.b16 %v899
        %v1171 = vunpack.c.h.b16 %v899
        %v1172 = vunpack.c.l.b16 %v900
        %v1173 = vunpack.c.h.b16 %v900
        %v1174 = vunpack.c.l.b16 %v901
        %v1175 = vunpack.c.h.b16 %v901
        %v1176 = vunpack.c.l.b16 %v902
        %v1177 = vunpack.c.h.b16 %v902
        %v1178 = vunpack.c.l.b16 %v903
        %v1179 = vunpack.c.h.b16 %v903
        %v1180 = vunpack.c.l.b16 %v904
        %v1181 = vunpack.c.h.b16 %v904
        %v1182 = vunpack.c.l.b16 %v905
        %v1183 = vunpack.c.h.b16 %v905
        %v1184 = vunpack.c.l.b16 %v906
        %v1185 = vunpack.c.h.b16 %v906
        %v1186 = vunpack.c.l.b16 %v907
        %v1187 = vunpack.c.h.b16 %v907
        %v1188 = vunpack.c.l.b16 %v908
        %v1189 = vunpack.c.h.b16 %v908
        %v1190 = vunpack.c.l.b16 %v909
        %v1191 = vunpack.c.h.b16 %v909
        %v1192 = vunpack.c.l.b16 %v910
        %v1193 = vunpack.c.h.b16 %v910
        %v1194 = vunpack.c.l.b16 %v911
        %v1195 = vunpack.c.h.b16 %v911
        %v1196 = vunpack.c.l.b16 %v912
        %v1197 = vunpack.c.h.b16 %v912
        %v1198 = vunpack.c.l.b16 %v913
        %v1199 = vunpack.c.h.b16 %v913
        %v1200 = vunpack.c.l.b16 %v914
        %v1201 = vunpack.c.h.b16 %v914
        %v1202 = vunpack.c.l.b16 %v915
        %v1203 = vunpack.c.h.b16 %v915
        %v1204 = vunpack.c.l.b16 %v916
        %v1205 = vunpack.c.h.b16 %v916
        %v1206 = vunpack.c.l.b16 %v917
        %v1207 = vunpack.c.h.b16 %v917
        %v1208 = vunpack.c.l.b16 %v918
        %v1209 = vunpack.c.h.b16 %v918
        %v1210 = vunpack.c.l.b16 %v919
        %v1211 = vunpack.c.h.b16 %v919
        %v1212 = vunpack.c.l.b16 %v920
        %v1213 = vunpack.c.h.b16 %v920
        %v1214 = vunpack.c.l.b16 %v921
        %v1215 = vunpack.c.h.b16 %v921
        %v1216 = vunpack.c.l.b16 %v922
        %v1217 = vunpack.c.h.b16 %v922
        %v1218 = vunpack.c.l.b16 %v923
        %v1219 = vunpack.c.h.b16 %v923
        %v1220 = vunpack.c.l.b16 %v924
        %v1221 = vunpack.c.h.b16 %v924
        %v1222 = vunpack.c.l.b16 %v925
        %v1223 = vunpack.c.h.b16 %v925
        %v1224 = vunpack.c.l.b16 %v926
        %v1225 = vunpack.c.h.b16 %v926
        %v1226 = vunpack.c.l.b16 %v927
        %v1227 = vunpack.c.h.b16 %v927
        %v1228 = vunpack.c.l.b16 %v928
        %v1229 = vunpack.c.h.b16 %v928
        %v1230 = vunpack.c.l.b16 %v929
        %v1231 = vunpack.c.h.b16 %v929
        %v1232 = vunpack.c.l.b16 %v930
        %v1233 = vunpack.c.h.b16 %v930
        %v1234 = vunpack.c.l.b16 %v931
        %v1235 = vunpack.c.h.b16 %v931
        %v1236 = vunpack.c.l.b16 %v932
        %v1237 = vunpack.c.h.b16 %v932
        %v1238 = vunpack.c.l.b16 %v933
        %v1239 = vunpack.c.h.b16 %v933
        %v1240 = vunpack.c.l.b16 %v934
        %v1241 = vunpack.c.h.b16 %v934
        %v1242 = vunpack.c.l.b16 %v935
        %v1243 = vunpack.c.h.b16 %v935
        %v1244 = vunpack.c.l.b16 %v936
        %v1245 = vunpack.c.h.b16 %v936
        %v1246 = vunpack.c.l.b16 %v937
        %v1247 = vunpack.c.h.b16 %v937
        %v1248 = vunpack.c.l.b16 %v938
        %v1249 = vunpack.c.h.b16 %v938
        %v1250 = vunpack.c.l.b16 %v939
        %v1251 = vunpack.c.h.b16 %v939
        %v1252 = vunpack.c.l.b16 %v940
        %v1253 = vunpack.c.h.b16 %v940
        %v1254 = vunpack.c.l.b16 %v941
        %v1255 = vunpack.c.h.b16 %v941
        %v1256 = vunpack.c.l.b16 %v942
        %v1257 = vunpack.c.h.b16 %v942
        %v1258 = vunpack.c.l.b16 %v943
        %v1259 = vunpack.c.h.b16 %v943
        %v1260 = vunpack.c.l.b16 %v944
        %v1261 = vunpack.c.h.b16 %v944
        %v1262 = vunpack.c.l.b16 %v945
        %v1263 = vunpack.c.h.b16 %v945
        %v1264 = vunpack.c.l.b16 %v946
        %v1265 = vunpack.c.h.b16 %v946
        %v1266 = vunpack.c.l.b16 %v947
        %v1267 = vunpack.c.h.b16 %v947
        %v1268 = vpack.c.b16 %v1082, %v1076
        %v1269 = vpack.c.b16 %v1083, %v1077
        %v1270 = vpack.c.b16 %v1084, %v1078
        %v1271 = vpack.c.b16 %v1085, %v1079
        %v1272 = vpack.c.b16 %v1086, %v1080
        %v1273 = vpack.c.b16 %v1087, %v1081
        %v1274 = vpack.c.b16 %v1094, %v1088
        %v1275 = vpack.c.b16 %v1095, %v1089
        %v1276 = vpack.c.b16 %v1096, %v1090
        %v1277 = vpack.c.b16 %v1097, %v1091
        %v1278 = vpack.c.b16 %v1098, %v1092
        %v1279 = vpack.c.b16 %v1099, %v1093
        %v1280 = vpack.c.b16 %v1106, %v1100
        %v1281 = vpack.c.b16 %v1107, %v1101
        %v1282 = vpack.c.b16 %v1108, %v1102
        %v1283 = vpack.c.b16 %v1109, %v1103
        %v1284 = vpack.c.b16 %v1110, %v1104
        %v1285 = vpack.c.b16 %v1111, %v1105
        %v1286 = vpack.c.b16 %v1118, %v1112
        %v1287 = vpack.c.b16 %v1119, %v1113
        %v1288 = vpack.c.b16 %v1120, %v1114
        %v1289 = vpack.c.b16 %v1121, %v1115
        %v1290 = vpack.c.b16 %v1122, %v1116
        %v1291 = vpack.c.b16 %v1123, %v1117
        %v1292 = vpack.c.b16 %v1130, %v1124
        %v1293 = vpack.c.b16 %v1131, %v1125
        %v1294 = vpack.c.b16 %v1132, %v1126
        %v1295 = vpack.c.b16 %v1133, %v1127
        %v1296 = vpack.c.b16 %v1134, %v1128
        %v1297 = vpack.c.b16 %v1135, %v1129
        %v1298 = vpack.c.b16 %v1142, %v1136
        %v1299 = vpack.c.b16 %v1143, %v1137
        %v1300 = vpack.c.b16 %v1144, %v1138
        %v1301 = vpack.c.b16 %v1145, %v1139
        %v1302 = vpack.c.b16 %v1146, %v1140
        %v1303 = vpack.c.b16 %v1147, %v1141
        %v1304 = vpack.c.b16 %v1154, %v1148
        %v1305 = vpack.c.b16 %v1155, %v1149
        %v1306 = vpack.c.b16 %v1156, %v1150
        %v1307 = vpack.c.b16 %v1157, %v1151
        %v1308 = vpack.c.b16 %v1158, %v1152
        %v1309 = vpack.c.b16 %v1159, %v1153
        %v1310 = vpack.c.b16 %v1166, %v1160
        %v1311 = vpack.c.b16 %v1167, %v1161
        %v1312 = vpack.c.b16 %v1168, %v1162
        %v1313 = vpack.c.b16 %v1169, %v1163
        %v1314 = vpack.c.b16 %v1170, %v1164
        %v1315 = vpack.c.b16 %v1171, %v1165
        %v1316 = vpack.c.b16 %v1178, %v1172
        %v1317 = vpack.c.b16 %v1179, %v1173
        %v1318 = vpack.c.b16 %v1180, %v1174
        %v1319 = vpack.c.b16 %v1181, %v1175
        %v1320 = vpack.c.b16 %v1182, %v1176
        %v1321 = vpack.c.b16 %v1183, %v1177
        %v1322 = vpack.c.b16 %v1190, %v1184
        %v1323 = vpack.c.b16 %v1191, %v1185
        %v1324 = vpack.c.b16 %v1192, %v1186
        %v1325 = vpack.c.b16 %v1193, %v1187
        %v1326 = vpack.c.b16 %v1194, %v1188
        %v1327 = vpack.c.b16 %v1195, %v1189
        %v1328 = vpack.c.b16 %v1202, %v1196
        %v1329 = vpack.c.b16 %v1203, %v1197
        %v1330 = vpack.c.b16 %v1204, %v1198
        %v1331 = vpack.c.b16 %v1205, %v1199
        %v1332 = vpack.c.b16 %v1206, %v1200
        %v1333 = vpack.c.b16 %v1207, %v1201
        %v1334 = vpack.c.b16 %v1214, %v1208
        %v1335 = vpack.c.b16 %v1215, %v1209
        %v1336 = vpack.c.b16 %v1216, %v1210
        %v1337 = vpack.c.b16 %v1217, %v1211
        %v1338 = vpack.c.b16 %v1218, %v1212
        %v1339 = vpack.c.b16 %v1219, %v1213
        %v1340 = vpack.c.b16 %v1226, %v1220
        %v1341 = vpack.c.b16 %v1227, %v1221
        %v1342 = vpack.c.b16 %v1228, %v1222
        %v1343 = vpack.c.b16 %v1229, %v1223
        %v1344 = vpack.c.b16 %v1230, %v1224
        %v1345 = vpack.c.b16 %v1231, %v1225
        %v1346 = vpack.c.b16 %v1238, %v1232
        %v1347 = vpack.c.b16 %v1239, %v1233
        %v1348 = vpack.c.b16 %v1240, %v1234
        %v1349 = vpack.c.b16 %v1241, %v1235
        %v1350 = vpack.c.b16 %v1242, %v1236
        %v1351 = vpack.c.b16 %v1243, %v1237
        %v1352 = vpack.c.b16 %v1250, %v1244
        %v1353 = vpack.c.b16 %v1251, %v1245
        %v1354 = vpack.c.b16 %v1252, %v1246
        %v1355 = vpack.c.b16 %v1253, %v1247
        %v1356 = vpack.c.b16 %v1254, %v1248
        %v1357 = vpack.c.b16 %v1255, %v1249
        %v1358 = vpack.c.b16 %v1262, %v1256
        %v1359 = vpack.c.b16 %v1263, %v1257
        %v1360 = vpack.c.b16 %v1264, %v1258
        %v1361 = vpack.c.b16 %v1265, %v1259
        %v1362 = vpack.c.b16 %v1266, %v1260
        %v1363 = vpack.c.b16 %v1267, %v1261
        %1460 = vmatprep.subr.bf16.mxu0 %v1311
        %1461 = vmatpush1.bf16.msra.mxu0 %v1310
        %1462 = vmatprep.subr.bf16.mxu0 %v1305
        %1463 = vmatpush1.bf16.msra.mxu0 %v1304
        %1464 = vmatprep.subr.bf16.mxu0 %v1299
        %1465 = vmatpush1.bf16.msra.mxu0 %v1298
        %1466 = vmatprep.subr.bf16.mxu0 %v1293
        %1467 = vmatpush1.bf16.msra.mxu0 %v1292
        %1468 = vmatprep.subr.bf16.mxu0 %v1287
        %1469 = vmatpush1.bf16.msra.mxu0 %v1286
        %1470 = vmatprep.subr.bf16.mxu0 %v1281
        %1471 = vmatpush1.bf16.msra.mxu0 %v1280
        %1472 = vmatprep.subr.bf16.mxu0 %v1275
        %1473 = vmatpush1.bf16.msra.mxu0 %v1274
        %1474 = vmatprep.subr.bf16.mxu0 %v1269
        %1475 = vmatpush1.bf16.msra.mxu0 %v1268
        %1476 = vmatprep.subr.bf16.mxu0 %v1359
        %1477 = vmatpush2.bf16.msra.mxu0 %v1358
        %1478 = vmatprep.subr.bf16.mxu0 %v1353
        %1479 = vmatpush2.bf16.msra.mxu0 %v1352
        %1480 = vmatprep.subr.bf16.mxu0 %v1347
        %1481 = vmatpush2.bf16.msra.mxu0 %v1346
        %1482 = vmatprep.subr.bf16.mxu0 %v1341
        %1483 = vmatpush2.bf16.msra.mxu0 %v1340
        %1484 = vmatprep.subr.bf16.mxu0 %v1335
        %1485 = vmatpush2.bf16.msra.mxu0 %v1334
        %1486 = vmatprep.subr.bf16.mxu0 %v1329
        %1487 = vmatpush2.bf16.msra.mxu0 %v1328
        %1488 = vmatprep.subr.bf16.mxu0 %v1323
        %1489 = vmatpush2.bf16.msra.mxu0 %v1322
        %1490 = vmatprep.subr.bf16.mxu0 %v1317
        %1491 = vmatpush2.bf16.msra.mxu0 %v1316
        %1492 = vmatprep.mubr.bf16.mxu0 %v851
        %1493 = vmatmul.mubr.bf16.gmra.mxu0 %v850
        %v1494 = vpop.f32.mrf.mxu0
        %v1495 = vadd.f32 %v953, %v1494
        %v1496 = vpop.f32.mrf.mxu0
        %v1497 = vadd.f32 %v957, %v1496
        %v1498 = vpop.f32.mrf.mxu0
        %v1499 = vpop.f32.mrf.mxu0
        %1500 = vdwg.mxu0
        %1501 = vmatprep.subr.bf16.mxu0 %v1313
        %1502 = vmatpush1.bf16.msra.mxu0 %v1312
        %1503 = vmatprep.subr.bf16.mxu0 %v1307
        %1504 = vmatpush1.bf16.msra.mxu0 %v1306
        %1505 = vmatprep.subr.bf16.mxu0 %v1301
        %1506 = vmatpush1.bf16.msra.mxu0 %v1300
        %1507 = vmatprep.subr.bf16.mxu0 %v1295
        %1508 = vmatpush1.bf16.msra.mxu0 %v1294
        %1509 = vmatprep.subr.bf16.mxu0 %v1289
        %1510 = vmatpush1.bf16.msra.mxu0 %v1288
        %1511 = vmatprep.subr.bf16.mxu0 %v1283
        %1512 = vmatpush1.bf16.msra.mxu0 %v1282
        %1513 = vmatprep.subr.bf16.mxu0 %v1277
        %1514 = vmatpush1.bf16.msra.mxu0 %v1276
        %1515 = vmatprep.subr.bf16.mxu0 %v1271
        %1516 = vmatpush1.bf16.msra.mxu0 %v1270
        %1517 = vmatprep.subr.bf16.mxu0 %v1361
        %1518 = vmatpush2.bf16.msra.mxu0 %v1360
        %1519 = vmatprep.subr.bf16.mxu0 %v1355
        %1520 = vmatpush2.bf16.msra.mxu0 %v1354
        %1521 = vmatprep.subr.bf16.mxu0 %v1349
        %1522 = vmatpush2.bf16.msra.mxu0 %v1348
        %1523 = vmatprep.subr.bf16.mxu0 %v1343
        %1524 = vmatpush2.bf16.msra.mxu0 %v1342
        %1525 = vmatprep.subr.bf16.mxu0 %v1337
        %1526 = vmatpush2.bf16.msra.mxu0 %v1336
        %1527 = vmatprep.subr.bf16.mxu0 %v1331
        %1528 = vmatpush2.bf16.msra.mxu0 %v1330
        %1529 = vmatprep.subr.bf16.mxu0 %v1325
        %1530 = vmatpush2.bf16.msra.mxu0 %v1324
        %1531 = vmatprep.subr.bf16.mxu0 %v1319
        %1532 = vmatpush2.bf16.msra.mxu0 %v1318
        %1533 = vmatprep.mubr.bf16.mxu0 %v851
        %1534 = vmatmul.mubr.bf16.gmra.mxu0 %v850
        %v1535 = vpop.f32.mrf.mxu0
        %v1536 = vadd.f32 %v961, %v1535
        %v1537 = vpop.f32.mrf.mxu0
        %v1538 = vadd.f32 %v965, %v1537
        %v1539 = vpop.f32.mrf.mxu0
        %v1540 = vpop.f32.mrf.mxu0
        %1541 = vdwg.mxu0
        %1542 = vmatprep.subr.bf16.mxu0 %v1315
        %1543 = vmatpush1.bf16.msra.mxu0 %v1314
        %1544 = vmatprep.subr.bf16.mxu0 %v1309
        %1545 = vmatpush1.bf16.msra.mxu0 %v1308
        %1546 = vmatprep.subr.bf16.mxu0 %v1303
        %1547 = vmatpush1.bf16.msra.mxu0 %v1302
        %1548 = vmatprep.subr.bf16.mxu0 %v1297
        %1549 = vmatpush1.bf16.msra.mxu0 %v1296
        %1550 = vmatprep.subr.bf16.mxu0 %v1291
        %1551 = vmatpush1.bf16.msra.mxu0 %v1290
        %1552 = vmatprep.subr.bf16.mxu0 %v1285
        %1553 = vmatpush1.bf16.msra.mxu0 %v1284
        %1554 = vmatprep.subr.bf16.mxu0 %v1279
        %1555 = vmatpush1.bf16.msra.mxu0 %v1278
        %1556 = vmatprep.subr.bf16.mxu0 %v1273
        %1557 = vmatpush1.bf16.msra.mxu0 %v1272
        %1558 = vmatprep.subr.bf16.mxu0 %v1363
        %1559 = vmatpush2.bf16.msra.mxu0 %v1362
        %1560 = vmatprep.subr.bf16.mxu0 %v1357
        %1561 = vmatpush2.bf16.msra.mxu0 %v1356
        %1562 = vmatprep.subr.bf16.mxu0 %v1351
        %1563 = vmatpush2.bf16.msra.mxu0 %v1350
        %1564 = vmatprep.subr.bf16.mxu0 %v1345
        %1565 = vmatpush2.bf16.msra.mxu0 %v1344
        %1566 = vmatprep.subr.bf16.mxu0 %v1339
        %1567 = vmatpush2.bf16.msra.mxu0 %v1338
        %1568 = vmatprep.subr.bf16.mxu0 %v1333
        %1569 = vmatpush2.bf16.msra.mxu0 %v1332
        %1570 = vmatprep.subr.bf16.mxu0 %v1327
        %1571 = vmatpush2.bf16.msra.mxu0 %v1326
        %1572 = vmatprep.subr.bf16.mxu0 %v1321
        %1573 = vmatpush2.bf16.msra.mxu0 %v1320
        %1574 = vmatprep.mubr.bf16.mxu0 %v851
        %1575 = vmatmul.mubr.bf16.gmra.mxu0 %v850
        %v1576 = vpop.f32.mrf.mxu0
        %v1577 = vadd.f32 %v969, %v1576
        %v1578 = vpop.f32.mrf.mxu0
        %v1579 = vadd.f32 %v973, %v1578
        %v1580 = vpop.f32.mrf.mxu0
        %v1581 = vpop.f32.mrf.mxu0
        %1582 = vdwg.mxu0
        %1583 = vmatprep.subr.mxu0 0.0
        %1584 = vmatpush1.xpose.msra.mxu0 0.0
        %1585 = vmatprep.subr.mxu0 0.0
        %1586 = vmatpush1.xpose.msra.mxu0 0.0
        %1587 = vmatprep.subr.mxu0 0.0
        %1588 = vmatpush1.xpose.msra.mxu0 0.0
        %1589 = vmatprep.subr.mxu0 0.0
        %1590 = vmatpush1.xpose.msra.mxu0 0.0
        %1591 = vmatprep.subr.mxu0 0.0
        %1592 = vmatpush1.xpose.msra.mxu0 0.0
        %1593 = vmatprep.subr.mxu0 0.0
        %1594 = vmatpush1.xpose.msra.mxu0 0.0
        %1595 = vmatprep.subr.mxu0 0.0
        %1596 = vmatpush1.xpose.msra.mxu0 0.0
        %1597 = vmatprep.subr.mxu0 0.0
        %1598 = vmatpush1.xpose.msra.mxu0 0.0
        %1599 = vmatprep.subr.mxu0 0.0
        %1600 = vmatpush1.xpose.msra.mxu0 0.0
        %1601 = vmatprep.subr.mxu0 0.0
        %1602 = vmatpush1.xpose.msra.mxu0 0.0
        %1603 = vmatprep.subr.mxu0 0.0
        %1604 = vmatpush1.xpose.msra.mxu0 0.0
        %1605 = vmatprep.subr.mxu0 0.0
        %1606 = vmatpush1.xpose.msra.mxu0 0.0
        %1607 = vmatprep.subr.mxu0 0.0
        %1608 = vmatpush1.xpose.msra.mxu0 0.0
        %1609 = vmatprep.subr.mxu0 0.0
        %1610 = vmatpush1.xpose.msra.mxu0 0.0
        %1611 = vmatprep.subr.mxu0 0.0
        %1612 = vmatpush1.xpose.msra.mxu0 0.0
        %1613 = vmatprep.subr.mxu0 %v1538
        %1614 = vmatpush1.xpose.msra.mxu0 %v1536
        %1615 = vmatprep.subr.mxu0 0.0
        %1616 = vmatpush2.xpose.msra.mxu0 0.0
        %1617 = vmatprep.subr.mxu0 0.0
        %1618 = vmatpush2.xpose.msra.mxu0 0.0
        %1619 = vmatprep.subr.mxu0 0.0
        %1620 = vmatpush2.xpose.msra.mxu0 0.0
        %1621 = vmatprep.subr.mxu0 0.0
        %1622 = vmatpush2.xpose.msra.mxu0 0.0
        %1623 = vmatprep.subr.mxu0 0.0
        %1624 = vmatpush2.xpose.msra.mxu0 0.0
        %1625 = vmatprep.subr.mxu0 0.0
        %1626 = vmatpush2.xpose.msra.mxu0 0.0
        %1627 = vmatprep.subr.mxu0 0.0
        %1628 = vmatpush2.xpose.msra.mxu0 0.0
        %1629 = vmatprep.subr.mxu0 0.0
        %1630 = vmatpush2.xpose.msra.mxu0 0.0
        %1631 = vmatprep.subr.mxu0 0.0
        %1632 = vmatpush2.xpose.msra.mxu0 0.0
        %1633 = vmatprep.subr.mxu0 0.0
        %1634 = vmatpush2.xpose.msra.mxu0 0.0
        %1635 = vmatprep.subr.mxu0 0.0
        %1636 = vmatpush2.xpose.msra.mxu0 0.0
        %1637 = vmatprep.subr.mxu0 0.0
        %1638 = vmatpush2.xpose.msra.mxu0 0.0
        %1639 = vmatprep.subr.mxu0 0.0
        %1640 = vmatpush2.xpose.msra.mxu0 0.0
        %1641 = vmatprep.subr.mxu0 0.0
        %1642 = vmatpush2.xpose.msra.mxu0 0.0
        %1643 = vmatprep.subr.mxu0 0.0
        %1644 = vmatpush2.xpose.msra.mxu0 0.0
        %1645 = vmatprep.subr.mxu0 0.0
        %1646 = vmatpush2.xpose.msra.mxu0 0.0
        %1647 = vmatprep.mubr.f32.mxu0 %v1497
        %1648 = vmatmul.mubr.f32.gmra.mxu0 %v1495
        %v1649 = vpop.f32.mrf.mxu0
        %v1650 = vadd.f32 0.0, %v1649
        %v1651 = vpop.f32.mrf.mxu0
        %1652 = vdwg.mxu0
        %vm1653 = vcmask 64512
        %v1654 = vsel %vm1653, %v1650, -inf
        %1655 = vmax.xlane.f32.xlu0 %v1654
        %v1656 = vpop.xlane.xlu0 %1655
        %v1657 = vsub.f32 %v1650, %v1656
        %v1658 = vmul.f32 %v1657, 1.442695
        %v1659 = vpow.pop %v1658
        %v1661 = vsel %vm1653, %v1659, 0
        %1663 = vmatprep.subr.mxu0 0.0
        %1664 = vmatpush1.msra.mxu0 0.0
        %1665 = vmatprep.subr.mxu0 0.0
        %1666 = vmatpush1.msra.mxu0 0.0
        %1667 = vmatprep.subr.mxu0 0.0
        %1668 = vmatpush1.msra.mxu0 0.0
        %1669 = vmatprep.subr.mxu0 0.0
        %1670 = vmatpush1.msra.mxu0 0.0
        %1671 = vmatprep.subr.mxu0 0.0
        %1672 = vmatpush1.msra.mxu0 0.0
        %1673 = vmatprep.subr.mxu0 0.0
        %1674 = vmatpush1.msra.mxu0 0.0
        %1675 = vmatprep.subr.mxu0 0.0
        %1676 = vmatpush1.msra.mxu0 0.0
        %1677 = vmatprep.subr.mxu0 0.0
        %1678 = vmatpush1.msra.mxu0 0.0
        %1679 = vmatprep.subr.mxu0 0.0
        %1680 = vmatpush1.msra.mxu0 0.0
        %1681 = vmatprep.subr.mxu0 0.0
        %1682 = vmatpush1.msra.mxu0 0.0
        %1683 = vmatprep.subr.mxu0 0.0
        %1684 = vmatpush1.msra.mxu0 0.0
        %1685 = vmatprep.subr.mxu0 0.0
        %1686 = vmatpush1.msra.mxu0 0.0
        %1687 = vmatprep.subr.mxu0 0.0
        %1688 = vmatpush1.msra.mxu0 0.0
        %1689 = vmatprep.subr.mxu0 0.0
        %1690 = vmatpush1.msra.mxu0 0.0
        %1691 = vmatprep.subr.mxu0 0.0
        %1692 = vmatpush1.msra.mxu0 0.0
        %1693 = vmatprep.subr.mxu0 %v1579
        %1694 = vmatpush1.msra.mxu0 %v1577
        %1695 = vmatprep.subr.mxu0 0.0
        %1696 = vmatpush2.msra.mxu0 0.0
        %1697 = vmatprep.subr.mxu0 0.0
        %1698 = vmatpush2.msra.mxu0 0.0
        %1699 = vmatprep.subr.mxu0 0.0
        %1700 = vmatpush2.msra.mxu0 0.0
        %1701 = vmatprep.subr.mxu0 0.0
        %1702 = vmatpush2.msra.mxu0 0.0
        %1703 = vmatprep.subr.mxu0 0.0
        %1704 = vmatpush2.msra.mxu0 0.0
        %1705 = vmatprep.subr.mxu0 0.0
        %1706 = vmatpush2.msra.mxu0 0.0
        %1707 = vmatprep.subr.mxu0 0.0
        %1708 = vmatpush2.msra.mxu0 0.0
        %1709 = vmatprep.subr.mxu0 0.0
        %1710 = vmatpush2.msra.mxu0 0.0
        %1711 = vmatprep.subr.mxu0 0.0
        %1712 = vmatpush2.msra.mxu0 0.0
        %1713 = vmatprep.subr.mxu0 0.0
        %1714 = vmatpush2.msra.mxu0 0.0
        %1715 = vmatprep.subr.mxu0 0.0
        %1716 = vmatpush2.msra.mxu0 0.0
        %1717 = vmatprep.subr.mxu0 0.0
        %1718 = vmatpush2.msra.mxu0 0.0
        %1719 = vmatprep.subr.mxu0 0.0
        %1720 = vmatpush2.msra.mxu0 0.0
        %1721 = vmatprep.subr.mxu0 0.0
        %1722 = vmatpush2.msra.mxu0 0.0
        %1723 = vmatprep.subr.mxu0 0.0
        %1724 = vmatpush2.msra.mxu0 0.0
        %1725 = vmatprep.subr.mxu0 0.0
        %1726 = vmatpush2.msra.mxu0 0.0
        %1727 = vmatprep.mubr.f32.mxu0 0.0
        %1728 = vmatmul.mubr.f32.gmra.mxu0 %v1661
        %v1729 = vpop.f32.mrf.mxu0
        %v1730 = vadd.f32 0.0, %v1729
        %v1731 = vpop.f32.mrf.mxu0
        %v1732 = vadd.f32 0.0, %v1731
        %1733 = vdwg.mxu0
        %v1734 = vsel %vm1653, %v1659, 0.0
        %1735 = vadd.xlane.f32.xlu0 %v1734
        %v1736 = vpop.xlane.xlu0 %1735
        %v1737 = vrcp.pop %v1736
        %v1738 = vmul.f32 %v1730, %v1737
        %v1739 = vmul.f32 %v1732, %v1737
        %v1740 = vpack.c.bf16 %v1738, %v1738
        %v1741 = vpack.c.bf16 %v1739, %v1739
        %v1742 = vld [vmem:[%s422 + $0x20] sm:$0xff]
        %v1743 = vld [vmem:[%s422 + $0xa8] sm:$0xff]
        %v1744 = vld [vmem:[%s422 + $0x130] sm:$0xff]
        %v1745 = vld [vmem:[%s422 + $0x1b8] sm:$0xff]
        %v1746 = vld [vmem:[%s422 + $0x240] sm:$0xff]
        %v1747 = vld [vmem:[%s422 + $0x2c8] sm:$0xff]
        %v1748 = vld [vmem:[%s422 + $0x350] sm:$0xff]
        %v1749 = vld [vmem:[%s422 + $0x3d8] sm:$0xff]
        %v1750 = vld [vmem:[%s422 + $0x460] sm:$0xff]
        %v1751 = vld [vmem:[%s422 + $0x4e8] sm:$0xff]
        %v1752 = vld [vmem:[%s422 + $0x570] sm:$0xff]
        %v1753 = vld [vmem:[%s422 + $0x5f8] sm:$0xff]
        %v1754 = vld [vmem:[%s422 + $0x680] sm:$0xff]
        %v1755 = vld [vmem:[%s422 + $0x708] sm:$0xff]
        %v1756 = vld [vmem:[%s422 + $0x790] sm:$0xff]
        %v1757 = vld [vmem:[%s422 + $0x818] sm:$0xff]
        %v1758 = vld [vmem:[%s422 + $0x8a0] sm:$0xff]
        %v1759 = vld [vmem:[%s422 + $0x928] sm:$0xff]
        %v1760 = vld [vmem:[%s422 + $0x9b0] sm:$0xff]
        %v1761 = vld [vmem:[%s422 + $0xa38] sm:$0xff]
        %v1762 = vld [vmem:[%s422 + $0xac0] sm:$0xff]
        %v1763 = vld [vmem:[%s422 + $0xb48] sm:$0xff]
        %v1764 = vld [vmem:[%s422 + $0xbd0] sm:$0xff]
        %v1765 = vld [vmem:[%s422 + $0xc58] sm:$0xff]
        %v1766 = vld [vmem:[%s422 + $0xce0] sm:$0xff]
        %v1767 = vld [vmem:[%s422 + $0xd68] sm:$0xff]
        %v1768 = vld [vmem:[%s422 + $0xdf0] sm:$0xff]
        %v1769 = vld [vmem:[%s422 + $0xe78] sm:$0xff]
        %v1770 = vld [vmem:[%s422 + $0xf00] sm:$0xff]
        %v1771 = vld [vmem:[%s422 + $0xf88] sm:$0xff]
        %v1772 = vld [vmem:[%s422 + $0x1010] sm:$0xff]
        %v1773 = vld [vmem:[%s422 + $0x1098] sm:$0xff]
        %v1774 = vld [vmem:[%s431 + $0x8] sm:$0x3]
        %v1776 = vlaneseq
        %v1777 = vshrl.u32 %v1776, 7
        %v1778 = vsub.s32 0, %v1777
        %v1779 = vrot.slane %v1774, %v1778
        %v1780 = vlaneseq
        %v1781 = vshrl.u32 %v1780, 7
        %v1782 = vsub.s32 1, %v1781
        %v1783 = vrot.slane %v1774, %v1782
        %v1818 = vunpack.c.l.b16 %v1742
        %v1819 = vunpack.c.h.b16 %v1742
        %v1820 = vunpack.c.l.b16 %v1743
        %v1821 = vunpack.c.h.b16 %v1743
        %v1822 = vunpack.c.l.b16 %v1744
        %v1823 = vunpack.c.h.b16 %v1744
        %v1824 = vunpack.c.l.b16 %v1745
        %v1825 = vunpack.c.h.b16 %v1745
        %v1826 = vunpack.c.l.b16 %v1746
        %v1827 = vunpack.c.h.b16 %v1746
        %v1828 = vunpack.c.l.b16 %v1747
        %v1829 = vunpack.c.h.b16 %v1747
        %v1830 = vunpack.c.l.b16 %v1748
        %v1831 = vunpack.c.h.b16 %v1748
        %v1832 = vunpack.c.l.b16 %v1749
        %v1833 = vunpack.c.h.b16 %v1749
        %v1834 = vunpack.c.l.b16 %v1750
        %v1835 = vunpack.c.h.b16 %v1750
        %v1836 = vunpack.c.l.b16 %v1751
        %v1837 = vunpack.c.h.b16 %v1751
        %v1838 = vunpack.c.l.b16 %v1752
        %v1839 = vunpack.c.h.b16 %v1752
        %v1840 = vunpack.c.l.b16 %v1753
        %v1841 = vunpack.c.h.b16 %v1753
        %v1842 = vunpack.c.l.b16 %v1754
        %v1843 = vunpack.c.h.b16 %v1754
        %v1844 = vunpack.c.l.b16 %v1755
        %v1845 = vunpack.c.h.b16 %v1755
        %v1846 = vunpack.c.l.b16 %v1756
        %v1847 = vunpack.c.h.b16 %v1756
        %v1848 = vunpack.c.l.b16 %v1757
        %v1849 = vunpack.c.h.b16 %v1757
        %v1850 = vunpack.c.l.b16 %v1758
        %v1851 = vunpack.c.h.b16 %v1758
        %v1852 = vunpack.c.l.b16 %v1759
        %v1853 = vunpack.c.h.b16 %v1759
        %v1854 = vunpack.c.l.b16 %v1760
        %v1855 = vunpack.c.h.b16 %v1760
        %v1856 = vunpack.c.l.b16 %v1761
        %v1857 = vunpack.c.h.b16 %v1761
        %v1858 = vunpack.c.l.b16 %v1762
        %v1859 = vunpack.c.h.b16 %v1762
        %v1860 = vunpack.c.l.b16 %v1763
        %v1861 = vunpack.c.h.b16 %v1763
        %v1862 = vunpack.c.l.b16 %v1764
        %v1863 = vunpack.c.h.b16 %v1764
        %v1864 = vunpack.c.l.b16 %v1765
        %v1865 = vunpack.c.h.b16 %v1765
        %v1866 = vunpack.c.l.b16 %v1766
        %v1867 = vunpack.c.h.b16 %v1766
        %v1868 = vunpack.c.l.b16 %v1767
        %v1869 = vunpack.c.h.b16 %v1767
        %v1870 = vunpack.c.l.b16 %v1768
        %v1871 = vunpack.c.h.b16 %v1768
        %v1872 = vunpack.c.l.b16 %v1769
        %v1873 = vunpack.c.h.b16 %v1769
        %v1874 = vunpack.c.l.b16 %v1770
        %v1875 = vunpack.c.h.b16 %v1770
        %v1876 = vunpack.c.l.b16 %v1771
        %v1877 = vunpack.c.h.b16 %v1771
        %v1878 = vunpack.c.l.b16 %v1772
        %v1879 = vunpack.c.h.b16 %v1772
        %v1880 = vunpack.c.l.b16 %v1773
        %v1881 = vunpack.c.h.b16 %v1773
        %v1882 = vpack.c.b16 %v1820, %v1818
        %v1883 = vpack.c.b16 %v1821, %v1819
        %v1884 = vpack.c.b16 %v1824, %v1822
        %v1885 = vpack.c.b16 %v1825, %v1823
        %v1886 = vpack.c.b16 %v1828, %v1826
        %v1887 = vpack.c.b16 %v1829, %v1827
        %v1888 = vpack.c.b16 %v1832, %v1830
        %v1889 = vpack.c.b16 %v1833, %v1831
        %v1890 = vpack.c.b16 %v1836, %v1834
        %v1891 = vpack.c.b16 %v1837, %v1835
        %v1892 = vpack.c.b16 %v1840, %v1838
        %v1893 = vpack.c.b16 %v1841, %v1839
        %v1894 = vpack.c.b16 %v1844, %v1842
        %v1895 = vpack.c.b16 %v1845, %v1843
        %v1896 = vpack.c.b16 %v1848, %v1846
        %v1897 = vpack.c.b16 %v1849, %v1847
        %v1898 = vpack.c.b16 %v1852, %v1850
        %v1899 = vpack.c.b16 %v1853, %v1851
        %v1900 = vpack.c.b16 %v1856, %v1854
        %v1901 = vpack.c.b16 %v1857, %v1855
        %v1902 = vpack.c.b16 %v1860, %v1858
        %v1903 = vpack.c.b16 %v1861, %v1859
        %v1904 = vpack.c.b16 %v1864, %v1862
        %v1905 = vpack.c.b16 %v1865, %v1863
        %v1906 = vpack.c.b16 %v1868, %v1866
        %v1907 = vpack.c.b16 %v1869, %v1867
        %v1908 = vpack.c.b16 %v1872, %v1870
        %v1909 = vpack.c.b16 %v1873, %v1871
        %v1910 = vpack.c.b16 %v1876, %v1874
        %v1911 = vpack.c.b16 %v1877, %v1875
        %v1912 = vpack.c.b16 %v1880, %v1878
        %v1913 = vpack.c.b16 %v1881, %v1879
        %1946 = vmatprep.subr.bf16.mxu0 %v1897
        %1947 = vmatpush1.bf16.msra.mxu0 %v1896
        %1948 = vmatprep.subr.bf16.mxu0 %v1895
        %1949 = vmatpush1.bf16.msra.mxu0 %v1894
        %1950 = vmatprep.subr.bf16.mxu0 %v1893
        %1951 = vmatpush1.bf16.msra.mxu0 %v1892
        %1952 = vmatprep.subr.bf16.mxu0 %v1891
        %1953 = vmatpush1.bf16.msra.mxu0 %v1890
        %1954 = vmatprep.subr.bf16.mxu0 %v1889
        %1955 = vmatpush1.bf16.msra.mxu0 %v1888
        %1956 = vmatprep.subr.bf16.mxu0 %v1887
        %1957 = vmatpush1.bf16.msra.mxu0 %v1886
        %1958 = vmatprep.subr.bf16.mxu0 %v1885
        %1959 = vmatpush1.bf16.msra.mxu0 %v1884
        %1960 = vmatprep.subr.bf16.mxu0 %v1883
        %1961 = vmatpush1.bf16.msra.mxu0 %v1882
        %1962 = vmatprep.subr.bf16.mxu0 %v1913
        %1963 = vmatpush2.bf16.msra.mxu0 %v1912
        %1964 = vmatprep.subr.bf16.mxu0 %v1911
        %1965 = vmatpush2.bf16.msra.mxu0 %v1910
        %1966 = vmatprep.subr.bf16.mxu0 %v1909
        %1967 = vmatpush2.bf16.msra.mxu0 %v1908
        %1968 = vmatprep.subr.bf16.mxu0 %v1907
        %1969 = vmatpush2.bf16.msra.mxu0 %v1906
        %1970 = vmatprep.subr.bf16.mxu0 %v1905
        %1971 = vmatpush2.bf16.msra.mxu0 %v1904
        %1972 = vmatprep.subr.bf16.mxu0 %v1903
        %1973 = vmatpush2.bf16.msra.mxu0 %v1902
        %1974 = vmatprep.subr.bf16.mxu0 %v1901
        %1975 = vmatpush2.bf16.msra.mxu0 %v1900
        %1976 = vmatprep.subr.bf16.mxu0 %v1899
        %1977 = vmatpush2.bf16.msra.mxu0 %v1898
        %1978 = vmatprep.mubr.bf16.mxu0 %v1741
        %1979 = vmatmul.mubr.bf16.gmra.mxu0 %v1740
        %v1980 = vpop.f32.mrf.mxu0
        %v1981 = vadd.f32 %v1779, %v1980
        %v1982 = vpop.f32.mrf.mxu0
        %v1983 = vadd.f32 %v1783, %v1982
        %v1984 = vpop.f32.mrf.mxu0
        %v1985 = vpop.f32.mrf.mxu0
        %1986 = vdwg.mxu0
        %v1987 = vadd.f32 %v846, %v1981
        %v1988 = vadd.f32 %v847, %v1983
        %v1989 = vld [vmem:[%s440] ss:$8 sm:$0x3]
        %s1990 = scalar_lea.vmem %s440, 1 [#allocation14]
        %v1991 = vld [vmem:[%s1990] ss:$8 sm:$0x3]
        %v1992 = vadd.f32 %v1987, %v1988
        %1993 = vadd.xlane.f32.xlu0 %v1992
        %v1994 = vpop.xlane.xlu0 %1993
        %v1995 = vrcp.pop 256.0
        %v1996 = vmul.f32 %v1994, %v1995
        %v1997 = vsub.f32 %v1987, %v1996
        %v1998 = vsub.f32 %v1988, %v1996
        %v1999 = vmul.f32 %v1997, %v1997
        %v2000 = vmul.f32 %v1998, %v1998
        %v2001 = vadd.f32 %v1999, %v2000
        %2002 = vadd.xlane.f32.xlu0 %v2001
        %v2003 = vpop.xlane.xlu0 %2002
        %v2004 = vmul.f32 %v2003, %v1995
        %v2005 = vadd.f32 %v2004, 1e-05
        %v2006 = vrsqrt.pop %v2005
        %v2007 = vmul.f32 %v1997, %v2006
        %v2008 = vmul.f32 %v1998, %v2006
        %v2010 = vlaneseq
        %v2011 = vshrl.u32 %v2010, 7
        %v2012 = vsub.s32 0, %v2011
        %v2013 = vrot.slane %v1989, %v2012
        %v2014 = vlaneseq
        %v2015 = vshrl.u32 %v2014, 7
        %v2016 = vsub.s32 1, %v2015
        %v2017 = vrot.slane %v1989, %v2016
        %v2020 = vmul.f32 %v2007, %v2013
        %v2021 = vmul.f32 %v2008, %v2017
        %v2023 = vlaneseq
        %v2024 = vshrl.u32 %v2023, 7
        %v2025 = vsub.s32 0, %v2024
        %v2026 = vrot.slane %v1991, %v2025
        %v2027 = vlaneseq
        %v2028 = vshrl.u32 %v2027, 7
        %v2029 = vsub.s32 1, %v2028
        %v2030 = vrot.slane %v1991, %v2029
        %v2033 = vadd.f32 %v2020, %v2026
        %v2034 = vadd.f32 %v2021, %v2030
        %v2035 = vpack.c.bf16 %v2033, %v2033
        %v2036 = vpack.c.bf16 %v2034, %v2034
        %v2037 = vld [vmem:[%s422 + $0x28] sm:$0xff]
        %v2038 = vld [vmem:[%s422 + $0xb0] sm:$0xff]
        %v2039 = vld [vmem:[%s422 + $0x138] sm:$0xff]
        %v2040 = vld [vmem:[%s422 + $0x1c0] sm:$0xff]
        %v2041 = vld [vmem:[%s422 + $0x248] sm:$0xff]
        %v2042 = vld [vmem:[%s422 + $0x2d0] sm:$0xff]
        %v2043 = vld [vmem:[%s422 + $0x358] sm:$0xff]
        %v2044 = vld [vmem:[%s422 + $0x3e0] sm:$0xff]
        %v2045 = vld [vmem:[%s422 + $0x468] sm:$0xff]
        %v2046 = vld [vmem:[%s422 + $0x4f0] sm:$0xff]
        %v2047 = vld [vmem:[%s422 + $0x578] sm:$0xff]
        %v2048 = vld [vmem:[%s422 + $0x600] sm:$0xff]
        %v2049 = vld [vmem:[%s422 + $0x688] sm:$0xff]
        %v2050 = vld [vmem:[%s422 + $0x710] sm:$0xff]
        %v2051 = vld [vmem:[%s422 + $0x798] sm:$0xff]
        %v2052 = vld [vmem:[%s422 + $0x820] sm:$0xff]
        %v2053 = vld [vmem:[%s422 + $0x8a8] sm:$0xff]
        %v2054 = vld [vmem:[%s422 + $0x930] sm:$0xff]
        %v2055 = vld [vmem:[%s422 + $0x9b8] sm:$0xff]
        %v2056 = vld [vmem:[%s422 + $0xa40] sm:$0xff]
        %v2057 = vld [vmem:[%s422 + $0xac8] sm:$0xff]
        %v2058 = vld [vmem:[%s422 + $0xb50] sm:$0xff]
        %v2059 = vld [vmem:[%s422 + $0xbd8] sm:$0xff]
        %v2060 = vld [vmem:[%s422 + $0xc60] sm:$0xff]
        %v2061 = vld [vmem:[%s422 + $0xce8] sm:$0xff]
        %v2062 = vld [vmem:[%s422 + $0xd70] sm:$0xff]
        %v2063 = vld [vmem:[%s422 + $0xdf8] sm:$0xff]
        %v2064 = vld [vmem:[%s422 + $0xe80] sm:$0xff]
        %v2065 = vld [vmem:[%s422 + $0xf08] sm:$0xff]
        %v2066 = vld [vmem:[%s422 + $0xf90] sm:$0xff]
        %v2067 = vld [vmem:[%s422 + $0x1018] sm:$0xff]
        %v2068 = vld [vmem:[%s422 + $0x10a0] sm:$0xff]
        %v2069 = vld [vmem:[%s431 + $0xa] sm:$0x3]
        %v2071 = vlaneseq
        %v2072 = vshrl.u32 %v2071, 7
        %v2073 = vsub.s32 0, %v2072
        %v2074 = vrot.slane %v2069, %v2073
        %v2075 = vlaneseq
        %v2076 = vshrl.u32 %v2075, 7
        %v2077 = vsub.s32 1, %v2076
        %v2078 = vrot.slane %v2069, %v2077
        %v2113 = vunpack.c.l.b16 %v2037
        %v2114 = vunpack.c.h.b16 %v2037
        %v2115 = vunpack.c.l.b16 %v2038
        %v2116 = vunpack.c.h.b16 %v2038
        %v2117 = vunpack.c.l.b16 %v2039
        %v2118 = vunpack.c.h.b16 %v2039
        %v2119 = vunpack.c.l.b16 %v2040
        %v2120 = vunpack.c.h.b16 %v2040
        %v2121 = vunpack.c.l.b16 %v2041
        %v2122 = vunpack.c.h.b16 %v2041
        %v2123 = vunpack.c.l.b16 %v2042
        %v2124 = vunpack.c.h.b16 %v2042
        %v2125 = vunpack.c.l.b16 %v2043
        %v2126 = vunpack.c.h.b16 %v2043
        %v2127 = vunpack.c.l.b16 %v2044
        %v2128 = vunpack.c.h.b16 %v2044
        %v2129 = vunpack.c.l.b16 %v2045
        %v2130 = vunpack.c.h.b16 %v2045
        %v2131 = vunpack.c.l.b16 %v2046
        %v2132 = vunpack.c.h.b16 %v2046
        %v2133 = vunpack.c.l.b16 %v2047
        %v2134 = vunpack.c.h.b16 %v2047
        %v2135 = vunpack.c.l.b16 %v2048
        %v2136 = vunpack.c.h.b16 %v2048
        %v2137 = vunpack.c.l.b16 %v2049
        %v2138 = vunpack.c.h.b16 %v2049
        %v2139 = vunpack.c.l.b16 %v2050
        %v2140 = vunpack.c.h.b16 %v2050
        %v2141 = vunpack.c.l.b16 %v2051
        %v2142 = vunpack.c.h.b16 %v2051
        %v2143 = vunpack.c.l.b16 %v2052
        %v2144 = vunpack.c.h.b16 %v2052
        %v2145 = vunpack.c.l.b16 %v2053
        %v2146 = vunpack.c.h.b16 %v2053
        %v2147 = vunpack.c.l.b16 %v2054
        %v2148 = vunpack.c.h.b16 %v2054
        %v2149 = vunpack.c.l.b16 %v2055
        %v2150 = vunpack.c.h.b16 %v2055
        %v2151 = vunpack.c.l.b16 %v2056
        %v2152 = vunpack.c.h.b16 %v2056
        %v2153 = vunpack.c.l.b16 %v2057
        %v2154 = vunpack.c.h.b16 %v2057
        %v2155 = vunpack.c.l.b16 %v2058
        %v2156 = vunpack.c.h.b16 %v2058
        %v2157 = vunpack.c.l.b16 %v2059
        %v2158 = vunpack.c.h.b16 %v2059
        %v2159 = vunpack.c.l.b16 %v2060
        %v2160 = vunpack.c.h.b16 %v2060
        %v2161 = vunpack.c.l.b16 %v2061
        %v2162 = vunpack.c.h.b16 %v2061
        %v2163 = vunpack.c.l.b16 %v2062
        %v2164 = vunpack.c.h.b16 %v2062
        %v2165 = vunpack.c.l.b16 %v2063
        %v2166 = vunpack.c.h.b16 %v2063
        %v2167 = vunpack.c.l.b16 %v2064
        %v2168 = vunpack.c.h.b16 %v2064
        %v2169 = vunpack.c.l.b16 %v2065
        %v2170 = vunpack.c.h.b16 %v2065
        %v2171 = vunpack.c.l.b16 %v2066
        %v2172 = vunpack.c.h.b16 %v2066
        %v2173 = vunpack.c.l.b16 %v2067
        %v2174 = vunpack.c.h.b16 %v2067
        %v2175 = vunpack.c.l.b16 %v2068
        %v2176 = vunpack.c.h.b16 %v2068
        %v2177 = vpack.c.b16 %v2115, %v2113
        %v2178 = vpack.c.b16 %v2116, %v2114
        %v2179 = vpack.c.b16 %v2119, %v2117
        %v2180 = vpack.c.b16 %v2120, %v2118
        %v2181 = vpack.c.b16 %v2123, %v2121
        %v2182 = vpack.c.b16 %v2124, %v2122
        %v2183 = vpack.c.b16 %v2127, %v2125
        %v2184 = vpack.c.b16 %v2128, %v2126
        %v2185 = vpack.c.b16 %v2131, %v2129
        %v2186 = vpack.c.b16 %v2132, %v2130
        %v2187 = vpack.c.b16 %v2135, %v2133
        %v2188 = vpack.c.b16 %v2136, %v2134
        %v2189 = vpack.c.b16 %v2139, %v2137
        %v2190 = vpack.c.b16 %v2140, %v2138
        %v2191 = vpack.c.b16 %v2143, %v2141
        %v2192 = vpack.c.b16 %v2144, %v2142
        %v2193 = vpack.c.b16 %v2147, %v2145
        %v2194 = vpack.c.b16 %v2148, %v2146
        %v2195 = vpack.c.b16 %v2151, %v2149
        %v2196 = vpack.c.b16 %v2152, %v2150
        %v2197 = vpack.c.b16 %v2155, %v2153
        %v2198 = vpack.c.b16 %v2156, %v2154
        %v2199 = vpack.c.b16 %v2159, %v2157
        %v2200 = vpack.c.b16 %v2160, %v2158
        %v2201 = vpack.c.b16 %v2163, %v2161
        %v2202 = vpack.c.b16 %v2164, %v2162
        %v2203 = vpack.c.b16 %v2167, %v2165
        %v2204 = vpack.c.b16 %v2168, %v2166
        %v2205 = vpack.c.b16 %v2171, %v2169
        %v2206 = vpack.c.b16 %v2172, %v2170
        %v2207 = vpack.c.b16 %v2175, %v2173
        %v2208 = vpack.c.b16 %v2176, %v2174
        %2241 = vmatprep.subr.bf16.mxu0 %v2192
        %2242 = vmatpush1.bf16.msra.mxu0 %v2191
        %2243 = vmatprep.subr.bf16.mxu0 %v2190
        %2244 = vmatpush1.bf16.msra.mxu0 %v2189
        %2245 = vmatprep.subr.bf16.mxu0 %v2188
        %2246 = vmatpush1.bf16.msra.mxu0 %v2187
        %2247 = vmatprep.subr.bf16.mxu0 %v2186
        %2248 = vmatpush1.bf16.msra.mxu0 %v2185
        %2249 = vmatprep.subr.bf16.mxu0 %v2184
        %2250 = vmatpush1.bf16.msra.mxu0 %v2183
        %2251 = vmatprep.subr.bf16.mxu0 %v2182
        %2252 = vmatpush1.bf16.msra.mxu0 %v2181
        %2253 = vmatprep.subr.bf16.mxu0 %v2180
        %2254 = vmatpush1.bf16.msra.mxu0 %v2179
        %2255 = vmatprep.subr.bf16.mxu0 %v2178
        %2256 = vmatpush1.bf16.msra.mxu0 %v2177
        %2257 = vmatprep.subr.bf16.mxu0 %v2208
        %2258 = vmatpush2.bf16.msra.mxu0 %v2207
        %2259 = vmatprep.subr.bf16.mxu0 %v2206
        %2260 = vmatpush2.bf16.msra.mxu0 %v2205
        %2261 = vmatprep.subr.bf16.mxu0 %v2204
        %2262 = vmatpush2.bf16.msra.mxu0 %v2203
        %2263 = vmatprep.subr.bf16.mxu0 %v2202
        %2264 = vmatpush2.bf16.msra.mxu0 %v2201
        %2265 = vmatprep.subr.bf16.mxu0 %v2200
        %2266 = vmatpush2.bf16.msra.mxu0 %v2199
        %2267 = vmatprep.subr.bf16.mxu0 %v2198
        %2268 = vmatpush2.bf16.msra.mxu0 %v2197
        %2269 = vmatprep.subr.bf16.mxu0 %v2196
        %2270 = vmatpush2.bf16.msra.mxu0 %v2195
        %2271 = vmatprep.subr.bf16.mxu0 %v2194
        %2272 = vmatpush2.bf16.msra.mxu0 %v2193
        %2273 = vmatprep.mubr.bf16.mxu0 %v2036
        %2274 = vmatmul.mubr.bf16.gmra.mxu0 %v2035
        %v2275 = vpop.f32.mrf.mxu0
        %v2276 = vadd.f32 %v2074, %v2275
        %v2277 = vpop.f32.mrf.mxu0
        %v2278 = vadd.f32 %v2078, %v2277
        %v2279 = vpop.f32.mrf.mxu0
        %v2280 = vpop.f32.mrf.mxu0
        %2281 = vdwg.mxu0
        %v2282 = vmax.f32 %v2276, 0.0
        %v2283 = vmax.f32 %v2278, 0.0
        %v2284 = vpack.c.bf16 %v2282, %v2282
        %v2285 = vpack.c.bf16 %v2283, %v2283
        %v2286 = vld [vmem:[%s422 + $0x30] sm:$0xff]
        %v2287 = vld [vmem:[%s422 + $0xb8] sm:$0xff]
        %v2288 = vld [vmem:[%s422 + $0x140] sm:$0xff]
        %v2289 = vld [vmem:[%s422 + $0x1c8] sm:$0xff]
        %v2290 = vld [vmem:[%s422 + $0x250] sm:$0xff]
        %v2291 = vld [vmem:[%s422 + $0x2d8] sm:$0xff]
        %v2292 = vld [vmem:[%s422 + $0x360] sm:$0xff]
        %v2293 = vld [vmem:[%s422 + $0x3e8] sm:$0xff]
        %v2294 = vld [vmem:[%s422 + $0x470] sm:$0xff]
        %v2295 = vld [vmem:[%s422 + $0x4f8] sm:$0xff]
        %v2296 = vld [vmem:[%s422 + $0x580] sm:$0xff]
        %v2297 = vld [vmem:[%s422 + $0x608] sm:$0xff]
        %v2298 = vld [vmem:[%s422 + $0x690] sm:$0xff]
        %v2299 = vld [vmem:[%s422 + $0x718] sm:$0xff]
        %v2300 = vld [vmem:[%s422 + $0x7a0] sm:$0xff]
        %v2301 = vld [vmem:[%s422 + $0x828] sm:$0xff]
        %v2302 = vld [vmem:[%s422 + $0x8b0] sm:$0xff]
        %v2303 = vld [vmem:[%s422 + $0x938] sm:$0xff]
        %v2304 = vld [vmem:[%s422 + $0x9c0] sm:$0xff]
        %v2305 = vld [vmem:[%s422 + $0xa48] sm:$0xff]
        %v2306 = vld [vmem:[%s422 + $0xad0] sm:$0xff]
        %v2307 = vld [vmem:[%s422 + $0xb58] sm:$0xff]
        %v2308 = vld [vmem:[%s422 + $0xbe0] sm:$0xff]
        %v2309 = vld [vmem:[%s422 + $0xc68] sm:$0xff]
        %v2310 = vld [vmem:[%s422 + $0xcf0] sm:$0xff]
        %v2311 = vld [vmem:[%s422 + $0xd78] sm:$0xff]
        %v2312 = vld [vmem:[%s422 + $0xe00] sm:$0xff]
        %v2313 = vld [vmem:[%s422 + $0xe88] sm:$0xff]
        %v2314 = vld [vmem:[%s422 + $0xf10] sm:$0xff]
        %v2315 = vld [vmem:[%s422 + $0xf98] sm:$0xff]
        %v2316 = vld [vmem:[%s422 + $0x1020] sm:$0xff]
        %v2317 = vld [vmem:[%s422 + $0x10a8] sm:$0xff]
        %v2318 = vld [vmem:[%s431 + $0xc] sm:$0x3]
        %v2320 = vlaneseq
        %v2321 = vshrl.u32 %v2320, 7
        %v2322 = vsub.s32 0, %v2321
        %v2323 = vrot.slane %v2318, %v2322
        %v2324 = vlaneseq
        %v2325 = vshrl.u32 %v2324, 7
        %v2326 = vsub.s32 1, %v2325
        %v2327 = vrot.slane %v2318, %v2326
        %v2362 = vunpack.c.l.b16 %v2286
        %v2363 = vunpack.c.h.b16 %v2286
        %v2364 = vunpack.c.l.b16 %v2287
        %v2365 = vunpack.c.h.b16 %v2287
        %v2366 = vunpack.c.l.b16 %v2288
        %v2367 = vunpack.c.h.b16 %v2288
        %v2368 = vunpack.c.l.b16 %v2289
        %v2369 = vunpack.c.h.b16 %v2289
        %v2370 = vunpack.c.l.b16 %v2290
        %v2371 = vunpack.c.h.b16 %v2290
        %v2372 = vunpack.c.l.b16 %v2291
        %v2373 = vunpack.c.h.b16 %v2291
        %v2374 = vunpack.c.l.b16 %v2292
        %v2375 = vunpack.c.h.b16 %v2292
        %v2376 = vunpack.c.l.b16 %v2293
        %v2377 = vunpack.c.h.b16 %v2293
        %v2378 = vunpack.c.l.b16 %v2294
        %v2379 = vunpack.c.h.b16 %v2294
        %v2380 = vunpack.c.l.b16 %v2295
        %v2381 = vunpack.c.h.b16 %v2295
        %v2382 = vunpack.c.l.b16 %v2296
        %v2383 = vunpack.c.h.b16 %v2296
        %v2384 = vunpack.c.l.b16 %v2297
        %v2385 = vunpack.c.h.b16 %v2297
        %v2386 = vunpack.c.l.b16 %v2298
        %v2387 = vunpack.c.h.b16 %v2298
        %v2388 = vunpack.c.l.b16 %v2299
        %v2389 = vunpack.c.h.b16 %v2299
        %v2390 = vunpack.c.l.b16 %v2300
        %v2391 = vunpack.c.h.b16 %v2300
        %v2392 = vunpack.c.l.b16 %v2301
        %v2393 = vunpack.c.h.b16 %v2301
        %v2394 = vunpack.c.l.b16 %v2302
        %v2395 = vunpack.c.h.b16 %v2302
        %v2396 = vunpack.c.l.b16 %v2303
        %v2397 = vunpack.c.h.b16 %v2303
        %v2398 = vunpack.c.l.b16 %v2304
        %v2399 = vunpack.c.h.b16 %v2304
        %v2400 = vunpack.c.l.b16 %v2305
        %v2401 = vunpack.c.h.b16 %v2305
        %v2402 = vunpack.c.l.b16 %v2306
        %v2403 = vunpack.c.h.b16 %v2306
        %v2404 = vunpack.c.l.b16 %v2307
        %v2405 = vunpack.c.h.b16 %v2307
        %v2406 = vunpack.c.l.b16 %v2308
        %v2407 = vunpack.c.h.b16 %v2308
        %v2408 = vunpack.c.l.b16 %v2309
        %v2409 = vunpack.c.h.b16 %v2309
        %v2410 = vunpack.c.l.b16 %v2310
        %v2411 = vunpack.c.h.b16 %v2310
        %v2412 = vunpack.c.l.b16 %v2311
        %v2413 = vunpack.c.h.b16 %v2311
        %v2414 = vunpack.c.l.b16 %v2312
        %v2415 = vunpack.c.h.b16 %v2312
        %v2416 = vunpack.c.l.b16 %v2313
        %v2417 = vunpack.c.h.b16 %v2313
        %v2418 = vunpack.c.l.b16 %v2314
        %v2419 = vunpack.c.h.b16 %v2314
        %v2420 = vunpack.c.l.b16 %v2315
        %v2421 = vunpack.c.h.b16 %v2315
        %v2422 = vunpack.c.l.b16 %v2316
        %v2423 = vunpack.c.h.b16 %v2316
        %v2424 = vunpack.c.l.b16 %v2317
        %v2425 = vunpack.c.h.b16 %v2317
        %v2426 = vpack.c.b16 %v2364, %v2362
        %v2427 = vpack.c.b16 %v2365, %v2363
        %v2428 = vpack.c.b16 %v2368, %v2366
        %v2429 = vpack.c.b16 %v2369, %v2367
        %v2430 = vpack.c.b16 %v2372, %v2370
        %v2431 = vpack.c.b16 %v2373, %v2371
        %v2432 = vpack.c.b16 %v2376, %v2374
        %v2433 = vpack.c.b16 %v2377, %v2375
        %v2434 = vpack.c.b16 %v2380, %v2378
        %v2435 = vpack.c.b16 %v2381, %v2379
        %v2436 = vpack.c.b16 %v2384, %v2382
        %v2437 = vpack.c.b16 %v2385, %v2383
        %v2438 = vpack.c.b16 %v2388, %v2386
        %v2439 = vpack.c.b16 %v2389, %v2387
        %v2440 = vpack.c.b16 %v2392, %v2390
        %v2441 = vpack.c.b16 %v2393, %v2391
        %v2442 = vpack.c.b16 %v2396, %v2394
        %v2443 = vpack.c.b16 %v2397, %v2395
        %v2444 = vpack.c.b16 %v2400, %v2398
        %v2445 = vpack.c.b16 %v2401, %v2399
        %v2446 = vpack.c.b16 %v2404, %v2402
        %v2447 = vpack.c.b16 %v2405, %v2403
        %v2448 = vpack.c.b16 %v2408, %v2406
        %v2449 = vpack.c.b16 %v2409, %v2407
        %v2450 = vpack.c.b16 %v2412, %v2410
        %v2451 = vpack.c.b16 %v2413, %v2411
        %v2452 = vpack.c.b16 %v2416, %v2414
        %v2453 = vpack.c.b16 %v2417, %v2415
        %v2454 = vpack.c.b16 %v2420, %v2418
        %v2455 = vpack.c.b16 %v2421, %v2419
        %v2456 = vpack.c.b16 %v2424, %v2422
        %v2457 = vpack.c.b16 %v2425, %v2423
        %2490 = vmatprep.subr.bf16.mxu0 %v2441
        %2491 = vmatpush1.bf16.msra.mxu0 %v2440
        %2492 = vmatprep.subr.bf16.mxu0 %v2439
        %2493 = vmatpush1.bf16.msra.mxu0 %v2438
        %2494 = vmatprep.subr.bf16.mxu0 %v2437
        %2495 = vmatpush1.bf16.msra.mxu0 %v2436
        %2496 = vmatprep.subr.bf16.mxu0 %v2435
        %2497 = vmatpush1.bf16.msra.mxu0 %v2434
        %2498 = vmatprep.subr.bf16.mxu0 %v2433
        %2499 = vmatpush1.bf16.msra.mxu0 %v2432
        %2500 = vmatprep.subr.bf16.mxu0 %v2431
        %2501 = vmatpush1.bf16.msra.mxu0 %v2430
        %2502 = vmatprep.subr.bf16.mxu0 %v2429
        %2503 = vmatpush1.bf16.msra.mxu0 %v2428
        %2504 = vmatprep.subr.bf16.mxu0 %v2427
        %2505 = vmatpush1.bf16.msra.mxu0 %v2426
        %2506 = vmatprep.subr.bf16.mxu0 %v2457
        %2507 = vmatpush2.bf16.msra.mxu0 %v2456
        %2508 = vmatprep.subr.bf16.mxu0 %v2455
        %2509 = vmatpush2.bf16.msra.mxu0 %v2454
        %2510 = vmatprep.subr.bf16.mxu0 %v2453
        %2511 = vmatpush2.bf16.msra.mxu0 %v2452
        %2512 = vmatprep.subr.bf16.mxu0 %v2451
        %2513 = vmatpush2.bf16.msra.mxu0 %v2450
        %2514 = vmatprep.subr.bf16.mxu0 %v2449
        %2515 = vmatpush2.bf16.msra.mxu0 %v2448
        %2516 = vmatprep.subr.bf16.mxu0 %v2447
        %2517 = vmatpush2.bf16.msra.mxu0 %v2446
        %2518 = vmatprep.subr.bf16.mxu0 %v2445
        %2519 = vmatpush2.bf16.msra.mxu0 %v2444
        %2520 = vmatprep.subr.bf16.mxu0 %v2443
        %2521 = vmatpush2.bf16.msra.mxu0 %v2442
        %2522 = vmatprep.mubr.bf16.mxu0 %v2285
        %2523 = vmatmul.mubr.bf16.gmra.mxu0 %v2284
        %v2524 = vpop.f32.mrf.mxu0
        %v2525 = vadd.f32 %v2323, %v2524
        %v2526 = vpop.f32.mrf.mxu0
        %v2527 = vadd.f32 %v2327, %v2526
        %v2528 = vpop.f32.mrf.mxu0
        %v2529 = vpop.f32.mrf.mxu0
        %2530 = vdwg.mxu0
        %v2531 = vadd.f32 %v2033, %v2525
        %v2532 = vadd.f32 %v2034, %v2527
        %s2533 = scalar_lea.vmem %s440, 2 [#allocation14]
        %v2534 = vld [vmem:[%s2533] ss:$8 sm:$0x3]
        %s2535 = scalar_lea.vmem %s440, 3 [#allocation14]
        %v2536 = vld [vmem:[%s2535] ss:$8 sm:$0x3]
        %v2537 = vadd.f32 %v2531, %v2532
        %2538 = vadd.xlane.f32.xlu0 %v2537
        %v2539 = vpop.xlane.xlu0 %2538
        %v2540 = vmul.f32 %v2539, %v1995
        %v2541 = vsub.f32 %v2531, %v2540
        %v2542 = vsub.f32 %v2532, %v2540
        %v2543 = vmul.f32 %v2541, %v2541
        %v2544 = vmul.f32 %v2542, %v2542
        %v2545 = vadd.f32 %v2543, %v2544
        %2546 = vadd.xlane.f32.xlu0 %v2545
        %v2547 = vpop.xlane.xlu0 %2546
        %v2548 = vmul.f32 %v2547, %v1995
        %v2549 = vadd.f32 %v2548, 1e-05
        %v2550 = vrsqrt.pop %v2549
        %v2551 = vmul.f32 %v2541, %v2550
        %v2552 = vmul.f32 %v2542, %v2550
        %v2554 = vlaneseq
        %v2555 = vshrl.u32 %v2554, 7
        %v2556 = vsub.s32 0, %v2555
        %v2557 = vrot.slane %v2534, %v2556
        %v2558 = vlaneseq
        %v2559 = vshrl.u32 %v2558, 7
        %v2560 = vsub.s32 1, %v2559
        %v2561 = vrot.slane %v2534, %v2560
        %v2564 = vmul.f32 %v2551, %v2557
        %v2565 = vmul.f32 %v2552, %v2561
        %v2567 = vlaneseq
        %v2568 = vshrl.u32 %v2567, 7
        %v2569 = vsub.s32 0, %v2568
        %v2570 = vrot.slane %v2536, %v2569
        %v2571 = vlaneseq
        %v2572 = vshrl.u32 %v2571, 7
        %v2573 = vsub.s32 1, %v2572
        %v2574 = vrot.slane %v2536, %v2573
        %v2577 = vadd.f32 %v2564, %v2570
        %v2578 = vadd.f32 %v2565, %v2574
        %s2579 = scalar_lea.vmem %s440, 4 [#allocation14]
        %v2580 = vld [vmem:[%s2579] ss:$8 sm:$0x3]
        %s2581 = scalar_lea.vmem %s440, 5 [#allocation14]
        %v2582 = vld [vmem:[%s2581] ss:$8 sm:$0x3]
        %v2583 = vadd.f32 %v2577, %v2578
        %2584 = vadd.xlane.f32.xlu0 %v2583
        %v2585 = vpop.xlane.xlu0 %2584
        %v2586 = vmul.f32 %v2585, %v1995
        %v2587 = vsub.f32 %v2577, %v2586
        %v2588 = vsub.f32 %v2578, %v2586
        %v2589 = vmul.f32 %v2587, %v2587
        %v2590 = vmul.f32 %v2588, %v2588
        %v2591 = vadd.f32 %v2589, %v2590
        %2592 = vadd.xlane.f32.xlu0 %v2591
        %v2593 = vpop.xlane.xlu0 %2592
        %v2594 = vmul.f32 %v2593, %v1995
        %v2595 = vadd.f32 %v2594, 1e-05
        %v2596 = vrsqrt.pop %v2595
        %v2597 = vmul.f32 %v2587, %v2596
        %v2598 = vmul.f32 %v2588, %v2596
        %v2600 = vlaneseq
        %v2601 = vshrl.u32 %v2600, 7
        %v2602 = vsub.s32 0, %v2601
        %v2603 = vrot.slane %v2580, %v2602
        %v2604 = vlaneseq
        %v2605 = vshrl.u32 %v2604, 7
        %v2606 = vsub.s32 1, %v2605
        %v2607 = vrot.slane %v2580, %v2606
        %v2610 = vmul.f32 %v2597, %v2603
        %v2611 = vmul.f32 %v2598, %v2607
        %v2613 = vlaneseq
        %v2614 = vshrl.u32 %v2613, 7
        %v2615 = vsub.s32 0, %v2614
        %v2616 = vrot.slane %v2582, %v2615
        %v2617 = vlaneseq
        %v2618 = vshrl.u32 %v2617, 7
        %v2619 = vsub.s32 1, %v2618
        %v2620 = vrot.slane %v2582, %v2619
        %v2623 = vadd.f32 %v2610, %v2616
        %v2624 = vadd.f32 %v2611, %v2620
        %v2625 = vpack.c.bf16 %v848, %v848
        %v2626 = vpack.c.bf16 %v849, %v849
        %v2627 = vld [vmem:[%s422 + $0x38] sm:$0xff]
        %v2628 = vld [vmem:[%s422 + $0x40] sm:$0xff]
        %v2629 = vld [vmem:[%s422 + $0x48] sm:$0xff]
        %v2630 = vld [vmem:[%s422 + $0xc0] sm:$0xff]
        %v2631 = vld [vmem:[%s422 + $0xc8] sm:$0xff]
        %v2632 = vld [vmem:[%s422 + $0xd0] sm:$0xff]
        %v2633 = vld [vmem:[%s422 + $0x148] sm:$0xff]
        %v2634 = vld [vmem:[%s422 + $0x150] sm:$0xff]
        %v2635 = vld [vmem:[%s422 + $0x158] sm:$0xff]
        %v2636 = vld [vmem:[%s422 + $0x1d0] sm:$0xff]
        %v2637 = vld [vmem:[%s422 + $0x1d8] sm:$0xff]
        %v2638 = vld [vmem:[%s422 + $0x1e0] sm:$0xff]
        %v2639 = vld [vmem:[%s422 + $0x258] sm:$0xff]
        %v2640 = vld [vmem:[%s422 + $0x260] sm:$0xff]
        %v2641 = vld [vmem:[%s422 + $0x268] sm:$0xff]
        %v2642 = vld [vmem:[%s422 + $0x2e0] sm:$0xff]
        %v2643 = vld [vmem:[%s422 + $0x2e8] sm:$0xff]
        %v2644 = vld [vmem:[%s422 + $0x2f0] sm:$0xff]
        %v2645 = vld [vmem:[%s422 + $0x368] sm:$0xff]
        %v2646 = vld [vmem:[%s422 + $0x370] sm:$0xff]
        %v2647 = vld [vmem:[%s422 + $0x378] sm:$0xff]
        %v2648 = vld [vmem:[%s422 + $0x3f0] sm:$0xff]
        %v2649 = vld [vmem:[%s422 + $0x3f8] sm:$0xff]
        %v2650 = vld [vmem:[%s422 + $0x400] sm:$0xff]
        %v2651 = vld [vmem:[%s422 + $0x478] sm:$0xff]
        %v2652 = vld [vmem:[%s422 + $0x480] sm:$0xff]
        %v2653 = vld [vmem:[%s422 + $0x488] sm:$0xff]
        %v2654 = vld [vmem:[%s422 + $0x500] sm:$0xff]
        %v2655 = vld [vmem:[%s422 + $0x508] sm:$0xff]
        %v2656 = vld [vmem:[%s422 + $0x510] sm:$0xff]
        %v2657 = vld [vmem:[%s422 + $0x588] sm:$0xff]
        %v2658 = vld [vmem:[%s422 + $0x590] sm:$0xff]
        %v2659 = vld [vmem:[%s422 + $0x598] sm:$0xff]
        %v2660 = vld [vmem:[%s422 + $0x610] sm:$0xff]
        %v2661 = vld [vmem:[%s422 + $0x618] sm:$0xff]
        %v2662 = vld [vmem:[%s422 + $0x620] sm:$0xff]
        %v2663 = vld [vmem:[%s422 + $0x698] sm:$0xff]
        %v2664 = vld [vmem:[%s422 + $0x6a0] sm:$0xff]
        %v2665 = vld [vmem:[%s422 + $0x6a8] sm:$0xff]
        %v2666 = vld [vmem:[%s422 + $0x720] sm:$0xff]
        %v2667 = vld [vmem:[%s422 + $0x728] sm:$0xff]
        %v2668 = vld [vmem:[%s422 + $0x730] sm:$0xff]
        %v2669 = vld [vmem:[%s422 + $0x7a8] sm:$0xff]
        %v2670 = vld [vmem:[%s422 + $0x7b0] sm:$0xff]
        %v2671 = vld [vmem:[%s422 + $0x7b8] sm:$0xff]
        %v2672 = vld [vmem:[%s422 + $0x830] sm:$0xff]
        %v2673 = vld [vmem:[%s422 + $0x838] sm:$0xff]
        %v2674 = vld [vmem:[%s422 + $0x840] sm:$0xff]
        %v2675 = vld [vmem:[%s422 + $0x8b8] sm:$0xff]
        %v2676 = vld [vmem:[%s422 + $0x8c0] sm:$0xff]
        %v2677 = vld [vmem:[%s422 + $0x8c8] sm:$0xff]
        %v2678 = vld [vmem:[%s422 + $0x940] sm:$0xff]
        %v2679 = vld [vmem:[%s422 + $0x948] sm:$0xff]
        %v2680 = vld [vmem:[%s422 + $0x950] sm:$0xff]
        %v2681 = vld [vmem:[%s422 + $0x9c8] sm:$0xff]
        %v2682 = vld [vmem:[%s422 + $0x9d0] sm:$0xff]
        %v2683 = vld [vmem:[%s422 + $0x9d8] sm:$0xff]
        %v2684 = vld [vmem:[%s422 + $0xa50] sm:$0xff]
        %v2685 = vld [vmem:[%s422 + $0xa58] sm:$0xff]
        %v2686 = vld [vmem:[%s422 + $0xa60] sm:$0xff]
        %v2687 = vld [vmem:[%s422 + $0xad8] sm:$0xff]
        %v2688 = vld [vmem:[%s422 + $0xae0] sm:$0xff]
        %v2689 = vld [vmem:[%s422 + $0xae8] sm:$0xff]
        %v2690 = vld [vmem:[%s422 + $0xb60] sm:$0xff]
        %v2691 = vld [vmem:[%s422 + $0xb68] sm:$0xff]
        %v2692 = vld [vmem:[%s422 + $0xb70] sm:$0xff]
        %v2693 = vld [vmem:[%s422 + $0xbe8] sm:$0xff]
        %v2694 = vld [vmem:[%s422 + $0xbf0] sm:$0xff]
        %v2695 = vld [vmem:[%s422 + $0xbf8] sm:$0xff]
        %v2696 = vld [vmem:[%s422 + $0xc70] sm:$0xff]
        %v2697 = vld [vmem:[%s422 + $0xc78] sm:$0xff]
        %v2698 = vld [vmem:[%s422 + $0xc80] sm:$0xff]
        %v2699 = vld [vmem:[%s422 + $0xcf8] sm:$0xff]
        %v2700 = vld [vmem:[%s422 + $0xd00] sm:$0xff]
        %v2701 = vld [vmem:[%s422 + $0xd08] sm:$0xff]
        %v2702 = vld [vmem:[%s422 + $0xd80] sm:$0xff]
        %v2703 = vld [vmem:[%s422 + $0xd88] sm:$0xff]
        %v2704 = vld [vmem:[%s422 + $0xd90] sm:$0xff]
        %v2705 = vld [vmem:[%s422 + $0xe08] sm:$0xff]
        %v2706 = vld [vmem:[%s422 + $0xe10] sm:$0xff]
        %v2707 = vld [vmem:[%s422 + $0xe18] sm:$0xff]
        %v2708 = vld [vmem:[%s422 + $0xe90] sm:$0xff]
        %v2709 = vld [vmem:[%s422 + $0xe98] sm:$0xff]
        %v2710 = vld [vmem:[%s422 + $0xea0] sm:$0xff]
        %v2711 = vld [vmem:[%s422 + $0xf18] sm:$0xff]
        %v2712 = vld [vmem:[%s422 + $0xf20] sm:$0xff]
        %v2713 = vld [vmem:[%s422 + $0xf28] sm:$0xff]
        %v2714 = vld [vmem:[%s422 + $0xfa0] sm:$0xff]
        %v2715 = vld [vmem:[%s422 + $0xfa8] sm:$0xff]
        %v2716 = vld [vmem:[%s422 + $0xfb0] sm:$0xff]
        %v2717 = vld [vmem:[%s422 + $0x1028] sm:$0xff]
        %v2718 = vld [vmem:[%s422 + $0x1030] sm:$0xff]
        %v2719 = vld [vmem:[%s422 + $0x1038] sm:$0xff]
        %v2720 = vld [vmem:[%s422 + $0x10b0] sm:$0xff]
        %v2721 = vld [vmem:[%s422 + $0x10b8] sm:$0xff]
        %v2722 = vld [vmem:[%s422 + $0x10c0] sm:$0xff]
        %v2723 = vld [vmem:[%s431 + $0xe] sm:$0x3f]
        %v2725 = vlaneseq
        %v2726 = vshrl.u32 %v2725, 7
        %v2727 = vsub.s32 0, %v2726
        %v2728 = vrot.slane %v2723, %v2727
        %v2729 = vlaneseq
        %v2730 = vshrl.u32 %v2729, 7
        %v2731 = vsub.s32 1, %v2730
        %v2732 = vrot.slane %v2723, %v2731
        %v2733 = vlaneseq
        %v2734 = vshrl.u32 %v2733, 7
        %v2735 = vsub.s32 2, %v2734
        %v2736 = vrot.slane %v2723, %v2735
        %v2737 = vlaneseq
        %v2738 = vshrl.u32 %v2737, 7
        %v2739 = vsub.s32 3, %v2738
        %v2740 = vrot.slane %v2723, %v2739
        %v2741 = vlaneseq
        %v2742 = vshrl.u32 %v2741, 7
        %v2743 = vsub.s32 4, %v2742
        %v2744 = vrot.slane %v2723, %v2743
        %v2745 = vlaneseq
        %v2746 = vshrl.u32 %v2745, 7
        %v2747 = vsub.s32 5, %v2746
        %v2748 = vrot.slane %v2723, %v2747
        %v2851 = vunpack.c.l.b16 %v2627
        %v2852 = vunpack.c.h.b16 %v2627
        %v2853 = vunpack.c.l.b16 %v2628
        %v2854 = vunpack.c.h.b16 %v2628
        %v2855 = vunpack.c.l.b16 %v2629
        %v2856 = vunpack.c.h.b16 %v2629
        %v2857 = vunpack.c.l.b16 %v2630
        %v2858 = vunpack.c.h.b16 %v2630
        %v2859 = vunpack.c.l.b16 %v2631
        %v2860 = vunpack.c.h.b16 %v2631
        %v2861 = vunpack.c.l.b16 %v2632
        %v2862 = vunpack.c.h.b16 %v2632
        %v2863 = vunpack.c.l.b16 %v2633
        %v2864 = vunpack.c.h.b16 %v2633
        %v2865 = vunpack.c.l.b16 %v2634
        %v2866 = vunpack.c.h.b16 %v2634
        %v2867 = vunpack.c.l.b16 %v2635
        %v2868 = vunpack.c.h.b16 %v2635
        %v2869 = vunpack.c.l.b16 %v2636
        %v2870 = vunpack.c.h.b16 %v2636
        %v2871 = vunpack.c.l.b16 %v2637
        %v2872 = vunpack.c.h.b16 %v2637
        %v2873 = vunpack.c.l.b16 %v2638
        %v2874 = vunpack.c.h.b16 %v2638
        %v2875 = vunpack.c.l.b16 %v2639
        %v2876 = vunpack.c.h.b16 %v2639
        %v2877 = vunpack.c.l.b16 %v2640
        %v2878 = vunpack.c.h.b16 %v2640
        %v2879 = vunpack.c.l.b16 %v2641
        %v2880 = vunpack.c.h.b16 %v2641
        %v2881 = vunpack.c.l.b16 %v2642
        %v2882 = vunpack.c.h.b16 %v2642
        %v2883 = vunpack.c.l.b16 %v2643
        %v2884 = vunpack.c.h.b16 %v2643
        %v2885 = vunpack.c.l.b16 %v2644
        %v2886 = vunpack.c.h.b16 %v2644
        %v2887 = vunpack.c.l.b16 %v2645
        %v2888 = vunpack.c.h.b16 %v2645
        %v2889 = vunpack.c.l.b16 %v2646
        %v2890 = vunpack.c.h.b16 %v2646
        %v2891 = vunpack.c.l.b16 %v2647
        %v2892 = vunpack.c.h.b16 %v2647
        %v2893 = vunpack.c.l.b16 %v2648
        %v2894 = vunpack.c.h.b16 %v2648
        %v2895 = vunpack.c.l.b16 %v2649
        %v2896 = vunpack.c.h.b16 %v2649
        %v2897 = vunpack.c.l.b16 %v2650
        %v2898 = vunpack.c.h.b16 %v2650
        %v2899 = vunpack.c.l.b16 %v2651
        %v2900 = vunpack.c.h.b16 %v2651
        %v2901 = vunpack.c.l.b16 %v2652
        %v2902 = vunpack.c.h.b16 %v2652
        %v2903 = vunpack.c.l.b16 %v2653
        %v2904 = vunpack.c.h.b16 %v2653
        %v2905 = vunpack.c.l.b16 %v2654
        %v2906 = vunpack.c.h.b16 %v2654
        %v2907 = vunpack.c.l.b16 %v2655
        %v2908 = vunpack.c.h.b16 %v2655
        %v2909 = vunpack.c.l.b16 %v2656
        %v2910 = vunpack.c.h.b16 %v2656
        %v2911 = vunpack.c.l.b16 %v2657
        %v2912 = vunpack.c.h.b16 %v2657
        %v2913 = vunpack.c.l.b16 %v2658
        %v2914 = vunpack.c.h.b16 %v2658
        %v2915 = vunpack.c.l.b16 %v2659
        %v2916 = vunpack.c.h.b16 %v2659
        %v2917 = vunpack.c.l.b16 %v2660
        %v2918 = vunpack.c.h.b16 %v2660
        %v2919 = vunpack.c.l.b16 %v2661
        %v2920 = vunpack.c.h.b16 %v2661
        %v2921 = vunpack.c.l.b16 %v2662
        %v2922 = vunpack.c.h.b16 %v2662
        %v2923 = vunpack.c.l.b16 %v2663
        %v2924 = vunpack.c.h.b16 %v2663
        %v2925 = vunpack.c.l.b16 %v2664
        %v2926 = vunpack.c.h.b16 %v2664
        %v2927 = vunpack.c.l.b16 %v2665
        %v2928 = vunpack.c.h.b16 %v2665
        %v2929 = vunpack.c.l.b16 %v2666
        %v2930 = vunpack.c.h.b16 %v2666
        %v2931 = vunpack.c.l.b16 %v2667
        %v2932 = vunpack.c.h.b16 %v2667
        %v2933 = vunpack.c.l.b16 %v2668
        %v2934 = vunpack.c.h.b16 %v2668
        %v2935 = vunpack.c.l.b16 %v2669
        %v2936 = vunpack.c.h.b16 %v2669
        %v2937 = vunpack.c.l.b16 %v2670
        %v2938 = vunpack.c.h.b16 %v2670
        %v2939 = vunpack.c.l.b16 %v2671
        %v2940 = vunpack.c.h.b16 %v2671
        %v2941 = vunpack.c.l.b16 %v2672
        %v2942 = vunpack.c.h.b16 %v2672
        %v2943 = vunpack.c.l.b16 %v2673
        %v2944 = vunpack.c.h.b16 %v2673
        %v2945 = vunpack.c.l.b16 %v2674
        %v2946 = vunpack.c.h.b16 %v2674
        %v2947 = vunpack.c.l.b16 %v2675
        %v2948 = vunpack.c.h.b16 %v2675
        %v2949 = vunpack.c.l.b16 %v2676
        %v2950 = vunpack.c.h.b16 %v2676
        %v2951 = vunpack.c.l.b16 %v2677
        %v2952 = vunpack.c.h.b16 %v2677
        %v2953 = vunpack.c.l.b16 %v2678
        %v2954 = vunpack.c.h.b16 %v2678
        %v2955 = vunpack.c.l.b16 %v2679
        %v2956 = vunpack.c.h.b16 %v2679
        %v2957 = vunpack.c.l.b16 %v2680
        %v2958 = vunpack.c.h.b16 %v2680
        %v2959 = vunpack.c.l.b16 %v2681
        %v2960 = vunpack.c.h.b16 %v2681
        %v2961 = vunpack.c.l.b16 %v2682
        %v2962 = vunpack.c.h.b16 %v2682
        %v2963 = vunpack.c.l.b16 %v2683
        %v2964 = vunpack.c.h.b16 %v2683
        %v2965 = vunpack.c.l.b16 %v2684
        %v2966 = vunpack.c.h.b16 %v2684
        %v2967 = vunpack.c.l.b16 %v2685
        %v2968 = vunpack.c.h.b16 %v2685
        %v2969 = vunpack.c.l.b16 %v2686
        %v2970 = vunpack.c.h.b16 %v2686
        %v2971 = vunpack.c.l.b16 %v2687
        %v2972 = vunpack.c.h.b16 %v2687
        %v2973 = vunpack.c.l.b16 %v2688
        %v2974 = vunpack.c.h.b16 %v2688
        %v2975 = vunpack.c.l.b16 %v2689
        %v2976 = vunpack.c.h.b16 %v2689
        %v2977 = vunpack.c.l.b16 %v2690
        %v2978 = vunpack.c.h.b16 %v2690
        %v2979 = vunpack.c.l.b16 %v2691
        %v2980 = vunpack.c.h.b16 %v2691
        %v2981 = vunpack.c.l.b16 %v2692
        %v2982 = vunpack.c.h.b16 %v2692
        %v2983 = vunpack.c.l.b16 %v2693
        %v2984 = vunpack.c.h.b16 %v2693
        %v2985 = vunpack.c.l.b16 %v2694
        %v2986 = vunpack.c.h.b16 %v2694
        %v2987 = vunpack.c.l.b16 %v2695
        %v2988 = vunpack.c.h.b16 %v2695
        %v2989 = vunpack.c.l.b16 %v2696
        %v2990 = vunpack.c.h.b16 %v2696
        %v2991 = vunpack.c.l.b16 %v2697
        %v2992 = vunpack.c.h.b16 %v2697
        %v2993 = vunpack.c.l.b16 %v2698
        %v2994 = vunpack.c.h.b16 %v2698
        %v2995 = vunpack.c.l.b16 %v2699
        %v2996 = vunpack.c.h.b16 %v2699
        %v2997 = vunpack.c.l.b16 %v2700
        %v2998 = vunpack.c.h.b16 %v2700
        %v2999 = vunpack.c.l.b16 %v2701
        %v3000 = vunpack.c.h.b16 %v2701
        %v3001 = vunpack.c.l.b16 %v2702
        %v3002 = vunpack.c.h.b16 %v2702
        %v3003 = vunpack.c.l.b16 %v2703
        %v3004 = vunpack.c.h.b16 %v2703
        %v3005 = vunpack.c.l.b16 %v2704
        %v3006 = vunpack.c.h.b16 %v2704
        %v3007 = vunpack.c.l.b16 %v2705
        %v3008 = vunpack.c.h.b16 %v2705
        %v3009 = vunpack.c.l.b16 %v2706
        %v3010 = vunpack.c.h.b16 %v2706
        %v3011 = vunpack.c.l.b16 %v2707
        %v3012 = vunpack.c.h.b16 %v2707
        %v3013 = vunpack.c.l.b16 %v2708
        %v3014 = vunpack.c.h.b16 %v2708
        %v3015 = vunpack.c.l.b16 %v2709
        %v3016 = vunpack.c.h.b16 %v2709
        %v3017 = vunpack.c.l.b16 %v2710
        %v3018 = vunpack.c.h.b16 %v2710
        %v3019 = vunpack.c.l.b16 %v2711
        %v3020 = vunpack.c.h.b16 %v2711
        %v3021 = vunpack.c.l.b16 %v2712
        %v3022 = vunpack.c.h.b16 %v2712
        %v3023 = vunpack.c.l.b16 %v2713
        %v3024 = vunpack.c.h.b16 %v2713
        %v3025 = vunpack.c.l.b16 %v2714
        %v3026 = vunpack.c.h.b16 %v2714
        %v3027 = vunpack.c.l.b16 %v2715
        %v3028 = vunpack.c.h.b16 %v2715
        %v3029 = vunpack.c.l.b16 %v2716
        %v3030 = vunpack.c.h.b16 %v2716
        %v3031 = vunpack.c.l.b16 %v2717
        %v3032 = vunpack.c.h.b16 %v2717
        %v3033 = vunpack.c.l.b16 %v2718
        %v3034 = vunpack.c.h.b16 %v2718
        %v3035 = vunpack.c.l.b16 %v2719
        %v3036 = vunpack.c.h.b16 %v2719
        %v3037 = vunpack.c.l.b16 %v2720
        %v3038 = vunpack.c.h.b16 %v2720
        %v3039 = vunpack.c.l.b16 %v2721
        %v3040 = vunpack.c.h.b16 %v2721
        %v3041 = vunpack.c.l.b16 %v2722
        %v3042 = vunpack.c.h.b16 %v2722
        %v3043 = vpack.c.b16 %v2857, %v2851
        %v3044 = vpack.c.b16 %v2858, %v2852
        %v3045 = vpack.c.b16 %v2859, %v2853
        %v3046 = vpack.c.b16 %v2860, %v2854
        %v3047 = vpack.c.b16 %v2861, %v2855
        %v3048 = vpack.c.b16 %v2862, %v2856
        %v3049 = vpack.c.b16 %v2869, %v2863
        %v3050 = vpack.c.b16 %v2870, %v2864
        %v3051 = vpack.c.b16 %v2871, %v2865
        %v3052 = vpack.c.b16 %v2872, %v2866
        %v3053 = vpack.c.b16 %v2873, %v2867
        %v3054 = vpack.c.b16 %v2874, %v2868
        %v3055 = vpack.c.b16 %v2881, %v2875
        %v3056 = vpack.c.b16 %v2882, %v2876
        %v3057 = vpack.c.b16 %v2883, %v2877
        %v3058 = vpack.c.b16 %v2884, %v2878
        %v3059 = vpack.c.b16 %v2885, %v2879
        %v3060 = vpack.c.b16 %v2886, %v2880
        %v3061 = vpack.c.b16 %v2893, %v2887
        %v3062 = vpack.c.b16 %v2894, %v2888
        %v3063 = vpack.c.b16 %v2895, %v2889
        %v3064 = vpack.c.b16 %v2896, %v2890
        %v3065 = vpack.c.b16 %v2897, %v2891
        %v3066 = vpack.c.b16 %v2898, %v2892
        %v3067 = vpack.c.b16 %v2905, %v2899
        %v3068 = vpack.c.b16 %v2906, %v2900
        %v3069 = vpack.c.b16 %v2907, %v2901
        %v3070 = vpack.c.b16 %v2908, %v2902
        %v3071 = vpack.c.b16 %v2909, %v2903
        %v3072 = vpack.c.b16 %v2910, %v2904
        %v3073 = vpack.c.b16 %v2917, %v2911
        %v3074 = vpack.c.b16 %v2918, %v2912
        %v3075 = vpack.c.b16 %v2919, %v2913
        %v3076 = vpack.c.b16 %v2920, %v2914
        %v3077 = vpack.c.b16 %v2921, %v2915
        %v3078 = vpack.c.b16 %v2922, %v2916
        %v3079 = vpack.c.b16 %v2929, %v2923
        %v3080 = vpack.c.b16 %v2930, %v2924
        %v3081 = vpack.c.b16 %v2931, %v2925
        %v3082 = vpack.c.b16 %v2932, %v2926
        %v3083 = vpack.c.b16 %v2933, %v2927
        %v3084 = vpack.c.b16 %v2934, %v2928
        %v3085 = vpack.c.b16 %v2941, %v2935
        %v3086 = vpack.c.b16 %v2942, %v2936
        %v3087 = vpack.c.b16 %v2943, %v2937
        %v3088 = vpack.c.b16 %v2944, %v2938
        %v3089 = vpack.c.b16 %v2945, %v2939
        %v3090 = vpack.c.b16 %v2946, %v2940
        %v3091 = vpack.c.b16 %v2953, %v2947
        %v3092 = vpack.c.b16 %v2954, %v2948
        %v3093 = vpack.c.b16 %v2955, %v2949
        %v3094 = vpack.c.b16 %v2956, %v2950
        %v3095 = vpack.c.b16 %v2957, %v2951
        %v3096 = vpack.c.b16 %v2958, %v2952
        %v3097 = vpack.c.b16 %v2965, %v2959
        %v3098 = vpack.c.b16 %v2966, %v2960
        %v3099 = vpack.c.b16 %v2967, %v2961
        %v3100 = vpack.c.b16 %v2968, %v2962
        %v3101 = vpack.c.b16 %v2969, %v2963
        %v3102 = vpack.c.b16 %v2970, %v2964
        %v3103 = vpack.c.b16 %v2977, %v2971
        %v3104 = vpack.c.b16 %v2978, %v2972
        %v3105 = vpack.c.b16 %v2979, %v2973
        %v3106 = vpack.c.b16 %v2980, %v2974
        %v3107 = vpack.c.b16 %v2981, %v2975
        %v3108 = vpack.c.b16 %v2982, %v2976
        %v3109 = vpack.c.b16 %v2989, %v2983
        %v3110 = vpack.c.b16 %v2990, %v2984
        %v3111 = vpack.c.b16 %v2991, %v2985
        %v3112 = vpack.c.b16 %v2992, %v2986
        %v3113 = vpack.c.b16 %v2993, %v2987
        %v3114 = vpack.c.b16 %v2994, %v2988
        %v3115 = vpack.c.b16 %v3001, %v2995
        %v3116 = vpack.c.b16 %v3002, %v2996
        %v3117 = vpack.c.b16 %v3003, %v2997
        %v3118 = vpack.c.b16 %v3004, %v2998
        %v3119 = vpack.c.b16 %v3005, %v2999
        %v3120 = vpack.c.b16 %v3006, %v3000
        %v3121 = vpack.c.b16 %v3013, %v3007
        %v3122 = vpack.c.b16 %v3014, %v3008
        %v3123 = vpack.c.b16 %v3015, %v3009
        %v3124 = vpack.c.b16 %v3016, %v3010
        %v3125 = vpack.c.b16 %v3017, %v3011
        %v3126 = vpack.c.b16 %v3018, %v3012
        %v3127 = vpack.c.b16 %v3025, %v3019
        %v3128 = vpack.c.b16 %v3026, %v3020
        %v3129 = vpack.c.b16 %v3027, %v3021
        %v3130 = vpack.c.b16 %v3028, %v3022
        %v3131 = vpack.c.b16 %v3029, %v3023
        %v3132 = vpack.c.b16 %v3030, %v3024
        %v3133 = vpack.c.b16 %v3037, %v3031
        %v3134 = vpack.c.b16 %v3038, %v3032
        %v3135 = vpack.c.b16 %v3039, %v3033
        %v3136 = vpack.c.b16 %v3040, %v3034
        %v3137 = vpack.c.b16 %v3041, %v3035
        %v3138 = vpack.c.b16 %v3042, %v3036
        %3235 = vmatprep.subr.bf16.mxu0 %v3086
        %3236 = vmatpush1.bf16.msra.mxu0 %v3085
        %3237 = vmatprep.subr.bf16.mxu0 %v3080
        %3238 = vmatpush1.bf16.msra.mxu0 %v3079
        %3239 = vmatprep.subr.bf16.mxu0 %v3074
        %3240 = vmatpush1.bf16.msra.mxu0 %v3073
        %3241 = vmatprep.subr.bf16.mxu0 %v3068
        %3242 = vmatpush1.bf16.msra.mxu0 %v3067
        %3243 = vmatprep.subr.bf16.mxu0 %v3062
        %3244 = vmatpush1.bf16.msra.mxu0 %v3061
        %3245 = vmatprep.subr.bf16.mxu0 %v3056
        %3246 = vmatpush1.bf16.msra.mxu0 %v3055
        %3247 = vmatprep.subr.bf16.mxu0 %v3050
        %3248 = vmatpush1.bf16.msra.mxu0 %v3049
        %3249 = vmatprep.subr.bf16.mxu0 %v3044
        %3250 = vmatpush1.bf16.msra.mxu0 %v3043
        %3251 = vmatprep.subr.bf16.mxu0 %v3134
        %3252 = vmatpush2.bf16.msra.mxu0 %v3133
        %3253 = vmatprep.subr.bf16.mxu0 %v3128
        %3254 = vmatpush2.bf16.msra.mxu0 %v3127
        %3255 = vmatprep.subr.bf16.mxu0 %v3122
        %3256 = vmatpush2.bf16.msra.mxu0 %v3121
        %3257 = vmatprep.subr.bf16.mxu0 %v3116
        %3258 = vmatpush2.bf16.msra.mxu0 %v3115
        %3259 = vmatprep.subr.bf16.mxu0 %v3110
        %3260 = vmatpush2.bf16.msra.mxu0 %v3109
        %3261 = vmatprep.subr.bf16.mxu0 %v3104
        %3262 = vmatpush2.bf16.msra.mxu0 %v3103
        %3263 = vmatprep.subr.bf16.mxu0 %v3098
        %3264 = vmatpush2.bf16.msra.mxu0 %v3097
        %3265 = vmatprep.subr.bf16.mxu0 %v3092
        %3266 = vmatpush2.bf16.msra.mxu0 %v3091
        %3267 = vmatprep.mubr.bf16.mxu0 %v2626
        %3268 = vmatmul.mubr.bf16.gmra.mxu0 %v2625
        %v3269 = vpop.f32.mrf.mxu0
        %v3270 = vadd.f32 %v2728, %v3269
        %v3271 = vpop.f32.mrf.mxu0
        %v3272 = vadd.f32 %v2732, %v3271
        %v3273 = vpop.f32.mrf.mxu0
        %v3274 = vpop.f32.mrf.mxu0
        %3275 = vdwg.mxu0
        %3276 = vmatprep.subr.bf16.mxu0 %v3088
        %3277 = vmatpush1.bf16.msra.mxu0 %v3087
        %3278 = vmatprep.subr.bf16.mxu0 %v3082
        %3279 = vmatpush1.bf16.msra.mxu0 %v3081
        %3280 = vmatprep.subr.bf16.mxu0 %v3076
        %3281 = vmatpush1.bf16.msra.mxu0 %v3075
        %3282 = vmatprep.subr.bf16.mxu0 %v3070
        %3283 = vmatpush1.bf16.msra.mxu0 %v3069
        %3284 = vmatprep.subr.bf16.mxu0 %v3064
        %3285 = vmatpush1.bf16.msra.mxu0 %v3063
        %3286 = vmatprep.subr.bf16.mxu0 %v3058
        %3287 = vmatpush1.bf16.msra.mxu0 %v3057
        %3288 = vmatprep.subr.bf16.mxu0 %v3052
        %3289 = vmatpush1.bf16.msra.mxu0 %v3051
        %3290 = vmatprep.subr.bf16.mxu0 %v3046
        %3291 = vmatpush1.bf16.msra.mxu0 %v3045
        %3292 = vmatprep.subr.bf16.mxu0 %v3136
        %3293 = vmatpush2.bf16.msra.mxu0 %v3135
        %3294 = vmatprep.subr.bf16.mxu0 %v3130
        %3295 = vmatpush2.bf16.msra.mxu0 %v3129
        %3296 = vmatprep.subr.bf16.mxu0 %v3124
        %3297 = vmatpush2.bf16.msra.mxu0 %v3123
        %3298 = vmatprep.subr.bf16.mxu0 %v3118
        %3299 = vmatpush2.bf16.msra.mxu0 %v3117
        %3300 = vmatprep.subr.bf16.mxu0 %v3112
        %3301 = vmatpush2.bf16.msra.mxu0 %v3111
        %3302 = vmatprep.subr.bf16.mxu0 %v3106
        %3303 = vmatpush2.bf16.msra.mxu0 %v3105
        %3304 = vmatprep.subr.bf16.mxu0 %v3100
        %3305 = vmatpush2.bf16.msra.mxu0 %v3099
        %3306 = vmatprep.subr.bf16.mxu0 %v3094
        %3307 = vmatpush2.bf16.msra.mxu0 %v3093
        %3308 = vmatprep.mubr.bf16.mxu0 %v2626
        %3309 = vmatmul.mubr.bf16.gmra.mxu0 %v2625
        %v3310 = vpop.f32.mrf.mxu0
        %v3311 = vadd.f32 %v2736, %v3310
        %v3312 = vpop.f32.mrf.mxu0
        %v3313 = vadd.f32 %v2740, %v3312
        %v3314 = vpop.f32.mrf.mxu0
        %v3315 = vpop.f32.mrf.mxu0
        %3316 = vdwg.mxu0
        %3317 = vmatprep.subr.bf16.mxu0 %v3090
        %3318 = vmatpush1.bf16.msra.mxu0 %v3089
        %3319 = vmatprep.subr.bf16.mxu0 %v3084
        %3320 = vmatpush1.bf16.msra.mxu0 %v3083
        %3321 = vmatprep.subr.bf16.mxu0 %v3078
        %3322 = vmatpush1.bf16.msra.mxu0 %v3077
        %3323 = vmatprep.subr.bf16.mxu0 %v3072
        %3324 = vmatpush1.bf16.msra.mxu0 %v3071
        %3325 = vmatprep.subr.bf16.mxu0 %v3066
        %3326 = vmatpush1.bf16.msra.mxu0 %v3065
        %3327 = vmatprep.subr.bf16.mxu0 %v3060
        %3328 = vmatpush1.bf16.msra.mxu0 %v3059
        %3329 = vmatprep.subr.bf16.mxu0 %v3054
        %3330 = vmatpush1.bf16.msra.mxu0 %v3053
        %3331 = vmatprep.subr.bf16.mxu0 %v3048
        %3332 = vmatpush1.bf16.msra.mxu0 %v3047
        %3333 = vmatprep.subr.bf16.mxu0 %v3138
        %3334 = vmatpush2.bf16.msra.mxu0 %v3137
        %3335 = vmatprep.subr.bf16.mxu0 %v3132
        %3336 = vmatpush2.bf16.msra.mxu0 %v3131
        %3337 = vmatprep.subr.bf16.mxu0 %v3126
        %3338 = vmatpush2.bf16.msra.mxu0 %v3125
        %3339 = vmatprep.subr.bf16.mxu0 %v3120
        %3340 = vmatpush2.bf16.msra.mxu0 %v3119
        %3341 = vmatprep.subr.bf16.mxu0 %v3114
        %3342 = vmatpush2.bf16.msra.mxu0 %v3113
        %3343 = vmatprep.subr.bf16.mxu0 %v3108
        %3344 = vmatpush2.bf16.msra.mxu0 %v3107
        %3345 = vmatprep.subr.bf16.mxu0 %v3102
        %3346 = vmatpush2.bf16.msra.mxu0 %v3101
        %3347 = vmatprep.subr.bf16.mxu0 %v3096
        %3348 = vmatpush2.bf16.msra.mxu0 %v3095
        %3349 = vmatprep.mubr.bf16.mxu0 %v2626
        %3350 = vmatmul.mubr.bf16.gmra.mxu0 %v2625
        %v3351 = vpop.f32.mrf.mxu0
        %v3352 = vadd.f32 %v2744, %v3351
        %v3353 = vpop.f32.mrf.mxu0
        %v3354 = vadd.f32 %v2748, %v3353
        %v3355 = vpop.f32.mrf.mxu0
        %v3356 = vpop.f32.mrf.mxu0
        %3357 = vdwg.mxu0
        %3358 = vmatprep.subr.mxu0 0.0
        %3359 = vmatpush1.xpose.msra.mxu0 0.0
        %3360 = vmatprep.subr.mxu0 0.0
        %3361 = vmatpush1.xpose.msra.mxu0 0.0
        %3362 = vmatprep.subr.mxu0 0.0
        %3363 = vmatpush1.xpose.msra.mxu0 0.0
        %3364 = vmatprep.subr.mxu0 0.0
        %3365 = vmatpush1.xpose.msra.mxu0 0.0
        %3366 = vmatprep.subr.mxu0 0.0
        %3367 = vmatpush1.xpose.msra.mxu0 0.0
        %3368 = vmatprep.subr.mxu0 0.0
        %3369 = vmatpush1.xpose.msra.mxu0 0.0
        %3370 = vmatprep.subr.mxu0 0.0
        %3371 = vmatpush1.xpose.msra.mxu0 0.0
        %3372 = vmatprep.subr.mxu0 0.0
        %3373 = vmatpush1.xpose.msra.mxu0 0.0
        %3374 = vmatprep.subr.mxu0 0.0
        %3375 = vmatpush1.xpose.msra.mxu0 0.0
        %3376 = vmatprep.subr.mxu0 0.0
        %3377 = vmatpush1.xpose.msra.mxu0 0.0
        %3378 = vmatprep.subr.mxu0 0.0
        %3379 = vmatpush1.xpose.msra.mxu0 0.0
        %3380 = vmatprep.subr.mxu0 0.0
        %3381 = vmatpush1.xpose.msra.mxu0 0.0
        %3382 = vmatprep.subr.mxu0 0.0
        %3383 = vmatpush1.xpose.msra.mxu0 0.0
        %3384 = vmatprep.subr.mxu0 0.0
        %3385 = vmatpush1.xpose.msra.mxu0 0.0
        %3386 = vmatprep.subr.mxu0 0.0
        %3387 = vmatpush1.xpose.msra.mxu0 0.0
        %3388 = vmatprep.subr.mxu0 %v3313
        %3389 = vmatpush1.xpose.msra.mxu0 %v3311
        %3390 = vmatprep.subr.mxu0 0.0
        %3391 = vmatpush2.xpose.msra.mxu0 0.0
        %3392 = vmatprep.subr.mxu0 0.0
        %3393 = vmatpush2.xpose.msra.mxu0 0.0
        %3394 = vmatprep.subr.mxu0 0.0
        %3395 = vmatpush2.xpose.msra.mxu0 0.0
        %3396 = vmatprep.subr.mxu0 0.0
        %3397 = vmatpush2.xpose.msra.mxu0 0.0
        %3398 = vmatprep.subr.mxu0 0.0
        %3399 = vmatpush2.xpose.msra.mxu0 0.0
        %3400 = vmatprep.subr.mxu0 0.0
        %3401 = vmatpush2.xpose.msra.mxu0 0.0
        %3402 = vmatprep.subr.mxu0 0.0
        %3403 = vmatpush2.xpose.msra.mxu0 0.0
        %3404 = vmatprep.subr.mxu0 0.0
        %3405 = vmatpush2.xpose.msra.mxu0 0.0
        %3406 = vmatprep.subr.mxu0 0.0
        %3407 = vmatpush2.xpose.msra.mxu0 0.0
        %3408 = vmatprep.subr.mxu0 0.0
        %3409 = vmatpush2.xpose.msra.mxu0 0.0
        %3410 = vmatprep.subr.mxu0 0.0
        %3411 = vmatpush2.xpose.msra.mxu0 0.0
        %3412 = vmatprep.subr.mxu0 0.0
        %3413 = vmatpush2.xpose.msra.mxu0 0.0
        %3414 = vmatprep.subr.mxu0 0.0
        %3415 = vmatpush2.xpose.msra.mxu0 0.0
        %3416 = vmatprep.subr.mxu0 0.0
        %3417 = vmatpush2.xpose.msra.mxu0 0.0
        %3418 = vmatprep.subr.mxu0 0.0
        %3419 = vmatpush2.xpose.msra.mxu0 0.0
        %3420 = vmatprep.subr.mxu0 0.0
        %3421 = vmatpush2.xpose.msra.mxu0 0.0
        %3422 = vmatprep.mubr.f32.mxu0 %v3272
        %3423 = vmatmul.mubr.f32.gmra.mxu0 %v3270
        %v3424 = vpop.f32.mrf.mxu0
        %v3425 = vadd.f32 0.0, %v3424
        %v3426 = vpop.f32.mrf.mxu0
        %3427 = vdwg.mxu0
        %v3428 = vsel %vm1653, %v3425, -inf
        %3429 = vmax.xlane.f32.xlu0 %v3428
        %v3430 = vpop.xlane.xlu0 %3429
        %v3431 = vsub.f32 %v3425, %v3430
        %v3432 = vmul.f32 %v3431, 1.442695
        %v3433 = vpow.pop %v3432
        %v3435 = vsel %vm1653, %v3433, 0
        %3437 = vmatprep.subr.mxu0 0.0
        %3438 = vmatpush1.msra.mxu0 0.0
        %3439 = vmatprep.subr.mxu0 0.0
        %3440 = vmatpush1.msra.mxu0 0.0
        %3441 = vmatprep.subr.mxu0 0.0
        %3442 = vmatpush1.msra.mxu0 0.0
        %3443 = vmatprep.subr.mxu0 0.0
        %3444 = vmatpush1.msra.mxu0 0.0
        %3445 = vmatprep.subr.mxu0 0.0
        %3446 = vmatpush1.msra.mxu0 0.0
        %3447 = vmatprep.subr.mxu0 0.0
        %3448 = vmatpush1.msra.mxu0 0.0
        %3449 = vmatprep.subr.mxu0 0.0
        %3450 = vmatpush1.msra.mxu0 0.0
        %3451 = vmatprep.subr.mxu0 0.0
        %3452 = vmatpush1.msra.mxu0 0.0
        %3453 = vmatprep.subr.mxu0 0.0
        %3454 = vmatpush1.msra.mxu0 0.0
        %3455 = vmatprep.subr.mxu0 0.0
        %3456 = vmatpush1.msra.mxu0 0.0
        %3457 = vmatprep.subr.mxu0 0.0
        %3458 = vmatpush1.msra.mxu0 0.0
        %3459 = vmatprep.subr.mxu0 0.0
        %3460 = vmatpush1.msra.mxu0 0.0
        %3461 = vmatprep.subr.mxu0 0.0
        %3462 = vmatpush1.msra.mxu0 0.0
        %3463 = vmatprep.subr.mxu0 0.0
        %3464 = vmatpush1.msra.mxu0 0.0
        %3465 = vmatprep.subr.mxu0 0.0
        %3466 = vmatpush1.msra.mxu0 0.0
        %3467 = vmatprep.subr.mxu0 %v3354
        %3468 = vmatpush1.msra.mxu0 %v3352
        %3469 = vmatprep.subr.mxu0 0.0
        %3470 = vmatpush2.msra.mxu0 0.0
        %3471 = vmatprep.subr.mxu0 0.0
        %3472 = vmatpush2.msra.mxu0 0.0
        %3473 = vmatprep.subr.mxu0 0.0
        %3474 = vmatpush2.msra.mxu0 0.0
        %3475 = vmatprep.subr.mxu0 0.0
        %3476 = vmatpush2.msra.mxu0 0.0
        %3477 = vmatprep.subr.mxu0 0.0
        %3478 = vmatpush2.msra.mxu0 0.0
        %3479 = vmatprep.subr.mxu0 0.0
        %3480 = vmatpush2.msra.mxu0 0.0
        %3481 = vmatprep.subr.mxu0 0.0
        %3482 = vmatpush2.msra.mxu0 0.0
        %3483 = vmatprep.subr.mxu0 0.0
        %3484 = vmatpush2.msra.mxu0 0.0
        %3485 = vmatprep.subr.mxu0 0.0
        %3486 = vmatpush2.msra.mxu0 0.0
        %3487 = vmatprep.subr.mxu0 0.0
        %3488 = vmatpush2.msra.mxu0 0.0
        %3489 = vmatprep.subr.mxu0 0.0
        %3490 = vmatpush2.msra.mxu0 0.0
        %3491 = vmatprep.subr.mxu0 0.0
        %3492 = vmatpush2.msra.mxu0 0.0
        %3493 = vmatprep.subr.mxu0 0.0
        %3494 = vmatpush2.msra.mxu0 0.0
        %3495 = vmatprep.subr.mxu0 0.0
        %3496 = vmatpush2.msra.mxu0 0.0
        %3497 = vmatprep.subr.mxu0 0.0
        %3498 = vmatpush2.msra.mxu0 0.0
        %3499 = vmatprep.subr.mxu0 0.0
        %3500 = vmatpush2.msra.mxu0 0.0
        %3501 = vmatprep.mubr.f32.mxu0 0.0
        %3502 = vmatmul.mubr.f32.gmra.mxu0 %v3435
        %v3503 = vpop.f32.mrf.mxu0
        %v3504 = vadd.f32 0.0, %v3503
        %v3505 = vpop.f32.mrf.mxu0
        %v3506 = vadd.f32 0.0, %v3505
        %3507 = vdwg.mxu0
        %v3508 = vsel %vm1653, %v3433, 0.0
        %3509 = vadd.xlane.f32.xlu0 %v3508
        %v3510 = vpop.xlane.xlu0 %3509
        %v3511 = vrcp.pop %v3510
        %v3512 = vmul.f32 %v3504, %v3511
        %v3513 = vmul.f32 %v3506, %v3511
        %v3514 = vpack.c.bf16 %v3512, %v3512
        %v3515 = vpack.c.bf16 %v3513, %v3513
        %v3516 = vld [vmem:[%s422 + $0x50] sm:$0xff]
        %v3517 = vld [vmem:[%s422 + $0xd8] sm:$0xff]
        %v3518 = vld [vmem:[%s422 + $0x160] sm:$0xff]
        %v3519 = vld [vmem:[%s422 + $0x1e8] sm:$0xff]
        %v3520 = vld [vmem:[%s422 + $0x270] sm:$0xff]
        %v3521 = vld [vmem:[%s422 + $0x2f8] sm:$0xff]
        %v3522 = vld [vmem:[%s422 + $0x380] sm:$0xff]
        %v3523 = vld [vmem:[%s422 + $0x408] sm:$0xff]
        %v3524 = vld [vmem:[%s422 + $0x490] sm:$0xff]
        %v3525 = vld [vmem:[%s422 + $0x518] sm:$0xff]
        %v3526 = vld [vmem:[%s422 + $0x5a0] sm:$0xff]
        %v3527 = vld [vmem:[%s422 + $0x628] sm:$0xff]
        %v3528 = vld [vmem:[%s422 + $0x6b0] sm:$0xff]
        %v3529 = vld [vmem:[%s422 + $0x738] sm:$0xff]
        %v3530 = vld [vmem:[%s422 + $0x7c0] sm:$0xff]
        %v3531 = vld [vmem:[%s422 + $0x848] sm:$0xff]
        %v3532 = vld [vmem:[%s422 + $0x8d0] sm:$0xff]
        %v3533 = vld [vmem:[%s422 + $0x958] sm:$0xff]
        %v3534 = vld [vmem:[%s422 + $0x9e0] sm:$0xff]
        %v3535 = vld [vmem:[%s422 + $0xa68] sm:$0xff]
        %v3536 = vld [vmem:[%s422 + $0xaf0] sm:$0xff]
        %v3537 = vld [vmem:[%s422 + $0xb78] sm:$0xff]
        %v3538 = vld [vmem:[%s422 + $0xc00] sm:$0xff]
        %v3539 = vld [vmem:[%s422 + $0xc88] sm:$0xff]
        %v3540 = vld [vmem:[%s422 + $0xd10] sm:$0xff]
        %v3541 = vld [vmem:[%s422 + $0xd98] sm:$0xff]
        %v3542 = vld [vmem:[%s422 + $0xe20] sm:$0xff]
        %v3543 = vld [vmem:[%s422 + $0xea8] sm:$0xff]
        %v3544 = vld [vmem:[%s422 + $0xf30] sm:$0xff]
        %v3545 = vld [vmem:[%s422 + $0xfb8] sm:$0xff]
        %v3546 = vld [vmem:[%s422 + $0x1040] sm:$0xff]
        %v3547 = vld [vmem:[%s422 + $0x10c8] sm:$0xff]
        %v3548 = vld [vmem:[%s431 + $0x14] sm:$0x3]
        %v3550 = vlaneseq
        %v3551 = vshrl.u32 %v3550, 7
        %v3552 = vsub.s32 0, %v3551
        %v3553 = vrot.slane %v3548, %v3552
        %v3554 = vlaneseq
        %v3555 = vshrl.u32 %v3554, 7
        %v3556 = vsub.s32 1, %v3555
        %v3557 = vrot.slane %v3548, %v3556
        %v3592 = vunpack.c.l.b16 %v3516
        %v3593 = vunpack.c.h.b16 %v3516
        %v3594 = vunpack.c.l.b16 %v3517
        %v3595 = vunpack.c.h.b16 %v3517
        %v3596 = vunpack.c.l.b16 %v3518
        %v3597 = vunpack.c.h.b16 %v3518
        %v3598 = vunpack.c.l.b16 %v3519
        %v3599 = vunpack.c.h.b16 %v3519
        %v3600 = vunpack.c.l.b16 %v3520
        %v3601 = vunpack.c.h.b16 %v3520
        %v3602 = vunpack.c.l.b16 %v3521
        %v3603 = vunpack.c.h.b16 %v3521
        %v3604 = vunpack.c.l.b16 %v3522
        %v3605 = vunpack.c.h.b16 %v3522
        %v3606 = vunpack.c.l.b16 %v3523
        %v3607 = vunpack.c.h.b16 %v3523
        %v3608 = vunpack.c.l.b16 %v3524
        %v3609 = vunpack.c.h.b16 %v3524
        %v3610 = vunpack.c.l.b16 %v3525
        %v3611 = vunpack.c.h.b16 %v3525
        %v3612 = vunpack.c.l.b16 %v3526
        %v3613 = vunpack.c.h.b16 %v3526
        %v3614 = vunpack.c.l.b16 %v3527
        %v3615 = vunpack.c.h.b16 %v3527
        %v3616 = vunpack.c.l.b16 %v3528
        %v3617 = vunpack.c.h.b16 %v3528
        %v3618 = vunpack.c.l.b16 %v3529
        %v3619 = vunpack.c.h.b16 %v3529
        %v3620 = vunpack.c.l.b16 %v3530
        %v3621 = vunpack.c.h.b16 %v3530
        %v3622 = vunpack.c.l.b16 %v3531
        %v3623 = vunpack.c.h.b16 %v3531
        %v3624 = vunpack.c.l.b16 %v3532
        %v3625 = vunpack.c.h.b16 %v3532
        %v3626 = vunpack.c.l.b16 %v3533
        %v3627 = vunpack.c.h.b16 %v3533
        %v3628 = vunpack.c.l.b16 %v3534
        %v3629 = vunpack.c.h.b16 %v3534
        %v3630 = vunpack.c.l.b16 %v3535
        %v3631 = vunpack.c.h.b16 %v3535
        %v3632 = vunpack.c.l.b16 %v3536
        %v3633 = vunpack.c.h.b16 %v3536
        %v3634 = vunpack.c.l.b16 %v3537
        %v3635 = vunpack.c.h.b16 %v3537
        %v3636 = vunpack.c.l.b16 %v3538
        %v3637 = vunpack.c.h.b16 %v3538
        %v3638 = vunpack.c.l.b16 %v3539
        %v3639 = vunpack.c.h.b16 %v3539
        %v3640 = vunpack.c.l.b16 %v3540
        %v3641 = vunpack.c.h.b16 %v3540
        %v3642 = vunpack.c.l.b16 %v3541
        %v3643 = vunpack.c.h.b16 %v3541
        %v3644 = vunpack.c.l.b16 %v3542
        %v3645 = vunpack.c.h.b16 %v3542
        %v3646 = vunpack.c.l.b16 %v3543
        %v3647 = vunpack.c.h.b16 %v3543
        %v3648 = vunpack.c.l.b16 %v3544
        %v3649 = vunpack.c.h.b16 %v3544
        %v3650 = vunpack.c.l.b16 %v3545
        %v3651 = vunpack.c.h.b16 %v3545
        %v3652 = vunpack.c.l.b16 %v3546
        %v3653 = vunpack.c.h.b16 %v3546
        %v3654 = vunpack.c.l.b16 %v3547
        %v3655 = vunpack.c.h.b16 %v3547
        %v3656 = vpack.c.b16 %v3594, %v3592
        %v3657 = vpack.c.b16 %v3595, %v3593
        %v3658 = vpack.c.b16 %v3598, %v3596
        %v3659 = vpack.c.b16 %v3599, %v3597
        %v3660 = vpack.c.b16 %v3602, %v3600
        %v3661 = vpack.c.b16 %v3603, %v3601
        %v3662 = vpack.c.b16 %v3606, %v3604
        %v3663 = vpack.c.b16 %v3607, %v3605
        %v3664 = vpack.c.b16 %v3610, %v3608
        %v3665 = vpack.c.b16 %v3611, %v3609
        %v3666 = vpack.c.b16 %v3614, %v3612
        %v3667 = vpack.c.b16 %v3615, %v3613
        %v3668 = vpack.c.b16 %v3618, %v3616
        %v3669 = vpack.c.b16 %v3619, %v3617
        %v3670 = vpack.c.b16 %v3622, %v3620
        %v3671 = vpack.c.b16 %v3623, %v3621
        %v3672 = vpack.c.b16 %v3626, %v3624
        %v3673 = vpack.c.b16 %v3627, %v3625
        %v3674 = vpack.c.b16 %v3630, %v3628
        %v3675 = vpack.c.b16 %v3631, %v3629
        %v3676 = vpack.c.b16 %v3634, %v3632
        %v3677 = vpack.c.b16 %v3635, %v3633
        %v3678 = vpack.c.b16 %v3638, %v3636
        %v3679 = vpack.c.b16 %v3639, %v3637
        %v3680 = vpack.c.b16 %v3642, %v3640
        %v3681 = vpack.c.b16 %v3643, %v3641
        %v3682 = vpack.c.b16 %v3646, %v3644
        %v3683 = vpack.c.b16 %v3647, %v3645
        %v3684 = vpack.c.b16 %v3650, %v3648
        %v3685 = vpack.c.b16 %v3651, %v3649
        %v3686 = vpack.c.b16 %v3654, %v3652
        %v3687 = vpack.c.b16 %v3655, %v3653
        %3720 = vmatprep.subr.bf16.mxu0 %v3671
        %3721 = vmatpush1.bf16.msra.mxu0 %v3670
        %3722 = vmatprep.subr.bf16.mxu0 %v3669
        %3723 = vmatpush1.bf16.msra.mxu0 %v3668
        %3724 = vmatprep.subr.bf16.mxu0 %v3667
        %3725 = vmatpush1.bf16.msra.mxu0 %v3666
        %3726 = vmatprep.subr.bf16.mxu0 %v3665
        %3727 = vmatpush1.bf16.msra.mxu0 %v3664
        %3728 = vmatprep.subr.bf16.mxu0 %v3663
        %3729 = vmatpush1.bf16.msra.mxu0 %v3662
        %3730 = vmatprep.subr.bf16.mxu0 %v3661
        %3731 = vmatpush1.bf16.msra.mxu0 %v3660
        %3732 = vmatprep.subr.bf16.mxu0 %v3659
        %3733 = vmatpush1.bf16.msra.mxu0 %v3658
        %3734 = vmatprep.subr.bf16.mxu0 %v3657
        %3735 = vmatpush1.bf16.msra.mxu0 %v3656
        %3736 = vmatprep.subr.bf16.mxu0 %v3687
        %3737 = vmatpush2.bf16.msra.mxu0 %v3686
        %3738 = vmatprep.subr.bf16.mxu0 %v3685
        %3739 = vmatpush2.bf16.msra.mxu0 %v3684
        %3740 = vmatprep.subr.bf16.mxu0 %v3683
        %3741 = vmatpush2.bf16.msra.mxu0 %v3682
        %3742 = vmatprep.subr.bf16.mxu0 %v3681
        %3743 = vmatpush2.bf16.msra.mxu0 %v3680
        %3744 = vmatprep.subr.bf16.mxu0 %v3679
        %3745 = vmatpush2.bf16.msra.mxu0 %v3678
        %3746 = vmatprep.subr.bf16.mxu0 %v3677
        %3747 = vmatpush2.bf16.msra.mxu0 %v3676
        %3748 = vmatprep.subr.bf16.mxu0 %v3675
        %3749 = vmatpush2.bf16.msra.mxu0 %v3674
        %3750 = vmatprep.subr.bf16.mxu0 %v3673
        %3751 = vmatpush2.bf16.msra.mxu0 %v3672
        %3752 = vmatprep.mubr.bf16.mxu0 %v3515
        %3753 = vmatmul.mubr.bf16.gmra.mxu0 %v3514
        %v3754 = vpop.f32.mrf.mxu0
        %v3755 = vadd.f32 %v3553, %v3754
        %v3756 = vpop.f32.mrf.mxu0
        %v3757 = vadd.f32 %v3557, %v3756
        %v3758 = vpop.f32.mrf.mxu0
        %v3759 = vpop.f32.mrf.mxu0
        %3760 = vdwg.mxu0
        %v3761 = vadd.f32 %v848, %v3755
        %v3762 = vadd.f32 %v849, %v3757
        %s3763 = scalar_lea.vmem %s440, 6 [#allocation14]
        %v3764 = vld [vmem:[%s3763] ss:$8 sm:$0x3]
        %s3765 = scalar_lea.vmem %s440, 7 [#allocation14]
        %v3766 = vld [vmem:[%s3765] ss:$8 sm:$0x3]
        %v3767 = vadd.f32 %v3761, %v3762
        %3768 = vadd.xlane.f32.xlu0 %v3767
        %v3769 = vpop.xlane.xlu0 %3768
        %v3770 = vmul.f32 %v3769, %v1995
        %v3771 = vsub.f32 %v3761, %v3770
        %v3772 = vsub.f32 %v3762, %v3770
        %v3773 = vmul.f32 %v3771, %v3771
        %v3774 = vmul.f32 %v3772, %v3772
        %v3775 = vadd.f32 %v3773, %v3774
        %3776 = vadd.xlane.f32.xlu0 %v3775
        %v3777 = vpop.xlane.xlu0 %3776
        %v3778 = vmul.f32 %v3777, %v1995
        %v3779 = vadd.f32 %v3778, 1e-05
        %v3780 = vrsqrt.pop %v3779
        %v3781 = vmul.f32 %v3771, %v3780
        %v3782 = vmul.f32 %v3772, %v3780
        %v3784 = vlaneseq
        %v3785 = vshrl.u32 %v3784, 7
        %v3786 = vsub.s32 0, %v3785
        %v3787 = vrot.slane %v3764, %v3786
        %v3788 = vlaneseq
        %v3789 = vshrl.u32 %v3788, 7
        %v3790 = vsub.s32 1, %v3789
        %v3791 = vrot.slane %v3764, %v3790
        %v3794 = vmul.f32 %v3781, %v3787
        %v3795 = vmul.f32 %v3782, %v3791
        %v3797 = vlaneseq
        %v3798 = vshrl.u32 %v3797, 7
        %v3799 = vsub.s32 0, %v3798
        %v3800 = vrot.slane %v3766, %v3799
        %v3801 = vlaneseq
        %v3802 = vshrl.u32 %v3801, 7
        %v3803 = vsub.s32 1, %v3802
        %v3804 = vrot.slane %v3766, %v3803
        %v3807 = vadd.f32 %v3794, %v3800
        %v3808 = vadd.f32 %v3795, %v3804
        %v3809 = vpack.c.bf16 %v3807, %v3807
        %v3810 = vpack.c.bf16 %v3808, %v3808
        %v3811 = vld [vmem:[%s422 + $0x58] sm:$0xff]
        %v3812 = vld [vmem:[%s422 + $0xe0] sm:$0xff]
        %v3813 = vld [vmem:[%s422 + $0x168] sm:$0xff]
        %v3814 = vld [vmem:[%s422 + $0x1f0] sm:$0xff]
        %v3815 = vld [vmem:[%s422 + $0x278] sm:$0xff]
        %v3816 = vld [vmem:[%s422 + $0x300] sm:$0xff]
        %v3817 = vld [vmem:[%s422 + $0x388] sm:$0xff]
        %v3818 = vld [vmem:[%s422 + $0x410] sm:$0xff]
        %v3819 = vld [vmem:[%s422 + $0x498] sm:$0xff]
        %v3820 = vld [vmem:[%s422 + $0x520] sm:$0xff]
        %v3821 = vld [vmem:[%s422 + $0x5a8] sm:$0xff]
        %v3822 = vld [vmem:[%s422 + $0x630] sm:$0xff]
        %v3823 = vld [vmem:[%s422 + $0x6b8] sm:$0xff]
        %v3824 = vld [vmem:[%s422 + $0x740] sm:$0xff]
        %v3825 = vld [vmem:[%s422 + $0x7c8] sm:$0xff]
        %v3826 = vld [vmem:[%s422 + $0x850] sm:$0xff]
        %v3827 = vld [vmem:[%s422 + $0x8d8] sm:$0xff]
        %v3828 = vld [vmem:[%s422 + $0x960] sm:$0xff]
        %v3829 = vld [vmem:[%s422 + $0x9e8] sm:$0xff]
        %v3830 = vld [vmem:[%s422 + $0xa70] sm:$0xff]
        %v3831 = vld [vmem:[%s422 + $0xaf8] sm:$0xff]
        %v3832 = vld [vmem:[%s422 + $0xb80] sm:$0xff]
        %v3833 = vld [vmem:[%s422 + $0xc08] sm:$0xff]
        %v3834 = vld [vmem:[%s422 + $0xc90] sm:$0xff]
        %v3835 = vld [vmem:[%s422 + $0xd18] sm:$0xff]
        %v3836 = vld [vmem:[%s422 + $0xda0] sm:$0xff]
        %v3837 = vld [vmem:[%s422 + $0xe28] sm:$0xff]
        %v3838 = vld [vmem:[%s422 + $0xeb0] sm:$0xff]
        %v3839 = vld [vmem:[%s422 + $0xf38] sm:$0xff]
        %v3840 = vld [vmem:[%s422 + $0xfc0] sm:$0xff]
        %v3841 = vld [vmem:[%s422 + $0x1048] sm:$0xff]
        %v3842 = vld [vmem:[%s422 + $0x10d0] sm:$0xff]
        %v3843 = vld [vmem:[%s431 + $0x16] sm:$0x3]
        %v3845 = vlaneseq
        %v3846 = vshrl.u32 %v3845, 7
        %v3847 = vsub.s32 0, %v3846
        %v3848 = vrot.slane %v3843, %v3847
        %v3849 = vlaneseq
        %v3850 = vshrl.u32 %v3849, 7
        %v3851 = vsub.s32 1, %v3850
        %v3852 = vrot.slane %v3843, %v3851
        %v3887 = vunpack.c.l.b16 %v3811
        %v3888 = vunpack.c.h.b16 %v3811
        %v3889 = vunpack.c.l.b16 %v3812
        %v3890 = vunpack.c.h.b16 %v3812
        %v3891 = vunpack.c.l.b16 %v3813
        %v3892 = vunpack.c.h.b16 %v3813
        %v3893 = vunpack.c.l.b16 %v3814
        %v3894 = vunpack.c.h.b16 %v3814
        %v3895 = vunpack.c.l.b16 %v3815
        %v3896 = vunpack.c.h.b16 %v3815
        %v3897 = vunpack.c.l.b16 %v3816
        %v3898 = vunpack.c.h.b16 %v3816
        %v3899 = vunpack.c.l.b16 %v3817
        %v3900 = vunpack.c.h.b16 %v3817
        %v3901 = vunpack.c.l.b16 %v3818
        %v3902 = vunpack.c.h.b16 %v3818
        %v3903 = vunpack.c.l.b16 %v3819
        %v3904 = vunpack.c.h.b16 %v3819
        %v3905 = vunpack.c.l.b16 %v3820
        %v3906 = vunpack.c.h.b16 %v3820
        %v3907 = vunpack.c.l.b16 %v3821
        %v3908 = vunpack.c.h.b16 %v3821
        %v3909 = vunpack.c.l.b16 %v3822
        %v3910 = vunpack.c.h.b16 %v3822
        %v3911 = vunpack.c.l.b16 %v3823
        %v3912 = vunpack.c.h.b16 %v3823
        %v3913 = vunpack.c.l.b16 %v3824
        %v3914 = vunpack.c.h.b16 %v3824
        %v3915 = vunpack.c.l.b16 %v3825
        %v3916 = vunpack.c.h.b16 %v3825
        %v3917 = vunpack.c.l.b16 %v3826
        %v3918 = vunpack.c.h.b16 %v3826
        %v3919 = vunpack.c.l.b16 %v3827
        %v3920 = vunpack.c.h.b16 %v3827
        %v3921 = vunpack.c.l.b16 %v3828
        %v3922 = vunpack.c.h.b16 %v3828
        %v3923 = vunpack.c.l.b16 %v3829
        %v3924 = vunpack.c.h.b16 %v3829
        %v3925 = vunpack.c.l.b16 %v3830
        %v3926 = vunpack.c.h.b16 %v3830
        %v3927 = vunpack.c.l.b16 %v3831
        %v3928 = vunpack.c.h.b16 %v3831
        %v3929 = vunpack.c.l.b16 %v3832
        %v3930 = vunpack.c.h.b16 %v3832
        %v3931 = vunpack.c.l.b16 %v3833
        %v3932 = vunpack.c.h.b16 %v3833
        %v3933 = vunpack.c.l.b16 %v3834
        %v3934 = vunpack.c.h.b16 %v3834
        %v3935 = vunpack.c.l.b16 %v3835
        %v3936 = vunpack.c.h.b16 %v3835
        %v3937 = vunpack.c.l.b16 %v3836
        %v3938 = vunpack.c.h.b16 %v3836
        %v3939 = vunpack.c.l.b16 %v3837
        %v3940 = vunpack.c.h.b16 %v3837
        %v3941 = vunpack.c.l.b16 %v3838
        %v3942 = vunpack.c.h.b16 %v3838
        %v3943 = vunpack.c.l.b16 %v3839
        %v3944 = vunpack.c.h.b16 %v3839
        %v3945 = vunpack.c.l.b16 %v3840
        %v3946 = vunpack.c.h.b16 %v3840
        %v3947 = vunpack.c.l.b16 %v3841
        %v3948 = vunpack.c.h.b16 %v3841
        %v3949 = vunpack.c.l.b16 %v3842
        %v3950 = vunpack.c.h.b16 %v3842
        %v3951 = vpack.c.b16 %v3889, %v3887
        %v3952 = vpack.c.b16 %v3890, %v3888
        %v3953 = vpack.c.b16 %v3893, %v3891
        %v3954 = vpack.c.b16 %v3894, %v3892
        %v3955 = vpack.c.b16 %v3897, %v3895
        %v3956 = vpack.c.b16 %v3898, %v3896
        %v3957 = vpack.c.b16 %v3901, %v3899
        %v3958 = vpack.c.b16 %v3902, %v3900
        %v3959 = vpack.c.b16 %v3905, %v3903
        %v3960 = vpack.c.b16 %v3906, %v3904
        %v3961 = vpack.c.b16 %v3909, %v3907
        %v3962 = vpack.c.b16 %v3910, %v3908
        %v3963 = vpack.c.b16 %v3913, %v3911
        %v3964 = vpack.c.b16 %v3914, %v3912
        %v3965 = vpack.c.b16 %v3917, %v3915
        %v3966 = vpack.c.b16 %v3918, %v3916
        %v3967 = vpack.c.b16 %v3921, %v3919
        %v3968 = vpack.c.b16 %v3922, %v3920
        %v3969 = vpack.c.b16 %v3925, %v3923
        %v3970 = vpack.c.b16 %v3926, %v3924
        %v3971 = vpack.c.b16 %v3929, %v3927
        %v3972 = vpack.c.b16 %v3930, %v3928
        %v3973 = vpack.c.b16 %v3933, %v3931
        %v3974 = vpack.c.b16 %v3934, %v3932
        %v3975 = vpack.c.b16 %v3937, %v3935
        %v3976 = vpack.c.b16 %v3938, %v3936
        %v3977 = vpack.c.b16 %v3941, %v3939
        %v3978 = vpack.c.b16 %v3942, %v3940
        %v3979 = vpack.c.b16 %v3945, %v3943
        %v3980 = vpack.c.b16 %v3946, %v3944
        %v3981 = vpack.c.b16 %v3949, %v3947
        %v3982 = vpack.c.b16 %v3950, %v3948
        %4015 = vmatprep.subr.bf16.mxu0 %v3966
        %4016 = vmatpush1.bf16.msra.mxu0 %v3965
        %4017 = vmatprep.subr.bf16.mxu0 %v3964
        %4018 = vmatpush1.bf16.msra.mxu0 %v3963
        %4019 = vmatprep.subr.bf16.mxu0 %v3962
        %4020 = vmatpush1.bf16.msra.mxu0 %v3961
        %4021 = vmatprep.subr.bf16.mxu0 %v3960
        %4022 = vmatpush1.bf16.msra.mxu0 %v3959
        %4023 = vmatprep.subr.bf16.mxu0 %v3958
        %4024 = vmatpush1.bf16.msra.mxu0 %v3957
        %4025 = vmatprep.subr.bf16.mxu0 %v3956
        %4026 = vmatpush1.bf16.msra.mxu0 %v3955
        %4027 = vmatprep.subr.bf16.mxu0 %v3954
        %4028 = vmatpush1.bf16.msra.mxu0 %v3953
        %4029 = vmatprep.subr.bf16.mxu0 %v3952
        %4030 = vmatpush1.bf16.msra.mxu0 %v3951
        %4031 = vmatprep.subr.bf16.mxu0 %v3982
        %4032 = vmatpush2.bf16.msra.mxu0 %v3981
        %4033 = vmatprep.subr.bf16.mxu0 %v3980
        %4034 = vmatpush2.bf16.msra.mxu0 %v3979
        %4035 = vmatprep.subr.bf16.mxu0 %v3978
        %4036 = vmatpush2.bf16.msra.mxu0 %v3977
        %4037 = vmatprep.subr.bf16.mxu0 %v3976
        %4038 = vmatpush2.bf16.msra.mxu0 %v3975
        %4039 = vmatprep.subr.bf16.mxu0 %v3974
        %4040 = vmatpush2.bf16.msra.mxu0 %v3973
        %4041 = vmatprep.subr.bf16.mxu0 %v3972
        %4042 = vmatpush2.bf16.msra.mxu0 %v3971
        %4043 = vmatprep.subr.bf16.mxu0 %v3970
        %4044 = vmatpush2.bf16.msra.mxu0 %v3969
        %4045 = vmatprep.subr.bf16.mxu0 %v3968
        %4046 = vmatpush2.bf16.msra.mxu0 %v3967
        %4047 = vmatprep.mubr.bf16.mxu0 %v3810
        %4048 = vmatmul.mubr.bf16.gmra.mxu0 %v3809
        %v4049 = vpop.f32.mrf.mxu0
        %v4050 = vadd.f32 %v3848, %v4049
        %v4051 = vpop.f32.mrf.mxu0
        %v4052 = vadd.f32 %v3852, %v4051
        %v4053 = vpop.f32.mrf.mxu0
        %v4054 = vpop.f32.mrf.mxu0
        %4055 = vdwg.mxu0
        %v4056 = vpack.c.bf16 %v2623, %v2623
        %v4057 = vpack.c.bf16 %v2624, %v2624
        %v4058 = vld [vmem:[%s422 + $0x60] sm:$0xff]
        %v4059 = vld [vmem:[%s422 + $0x68] sm:$0xff]
        %v4060 = vld [vmem:[%s422 + $0xe8] sm:$0xff]
        %v4061 = vld [vmem:[%s422 + $0xf0] sm:$0xff]
        %v4062 = vld [vmem:[%s422 + $0x170] sm:$0xff]
        %v4063 = vld [vmem:[%s422 + $0x178] sm:$0xff]
        %v4064 = vld [vmem:[%s422 + $0x1f8] sm:$0xff]
        %v4065 = vld [vmem:[%s422 + $0x200] sm:$0xff]
        %v4066 = vld [vmem:[%s422 + $0x280] sm:$0xff]
        %v4067 = vld [vmem:[%s422 + $0x288] sm:$0xff]
        %v4068 = vld [vmem:[%s422 + $0x308] sm:$0xff]
        %v4069 = vld [vmem:[%s422 + $0x310] sm:$0xff]
        %v4070 = vld [vmem:[%s422 + $0x390] sm:$0xff]
        %v4071 = vld [vmem:[%s422 + $0x398] sm:$0xff]
        %v4072 = vld [vmem:[%s422 + $0x418] sm:$0xff]
        %v4073 = vld [vmem:[%s422 + $0x420] sm:$0xff]
        %v4074 = vld [vmem:[%s422 + $0x4a0] sm:$0xff]
        %v4075 = vld [vmem:[%s422 + $0x4a8] sm:$0xff]
        %v4076 = vld [vmem:[%s422 + $0x528] sm:$0xff]
        %v4077 = vld [vmem:[%s422 + $0x530] sm:$0xff]
        %v4078 = vld [vmem:[%s422 + $0x5b0] sm:$0xff]
        %v4079 = vld [vmem:[%s422 + $0x5b8] sm:$0xff]
        %v4080 = vld [vmem:[%s422 + $0x638] sm:$0xff]
        %v4081 = vld [vmem:[%s422 + $0x640] sm:$0xff]
        %v4082 = vld [vmem:[%s422 + $0x6c0] sm:$0xff]
        %v4083 = vld [vmem:[%s422 + $0x6c8] sm:$0xff]
        %v4084 = vld [vmem:[%s422 + $0x748] sm:$0xff]
        %v4085 = vld [vmem:[%s422 + $0x750] sm:$0xff]
        %v4086 = vld [vmem:[%s422 + $0x7d0] sm:$0xff]
        %v4087 = vld [vmem:[%s422 + $0x7d8] sm:$0xff]
        %v4088 = vld [vmem:[%s422 + $0x858] sm:$0xff]
        %v4089 = vld [vmem:[%s422 + $0x860] sm:$0xff]
        %v4090 = vld [vmem:[%s422 + $0x8e0] sm:$0xff]
        %v4091 = vld [vmem:[%s422 + $0x8e8] sm:$0xff]
        %v4092 = vld [vmem:[%s422 + $0x968] sm:$0xff]
        %v4093 = vld [vmem:[%s422 + $0x970] sm:$0xff]
        %v4094 = vld [vmem:[%s422 + $0x9f0] sm:$0xff]
        %v4095 = vld [vmem:[%s422 + $0x9f8] sm:$0xff]
        %v4096 = vld [vmem:[%s422 + $0xa78] sm:$0xff]
        %v4097 = vld [vmem:[%s422 + $0xa80] sm:$0xff]
        %v4098 = vld [vmem:[%s422 + $0xb00] sm:$0xff]
        %v4099 = vld [vmem:[%s422 + $0xb08] sm:$0xff]
        %v4100 = vld [vmem:[%s422 + $0xb88] sm:$0xff]
        %v4101 = vld [vmem:[%s422 + $0xb90] sm:$0xff]
        %v4102 = vld [vmem:[%s422 + $0xc10] sm:$0xff]
        %v4103 = vld [vmem:[%s422 + $0xc18] sm:$0xff]
        %v4104 = vld [vmem:[%s422 + $0xc98] sm:$0xff]
        %v4105 = vld [vmem:[%s422 + $0xca0] sm:$0xff]
        %v4106 = vld [vmem:[%s422 + $0xd20] sm:$0xff]
        %v4107 = vld [vmem:[%s422 + $0xd28] sm:$0xff]
        %v4108 = vld [vmem:[%s422 + $0xda8] sm:$0xff]
        %v4109 = vld [vmem:[%s422 + $0xdb0] sm:$0xff]
        %v4110 = vld [vmem:[%s422 + $0xe30] sm:$0xff]
        %v4111 = vld [vmem:[%s422 + $0xe38] sm:$0xff]
        %v4112 = vld [vmem:[%s422 + $0xeb8] sm:$0xff]
        %v4113 = vld [vmem:[%s422 + $0xec0] sm:$0xff]
        %v4114 = vld [vmem:[%s422 + $0xf40] sm:$0xff]
        %v4115 = vld [vmem:[%s422 + $0xf48] sm:$0xff]
        %v4116 = vld [vmem:[%s422 + $0xfc8] sm:$0xff]
        %v4117 = vld [vmem:[%s422 + $0xfd0] sm:$0xff]
        %v4118 = vld [vmem:[%s422 + $0x1050] sm:$0xff]
        %v4119 = vld [vmem:[%s422 + $0x1058] sm:$0xff]
        %v4120 = vld [vmem:[%s422 + $0x10d8] sm:$0xff]
        %v4121 = vld [vmem:[%s422 + $0x10e0] sm:$0xff]
        %v4122 = vld [vmem:[%s431 + $0x18] sm:$0xf]
        %v4124 = vlaneseq
        %v4125 = vshrl.u32 %v4124, 7
        %v4126 = vsub.s32 0, %v4125
        %v4127 = vrot.slane %v4122, %v4126
        %v4128 = vlaneseq
        %v4129 = vshrl.u32 %v4128, 7
        %v4130 = vsub.s32 1, %v4129
        %v4131 = vrot.slane %v4122, %v4130
        %v4132 = vlaneseq
        %v4133 = vshrl.u32 %v4132, 7
        %v4134 = vsub.s32 2, %v4133
        %v4135 = vrot.slane %v4122, %v4134
        %v4136 = vlaneseq
        %v4137 = vshrl.u32 %v4136, 7
        %v4138 = vsub.s32 3, %v4137
        %v4139 = vrot.slane %v4122, %v4138
        %v4208 = vunpack.c.l.b16 %v4058
        %v4209 = vunpack.c.h.b16 %v4058
        %v4210 = vunpack.c.l.b16 %v4059
        %v4211 = vunpack.c.h.b16 %v4059
        %v4212 = vunpack.c.l.b16 %v4060
        %v4213 = vunpack.c.h.b16 %v4060
        %v4214 = vunpack.c.l.b16 %v4061
        %v4215 = vunpack.c.h.b16 %v4061
        %v4216 = vunpack.c.l.b16 %v4062
        %v4217 = vunpack.c.h.b16 %v4062
        %v4218 = vunpack.c.l.b16 %v4063
        %v4219 = vunpack.c.h.b16 %v4063
        %v4220 = vunpack.c.l.b16 %v4064
        %v4221 = vunpack.c.h.b16 %v4064
        %v4222 = vunpack.c.l.b16 %v4065
        %v4223 = vunpack.c.h.b16 %v4065
        %v4224 = vunpack.c.l.b16 %v4066
        %v4225 = vunpack.c.h.b16 %v4066
        %v4226 = vunpack.c.l.b16 %v4067
        %v4227 = vunpack.c.h.b16 %v4067
        %v4228 = vunpack.c.l.b16 %v4068
        %v4229 = vunpack.c.h.b16 %v4068
        %v4230 = vunpack.c.l.b16 %v4069
        %v4231 = vunpack.c.h.b16 %v4069
        %v4232 = vunpack.c.l.b16 %v4070
        %v4233 = vunpack.c.h.b16 %v4070
        %v4234 = vunpack.c.l.b16 %v4071
        %v4235 = vunpack.c.h.b16 %v4071
        %v4236 = vunpack.c.l.b16 %v4072
        %v4237 = vunpack.c.h.b16 %v4072
        %v4238 = vunpack.c.l.b16 %v4073
        %v4239 = vunpack.c.h.b16 %v4073
        %v4240 = vunpack.c.l.b16 %v4074
        %v4241 = vunpack.c.h.b16 %v4074
        %v4242 = vunpack.c.l.b16 %v4075
        %v4243 = vunpack.c.h.b16 %v4075
        %v4244 = vunpack.c.l.b16 %v4076
        %v4245 = vunpack.c.h.b16 %v4076
        %v4246 = vunpack.c.l.b16 %v4077
        %v4247 = vunpack.c.h.b16 %v4077
        %v4248 = vunpack.c.l.b16 %v4078
        %v4249 = vunpack.c.h.b16 %v4078
        %v4250 = vunpack.c.l.b16 %v4079
        %v4251 = vunpack.c.h.b16 %v4079
        %v4252 = vunpack.c.l.b16 %v4080
        %v4253 = vunpack.c.h.b16 %v4080
        %v4254 = vunpack.c.l.b16 %v4081
        %v4255 = vunpack.c.h.b16 %v4081
        %v4256 = vunpack.c.l.b16 %v4082
        %v4257 = vunpack.c.h.b16 %v4082
        %v4258 = vunpack.c.l.b16 %v4083
        %v4259 = vunpack.c.h.b16 %v4083
        %v4260 = vunpack.c.l.b16 %v4084
        %v4261 = vunpack.c.h.b16 %v4084
        %v4262 = vunpack.c.l.b16 %v4085
        %v4263 = vunpack.c.h.b16 %v4085
        %v4264 = vunpack.c.l.b16 %v4086
        %v4265 = vunpack.c.h.b16 %v4086
        %v4266 = vunpack.c.l.b16 %v4087
        %v4267 = vunpack.c.h.b16 %v4087
        %v4268 = vunpack.c.l.b16 %v4088
        %v4269 = vunpack.c.h.b16 %v4088
        %v4270 = vunpack.c.l.b16 %v4089
        %v4271 = vunpack.c.h.b16 %v4089
        %v4272 = vunpack.c.l.b16 %v4090
        %v4273 = vunpack.c.h.b16 %v4090
        %v4274 = vunpack.c.l.b16 %v4091
        %v4275 = vunpack.c.h.b16 %v4091
        %v4276 = vunpack.c.l.b16 %v4092
        %v4277 = vunpack.c.h.b16 %v4092
        %v4278 = vunpack.c.l.b16 %v4093
        %v4279 = vunpack.c.h.b16 %v4093
        %v4280 = vunpack.c.l.b16 %v4094
        %v4281 = vunpack.c.h.b16 %v4094
        %v4282 = vunpack.c.l.b16 %v4095
        %v4283 = vunpack.c.h.b16 %v4095
        %v4284 = vunpack.c.l.b16 %v4096
        %v4285 = vunpack.c.h.b16 %v4096
        %v4286 = vunpack.c.l.b16 %v4097
        %v4287 = vunpack.c.h.b16 %v4097
        %v4288 = vunpack.c.l.b16 %v4098
        %v4289 = vunpack.c.h.b16 %v4098
        %v4290 = vunpack.c.l.b16 %v4099
        %v4291 = vunpack.c.h.b16 %v4099
        %v4292 = vunpack.c.l.b16 %v4100
        %v4293 = vunpack.c.h.b16 %v4100
        %v4294 = vunpack.c.l.b16 %v4101
        %v4295 = vunpack.c.h.b16 %v4101
        %v4296 = vunpack.c.l.b16 %v4102
        %v4297 = vunpack.c.h.b16 %v4102
        %v4298 = vunpack.c.l.b16 %v4103
        %v4299 = vunpack.c.h.b16 %v4103
        %v4300 = vunpack.c.l.b16 %v4104
        %v4301 = vunpack.c.h.b16 %v4104
        %v4302 = vunpack.c.l.b16 %v4105
        %v4303 = vunpack.c.h.b16 %v4105
        %v4304 = vunpack.c.l.b16 %v4106
        %v4305 = vunpack.c.h.b16 %v4106
        %v4306 = vunpack.c.l.b16 %v4107
        %v4307 = vunpack.c.h.b16 %v4107
        %v4308 = vunpack.c.l.b16 %v4108
        %v4309 = vunpack.c.h.b16 %v4108
        %v4310 = vunpack.c.l.b16 %v4109
        %v4311 = vunpack.c.h.b16 %v4109
        %v4312 = vunpack.c.l.b16 %v4110
        %v4313 = vunpack.c.h.b16 %v4110
        %v4314 = vunpack.c.l.b16 %v4111
        %v4315 = vunpack.c.h.b16 %v4111
        %v4316 = vunpack.c.l.b16 %v4112
        %v4317 = vunpack.c.h.b16 %v4112
        %v4318 = vunpack.c.l.b16 %v4113
        %v4319 = vunpack.c.h.b16 %v4113
        %v4320 = vunpack.c.l.b16 %v4114
        %v4321 = vunpack.c.h.b16 %v4114
        %v4322 = vunpack.c.l.b16 %v4115
        %v4323 = vunpack.c.h.b16 %v4115
        %v4324 = vunpack.c.l.b16 %v4116
        %v4325 = vunpack.c.h.b16 %v4116
        %v4326 = vunpack.c.l.b16 %v4117
        %v4327 = vunpack.c.h.b16 %v4117
        %v4328 = vunpack.c.l.b16 %v4118
        %v4329 = vunpack.c.h.b16 %v4118
        %v4330 = vunpack.c.l.b16 %v4119
        %v4331 = vunpack.c.h.b16 %v4119
        %v4332 = vunpack.c.l.b16 %v4120
        %v4333 = vunpack.c.h.b16 %v4120
        %v4334 = vunpack.c.l.b16 %v4121
        %v4335 = vunpack.c.h.b16 %v4121
        %v4336 = vpack.c.b16 %v4212, %v4208
        %v4337 = vpack.c.b16 %v4213, %v4209
        %v4338 = vpack.c.b16 %v4214, %v4210
        %v4339 = vpack.c.b16 %v4215, %v4211
        %v4340 = vpack.c.b16 %v4220, %v4216
        %v4341 = vpack.c.b16 %v4221, %v4217
        %v4342 = vpack.c.b16 %v4222, %v4218
        %v4343 = vpack.c.b16 %v4223, %v4219
        %v4344 = vpack.c.b16 %v4228, %v4224
        %v4345 = vpack.c.b16 %v4229, %v4225
        %v4346 = vpack.c.b16 %v4230, %v4226
        %v4347 = vpack.c.b16 %v4231, %v4227
        %v4348 = vpack.c.b16 %v4236, %v4232
        %v4349 = vpack.c.b16 %v4237, %v4233
        %v4350 = vpack.c.b16 %v4238, %v4234
        %v4351 = vpack.c.b16 %v4239, %v4235
        %v4352 = vpack.c.b16 %v4244, %v4240
        %v4353 = vpack.c.b16 %v4245, %v4241
        %v4354 = vpack.c.b16 %v4246, %v4242
        %v4355 = vpack.c.b16 %v4247, %v4243
        %v4356 = vpack.c.b16 %v4252, %v4248
        %v4357 = vpack.c.b16 %v4253, %v4249
        %v4358 = vpack.c.b16 %v4254, %v4250
        %v4359 = vpack.c.b16 %v4255, %v4251
        %v4360 = vpack.c.b16 %v4260, %v4256
        %v4361 = vpack.c.b16 %v4261, %v4257
        %v4362 = vpack.c.b16 %v4262, %v4258
        %v4363 = vpack.c.b16 %v4263, %v4259
        %v4364 = vpack.c.b16 %v4268, %v4264
        %v4365 = vpack.c.b16 %v4269, %v4265
        %v4366 = vpack.c.b16 %v4270, %v4266
        %v4367 = vpack.c.b16 %v4271, %v4267
        %v4368 = vpack.c.b16 %v4276, %v4272
        %v4369 = vpack.c.b16 %v4277, %v4273
        %v4370 = vpack.c.b16 %v4278, %v4274
        %v4371 = vpack.c.b16 %v4279, %v4275
        %v4372 = vpack.c.b16 %v4284, %v4280
        %v4373 = vpack.c.b16 %v4285, %v4281
        %v4374 = vpack.c.b16 %v4286, %v4282
        %v4375 = vpack.c.b16 %v4287, %v4283
        %v4376 = vpack.c.b16 %v4292, %v4288
        %v4377 = vpack.c.b16 %v4293, %v4289
        %v4378 = vpack.c.b16 %v4294, %v4290
        %v4379 = vpack.c.b16 %v4295, %v4291
        %v4380 = vpack.c.b16 %v4300, %v4296
        %v4381 = vpack.c.b16 %v4301, %v4297
        %v4382 = vpack.c.b16 %v4302, %v4298
        %v4383 = vpack.c.b16 %v4303, %v4299
        %v4384 = vpack.c.b16 %v4308, %v4304
        %v4385 = vpack.c.b16 %v4309, %v4305
        %v4386 = vpack.c.b16 %v4310, %v4306
        %v4387 = vpack.c.b16 %v4311, %v4307
        %v4388 = vpack.c.b16 %v4316, %v4312
        %v4389 = vpack.c.b16 %v4317, %v4313
        %v4390 = vpack.c.b16 %v4318, %v4314
        %v4391 = vpack.c.b16 %v4319, %v4315
        %v4392 = vpack.c.b16 %v4324, %v4320
        %v4393 = vpack.c.b16 %v4325, %v4321
        %v4394 = vpack.c.b16 %v4326, %v4322
        %v4395 = vpack.c.b16 %v4327, %v4323
        %v4396 = vpack.c.b16 %v4332, %v4328
        %v4397 = vpack.c.b16 %v4333, %v4329
        %v4398 = vpack.c.b16 %v4334, %v4330
        %v4399 = vpack.c.b16 %v4335, %v4331
        %4464 = vmatprep.subr.bf16.mxu0 %v4365
        %4465 = vmatpush1.bf16.msra.mxu0 %v4364
        %4466 = vmatprep.subr.bf16.mxu0 %v4361
        %4467 = vmatpush1.bf16.msra.mxu0 %v4360
        %4468 = vmatprep.subr.bf16.mxu0 %v4357
        %4469 = vmatpush1.bf16.msra.mxu0 %v4356
        %4470 = vmatprep.subr.bf16.mxu0 %v4353
        %4471 = vmatpush1.bf16.msra.mxu0 %v4352
        %4472 = vmatprep.subr.bf16.mxu0 %v4349
        %4473 = vmatpush1.bf16.msra.mxu0 %v4348
        %4474 = vmatprep.subr.bf16.mxu0 %v4345
        %4475 = vmatpush1.bf16.msra.mxu0 %v4344
        %4476 = vmatprep.subr.bf16.mxu0 %v4341
        %4477 = vmatpush1.bf16.msra.mxu0 %v4340
        %4478 = vmatprep.subr.bf16.mxu0 %v4337
        %4479 = vmatpush1.bf16.msra.mxu0 %v4336
        %4480 = vmatprep.subr.bf16.mxu0 %v4397
        %4481 = vmatpush2.bf16.msra.mxu0 %v4396
        %4482 = vmatprep.subr.bf16.mxu0 %v4393
        %4483 = vmatpush2.bf16.msra.mxu0 %v4392
        %4484 = vmatprep.subr.bf16.mxu0 %v4389
        %4485 = vmatpush2.bf16.msra.mxu0 %v4388
        %4486 = vmatprep.subr.bf16.mxu0 %v4385
        %4487 = vmatpush2.bf16.msra.mxu0 %v4384
        %4488 = vmatprep.subr.bf16.mxu0 %v4381
        %4489 = vmatpush2.bf16.msra.mxu0 %v4380
        %4490 = vmatprep.subr.bf16.mxu0 %v4377
        %4491 = vmatpush2.bf16.msra.mxu0 %v4376
        %4492 = vmatprep.subr.bf16.mxu0 %v4373
        %4493 = vmatpush2.bf16.msra.mxu0 %v4372
        %4494 = vmatprep.subr.bf16.mxu0 %v4369
        %4495 = vmatpush2.bf16.msra.mxu0 %v4368
        %4496 = vmatprep.mubr.bf16.mxu0 %v4057
        %4497 = vmatmul.mubr.bf16.gmra.mxu0 %v4056
        %v4498 = vpop.f32.mrf.mxu0
        %v4499 = vadd.f32 %v4127, %v4498
        %v4500 = vpop.f32.mrf.mxu0
        %v4501 = vadd.f32 %v4131, %v4500
        %v4502 = vpop.f32.mrf.mxu0
        %v4503 = vpop.f32.mrf.mxu0
        %4504 = vdwg.mxu0
        %4505 = vmatprep.subr.bf16.mxu0 %v4367
        %4506 = vmatpush1.bf16.msra.mxu0 %v4366
        %4507 = vmatprep.subr.bf16.mxu0 %v4363
        %4508 = vmatpush1.bf16.msra.mxu0 %v4362
        %4509 = vmatprep.subr.bf16.mxu0 %v4359
        %4510 = vmatpush1.bf16.msra.mxu0 %v4358
        %4511 = vmatprep.subr.bf16.mxu0 %v4355
        %4512 = vmatpush1.bf16.msra.mxu0 %v4354
        %4513 = vmatprep.subr.bf16.mxu0 %v4351
        %4514 = vmatpush1.bf16.msra.mxu0 %v4350
        %4515 = vmatprep.subr.bf16.mxu0 %v4347
        %4516 = vmatpush1.bf16.msra.mxu0 %v4346
        %4517 = vmatprep.subr.bf16.mxu0 %v4343
        %4518 = vmatpush1.bf16.msra.mxu0 %v4342
        %4519 = vmatprep.subr.bf16.mxu0 %v4339
        %4520 = vmatpush1.bf16.msra.mxu0 %v4338
        %4521 = vmatprep.subr.bf16.mxu0 %v4399
        %4522 = vmatpush2.bf16.msra.mxu0 %v4398
        %4523 = vmatprep.subr.bf16.mxu0 %v4395
        %4524 = vmatpush2.bf16.msra.mxu0 %v4394
        %4525 = vmatprep.subr.bf16.mxu0 %v4391
        %4526 = vmatpush2.bf16.msra.mxu0 %v4390
        %4527 = vmatprep.subr.bf16.mxu0 %v4387
        %4528 = vmatpush2.bf16.msra.mxu0 %v4386
        %4529 = vmatprep.subr.bf16.mxu0 %v4383
        %4530 = vmatpush2.bf16.msra.mxu0 %v4382
        %4531 = vmatprep.subr.bf16.mxu0 %v4379
        %4532 = vmatpush2.bf16.msra.mxu0 %v4378
        %4533 = vmatprep.subr.bf16.mxu0 %v4375
        %4534 = vmatpush2.bf16.msra.mxu0 %v4374
        %4535 = vmatprep.subr.bf16.mxu0 %v4371
        %4536 = vmatpush2.bf16.msra.mxu0 %v4370
        %4537 = vmatprep.mubr.bf16.mxu0 %v4057
        %4538 = vmatmul.mubr.bf16.gmra.mxu0 %v4056
        %v4539 = vpop.f32.mrf.mxu0
        %v4540 = vadd.f32 %v4135, %v4539
        %v4541 = vpop.f32.mrf.mxu0
        %v4542 = vadd.f32 %v4139, %v4541
        %v4543 = vpop.f32.mrf.mxu0
        %v4544 = vpop.f32.mrf.mxu0
        %4545 = vdwg.mxu0
        %4546 = vmatprep.subr.mxu0 0.0
        %4547 = vmatpush1.xpose.msra.mxu0 0.0
        %4548 = vmatprep.subr.mxu0 0.0
        %4549 = vmatpush1.xpose.msra.mxu0 0.0
        %4550 = vmatprep.subr.mxu0 0.0
        %4551 = vmatpush1.xpose.msra.mxu0 0.0
        %4552 = vmatprep.subr.mxu0 0.0
        %4553 = vmatpush1.xpose.msra.mxu0 0.0
        %4554 = vmatprep.subr.mxu0 0.0
        %4555 = vmatpush1.xpose.msra.mxu0 0.0
        %4556 = vmatprep.subr.mxu0 0.0
        %4557 = vmatpush1.xpose.msra.mxu0 0.0
        %4558 = vmatprep.subr.mxu0 0.0
        %4559 = vmatpush1.xpose.msra.mxu0 0.0
        %4560 = vmatprep.subr.mxu0 0.0
        %4561 = vmatpush1.xpose.msra.mxu0 0.0
        %4562 = vmatprep.subr.mxu0 0.0
        %4563 = vmatpush1.xpose.msra.mxu0 0.0
        %4564 = vmatprep.subr.mxu0 0.0
        %4565 = vmatpush1.xpose.msra.mxu0 0.0
        %4566 = vmatprep.subr.mxu0 0.0
        %4567 = vmatpush1.xpose.msra.mxu0 0.0
        %4568 = vmatprep.subr.mxu0 0.0
        %4569 = vmatpush1.xpose.msra.mxu0 0.0
        %4570 = vmatprep.subr.mxu0 0.0
        %4571 = vmatpush1.xpose.msra.mxu0 0.0
        %4572 = vmatprep.subr.mxu0 0.0
        %4573 = vmatpush1.xpose.msra.mxu0 0.0
        %4574 = vmatprep.subr.mxu0 0.0
        %4575 = vmatpush1.xpose.msra.mxu0 0.0
        %4576 = vmatprep.subr.mxu0 %v4501
        %4577 = vmatpush1.xpose.msra.mxu0 %v4499
        %4578 = vmatprep.subr.mxu0 0.0
        %4579 = vmatpush2.xpose.msra.mxu0 0.0
        %4580 = vmatprep.subr.mxu0 0.0
        %4581 = vmatpush2.xpose.msra.mxu0 0.0
        %4582 = vmatprep.subr.mxu0 0.0
        %4583 = vmatpush2.xpose.msra.mxu0 0.0
        %4584 = vmatprep.subr.mxu0 0.0
        %4585 = vmatpush2.xpose.msra.mxu0 0.0
        %4586 = vmatprep.subr.mxu0 0.0
        %4587 = vmatpush2.xpose.msra.mxu0 0.0
        %4588 = vmatprep.subr.mxu0 0.0
        %4589 = vmatpush2.xpose.msra.mxu0 0.0
        %4590 = vmatprep.subr.mxu0 0.0
        %4591 = vmatpush2.xpose.msra.mxu0 0.0
        %4592 = vmatprep.subr.mxu0 0.0
        %4593 = vmatpush2.xpose.msra.mxu0 0.0
        %4594 = vmatprep.subr.mxu0 0.0
        %4595 = vmatpush2.xpose.msra.mxu0 0.0
        %4596 = vmatprep.subr.mxu0 0.0
        %4597 = vmatpush2.xpose.msra.mxu0 0.0
        %4598 = vmatprep.subr.mxu0 0.0
        %4599 = vmatpush2.xpose.msra.mxu0 0.0
        %4600 = vmatprep.subr.mxu0 0.0
        %4601 = vmatpush2.xpose.msra.mxu0 0.0
        %4602 = vmatprep.subr.mxu0 0.0
        %4603 = vmatpush2.xpose.msra.mxu0 0.0
        %4604 = vmatprep.subr.mxu0 0.0
        %4605 = vmatpush2.xpose.msra.mxu0 0.0
        %4606 = vmatprep.subr.mxu0 0.0
        %4607 = vmatpush2.xpose.msra.mxu0 0.0
        %4608 = vmatprep.subr.mxu0 0.0
        %4609 = vmatpush2.xpose.msra.mxu0 0.0
        %4610 = vmatprep.mubr.f32.mxu0 %v4052
        %4611 = vmatmul.mubr.f32.gmra.mxu0 %v4050
        %v4612 = vpop.f32.mrf.mxu0
        %v4613 = vadd.f32 0.0, %v4612
        %v4614 = vpop.f32.mrf.mxu0
        %4615 = vdwg.mxu0
        %v4616 = vsel %vm1653, %v4613, -inf
        %4617 = vmax.xlane.f32.xlu0 %v4616
        %v4618 = vpop.xlane.xlu0 %4617
        %v4619 = vsub.f32 %v4613, %v4618
        %v4620 = vmul.f32 %v4619, 1.442695
        %v4621 = vpow.pop %v4620
        %v4623 = vsel %vm1653, %v4621, 0
        %4625 = vmatprep.subr.mxu0 0.0
        %4626 = vmatpush1.msra.mxu0 0.0
        %4627 = vmatprep.subr.mxu0 0.0
        %4628 = vmatpush1.msra.mxu0 0.0
        %4629 = vmatprep.subr.mxu0 0.0
        %4630 = vmatpush1.msra.mxu0 0.0
        %4631 = vmatprep.subr.mxu0 0.0
        %4632 = vmatpush1.msra.mxu0 0.0
        %4633 = vmatprep.subr.mxu0 0.0
        %4634 = vmatpush1.msra.mxu0 0.0
        %4635 = vmatprep.subr.mxu0 0.0
        %4636 = vmatpush1.msra.mxu0 0.0
        %4637 = vmatprep.subr.mxu0 0.0
        %4638 = vmatpush1.msra.mxu0 0.0
        %4639 = vmatprep.subr.mxu0 0.0
        %4640 = vmatpush1.msra.mxu0 0.0
        %4641 = vmatprep.subr.mxu0 0.0
        %4642 = vmatpush1.msra.mxu0 0.0
        %4643 = vmatprep.subr.mxu0 0.0
        %4644 = vmatpush1.msra.mxu0 0.0
        %4645 = vmatprep.subr.mxu0 0.0
        %4646 = vmatpush1.msra.mxu0 0.0
        %4647 = vmatprep.subr.mxu0 0.0
        %4648 = vmatpush1.msra.mxu0 0.0
        %4649 = vmatprep.subr.mxu0 0.0
        %4650 = vmatpush1.msra.mxu0 0.0
        %4651 = vmatprep.subr.mxu0 0.0
        %4652 = vmatpush1.msra.mxu0 0.0
        %4653 = vmatprep.subr.mxu0 0.0
        %4654 = vmatpush1.msra.mxu0 0.0
        %4655 = vmatprep.subr.mxu0 %v4542
        %4656 = vmatpush1.msra.mxu0 %v4540
        %4657 = vmatprep.subr.mxu0 0.0
        %4658 = vmatpush2.msra.mxu0 0.0
        %4659 = vmatprep.subr.mxu0 0.0
        %4660 = vmatpush2.msra.mxu0 0.0
        %4661 = vmatprep.subr.mxu0 0.0
        %4662 = vmatpush2.msra.mxu0 0.0
        %4663 = vmatprep.subr.mxu0 0.0
        %4664 = vmatpush2.msra.mxu0 0.0
        %4665 = vmatprep.subr.mxu0 0.0
        %4666 = vmatpush2.msra.mxu0 0.0
        %4667 = vmatprep.subr.mxu0 0.0
        %4668 = vmatpush2.msra.mxu0 0.0
        %4669 = vmatprep.subr.mxu0 0.0
        %4670 = vmatpush2.msra.mxu0 0.0
        %4671 = vmatprep.subr.mxu0 0.0
        %4672 = vmatpush2.msra.mxu0 0.0
        %4673 = vmatprep.subr.mxu0 0.0
        %4674 = vmatpush2.msra.mxu0 0.0
        %4675 = vmatprep.subr.mxu0 0.0
        %4676 = vmatpush2.msra.mxu0 0.0
        %4677 = vmatprep.subr.mxu0 0.0
        %4678 = vmatpush2.msra.mxu0 0.0
        %4679 = vmatprep.subr.mxu0 0.0
        %4680 = vmatpush2.msra.mxu0 0.0
        %4681 = vmatprep.subr.mxu0 0.0
        %4682 = vmatpush2.msra.mxu0 0.0
        %4683 = vmatprep.subr.mxu0 0.0
        %4684 = vmatpush2.msra.mxu0 0.0
        %4685 = vmatprep.subr.mxu0 0.0
        %4686 = vmatpush2.msra.mxu0 0.0
        %4687 = vmatprep.subr.mxu0 0.0
        %4688 = vmatpush2.msra.mxu0 0.0
        %4689 = vmatprep.mubr.f32.mxu0 0.0
        %4690 = vmatmul.mubr.f32.gmra.mxu0 %v4623
        %v4691 = vpop.f32.mrf.mxu0
        %v4692 = vadd.f32 0.0, %v4691
        %v4693 = vpop.f32.mrf.mxu0
        %v4694 = vadd.f32 0.0, %v4693
        %4695 = vdwg.mxu0
        %v4696 = vsel %vm1653, %v4621, 0.0
        %4697 = vadd.xlane.f32.xlu0 %v4696
        %v4698 = vpop.xlane.xlu0 %4697
        %v4699 = vrcp.pop %v4698
        %v4700 = vmul.f32 %v4692, %v4699
        %v4701 = vmul.f32 %v4694, %v4699
        %v4702 = vpack.c.bf16 %v4700, %v4700
        %v4703 = vpack.c.bf16 %v4701, %v4701
        %v4704 = vld [vmem:[%s422 + $0x70] sm:$0xff]
        %v4705 = vld [vmem:[%s422 + $0xf8] sm:$0xff]
        %v4706 = vld [vmem:[%s422 + $0x180] sm:$0xff]
        %v4707 = vld [vmem:[%s422 + $0x208] sm:$0xff]
        %v4708 = vld [vmem:[%s422 + $0x290] sm:$0xff]
        %v4709 = vld [vmem:[%s422 + $0x318] sm:$0xff]
        %v4710 = vld [vmem:[%s422 + $0x3a0] sm:$0xff]
        %v4711 = vld [vmem:[%s422 + $0x428] sm:$0xff]
        %v4712 = vld [vmem:[%s422 + $0x4b0] sm:$0xff]
        %v4713 = vld [vmem:[%s422 + $0x538] sm:$0xff]
        %v4714 = vld [vmem:[%s422 + $0x5c0] sm:$0xff]
        %v4715 = vld [vmem:[%s422 + $0x648] sm:$0xff]
        %v4716 = vld [vmem:[%s422 + $0x6d0] sm:$0xff]
        %v4717 = vld [vmem:[%s422 + $0x758] sm:$0xff]
        %v4718 = vld [vmem:[%s422 + $0x7e0] sm:$0xff]
        %v4719 = vld [vmem:[%s422 + $0x868] sm:$0xff]
        %v4720 = vld [vmem:[%s422 + $0x8f0] sm:$0xff]
        %v4721 = vld [vmem:[%s422 + $0x978] sm:$0xff]
        %v4722 = vld [vmem:[%s422 + $0xa00] sm:$0xff]
        %v4723 = vld [vmem:[%s422 + $0xa88] sm:$0xff]
        %v4724 = vld [vmem:[%s422 + $0xb10] sm:$0xff]
        %v4725 = vld [vmem:[%s422 + $0xb98] sm:$0xff]
        %v4726 = vld [vmem:[%s422 + $0xc20] sm:$0xff]
        %v4727 = vld [vmem:[%s422 + $0xca8] sm:$0xff]
        %v4728 = vld [vmem:[%s422 + $0xd30] sm:$0xff]
        %v4729 = vld [vmem:[%s422 + $0xdb8] sm:$0xff]
        %v4730 = vld [vmem:[%s422 + $0xe40] sm:$0xff]
        %v4731 = vld [vmem:[%s422 + $0xec8] sm:$0xff]
        %v4732 = vld [vmem:[%s422 + $0xf50] sm:$0xff]
        %v4733 = vld [vmem:[%s422 + $0xfd8] sm:$0xff]
        %v4734 = vld [vmem:[%s422 + $0x1060] sm:$0xff]
        %v4735 = vld [vmem:[%s422 + $0x10e8] sm:$0xff]
        %v4736 = vld [vmem:[%s431 + $0x1c] sm:$0x3]
        %v4738 = vlaneseq
        %v4739 = vshrl.u32 %v4738, 7
        %v4740 = vsub.s32 0, %v4739
        %v4741 = vrot.slane %v4736, %v4740
        %v4742 = vlaneseq
        %v4743 = vshrl.u32 %v4742, 7
        %v4744 = vsub.s32 1, %v4743
        %v4745 = vrot.slane %v4736, %v4744
        %v4780 = vunpack.c.l.b16 %v4704
        %v4781 = vunpack.c.h.b16 %v4704
        %v4782 = vunpack.c.l.b16 %v4705
        %v4783 = vunpack.c.h.b16 %v4705
        %v4784 = vunpack.c.l.b16 %v4706
        %v4785 = vunpack.c.h.b16 %v4706
        %v4786 = vunpack.c.l.b16 %v4707
        %v4787 = vunpack.c.h.b16 %v4707
        %v4788 = vunpack.c.l.b16 %v4708
        %v4789 = vunpack.c.h.b16 %v4708
        %v4790 = vunpack.c.l.b16 %v4709
        %v4791 = vunpack.c.h.b16 %v4709
        %v4792 = vunpack.c.l.b16 %v4710
        %v4793 = vunpack.c.h.b16 %v4710
        %v4794 = vunpack.c.l.b16 %v4711
        %v4795 = vunpack.c.h.b16 %v4711
        %v4796 = vunpack.c.l.b16 %v4712
        %v4797 = vunpack.c.h.b16 %v4712
        %v4798 = vunpack.c.l.b16 %v4713
        %v4799 = vunpack.c.h.b16 %v4713
        %v4800 = vunpack.c.l.b16 %v4714
        %v4801 = vunpack.c.h.b16 %v4714
        %v4802 = vunpack.c.l.b16 %v4715
        %v4803 = vunpack.c.h.b16 %v4715
        %v4804 = vunpack.c.l.b16 %v4716
        %v4805 = vunpack.c.h.b16 %v4716
        %v4806 = vunpack.c.l.b16 %v4717
        %v4807 = vunpack.c.h.b16 %v4717
        %v4808 = vunpack.c.l.b16 %v4718
        %v4809 = vunpack.c.h.b16 %v4718
        %v4810 = vunpack.c.l.b16 %v4719
        %v4811 = vunpack.c.h.b16 %v4719
        %v4812 = vunpack.c.l.b16 %v4720
        %v4813 = vunpack.c.h.b16 %v4720
        %v4814 = vunpack.c.l.b16 %v4721
        %v4815 = vunpack.c.h.b16 %v4721
        %v4816 = vunpack.c.l.b16 %v4722
        %v4817 = vunpack.c.h.b16 %v4722
        %v4818 = vunpack.c.l.b16 %v4723
        %v4819 = vunpack.c.h.b16 %v4723
        %v4820 = vunpack.c.l.b16 %v4724
        %v4821 = vunpack.c.h.b16 %v4724
        %v4822 = vunpack.c.l.b16 %v4725
        %v4823 = vunpack.c.h.b16 %v4725
        %v4824 = vunpack.c.l.b16 %v4726
        %v4825 = vunpack.c.h.b16 %v4726
        %v4826 = vunpack.c.l.b16 %v4727
        %v4827 = vunpack.c.h.b16 %v4727
        %v4828 = vunpack.c.l.b16 %v4728
        %v4829 = vunpack.c.h.b16 %v4728
        %v4830 = vunpack.c.l.b16 %v4729
        %v4831 = vunpack.c.h.b16 %v4729
        %v4832 = vunpack.c.l.b16 %v4730
        %v4833 = vunpack.c.h.b16 %v4730
        %v4834 = vunpack.c.l.b16 %v4731
        %v4835 = vunpack.c.h.b16 %v4731
        %v4836 = vunpack.c.l.b16 %v4732
        %v4837 = vunpack.c.h.b16 %v4732
        %v4838 = vunpack.c.l.b16 %v4733
        %v4839 = vunpack.c.h.b16 %v4733
        %v4840 = vunpack.c.l.b16 %v4734
        %v4841 = vunpack.c.h.b16 %v4734
        %v4842 = vunpack.c.l.b16 %v4735
        %v4843 = vunpack.c.h.b16 %v4735
        %v4844 = vpack.c.b16 %v4782, %v4780
        %v4845 = vpack.c.b16 %v4783, %v4781
        %v4846 = vpack.c.b16 %v4786, %v4784
        %v4847 = vpack.c.b16 %v4787, %v4785
        %v4848 = vpack.c.b16 %v4790, %v4788
        %v4849 = vpack.c.b16 %v4791, %v4789
        %v4850 = vpack.c.b16 %v4794, %v4792
        %v4851 = vpack.c.b16 %v4795, %v4793
        %v4852 = vpack.c.b16 %v4798, %v4796
        %v4853 = vpack.c.b16 %v4799, %v4797
        %v4854 = vpack.c.b16 %v4802, %v4800
        %v4855 = vpack.c.b16 %v4803, %v4801
        %v4856 = vpack.c.b16 %v4806, %v4804
        %v4857 = vpack.c.b16 %v4807, %v4805
        %v4858 = vpack.c.b16 %v4810, %v4808
        %v4859 = vpack.c.b16 %v4811, %v4809
        %v4860 = vpack.c.b16 %v4814, %v4812
        %v4861 = vpack.c.b16 %v4815, %v4813
        %v4862 = vpack.c.b16 %v4818, %v4816
        %v4863 = vpack.c.b16 %v4819, %v4817
        %v4864 = vpack.c.b16 %v4822, %v4820
        %v4865 = vpack.c.b16 %v4823, %v4821
        %v4866 = vpack.c.b16 %v4826, %v4824
        %v4867 = vpack.c.b16 %v4827, %v4825
        %v4868 = vpack.c.b16 %v4830, %v4828
        %v4869 = vpack.c.b16 %v4831, %v4829
        %v4870 = vpack.c.b16 %v4834, %v4832
        %v4871 = vpack.c.b16 %v4835, %v4833
        %v4872 = vpack.c.b16 %v4838, %v4836
        %v4873 = vpack.c.b16 %v4839, %v4837
        %v4874 = vpack.c.b16 %v4842, %v4840
        %v4875 = vpack.c.b16 %v4843, %v4841
        %4908 = vmatprep.subr.bf16.mxu0 %v4859
        %4909 = vmatpush1.bf16.msra.mxu0 %v4858
        %4910 = vmatprep.subr.bf16.mxu0 %v4857
        %4911 = vmatpush1.bf16.msra.mxu0 %v4856
        %4912 = vmatprep.subr.bf16.mxu0 %v4855
        %4913 = vmatpush1.bf16.msra.mxu0 %v4854
        %4914 = vmatprep.subr.bf16.mxu0 %v4853
        %4915 = vmatpush1.bf16.msra.mxu0 %v4852
        %4916 = vmatprep.subr.bf16.mxu0 %v4851
        %4917 = vmatpush1.bf16.msra.mxu0 %v4850
        %4918 = vmatprep.subr.bf16.mxu0 %v4849
        %4919 = vmatpush1.bf16.msra.mxu0 %v4848
        %4920 = vmatprep.subr.bf16.mxu0 %v4847
        %4921 = vmatpush1.bf16.msra.mxu0 %v4846
        %4922 = vmatprep.subr.bf16.mxu0 %v4845
        %4923 = vmatpush1.bf16.msra.mxu0 %v4844
        %4924 = vmatprep.subr.bf16.mxu0 %v4875
        %4925 = vmatpush2.bf16.msra.mxu0 %v4874
        %4926 = vmatprep.subr.bf16.mxu0 %v4873
        %4927 = vmatpush2.bf16.msra.mxu0 %v4872
        %4928 = vmatprep.subr.bf16.mxu0 %v4871
        %4929 = vmatpush2.bf16.msra.mxu0 %v4870
        %4930 = vmatprep.subr.bf16.mxu0 %v4869
        %4931 = vmatpush2.bf16.msra.mxu0 %v4868
        %4932 = vmatprep.subr.bf16.mxu0 %v4867
        %4933 = vmatpush2.bf16.msra.mxu0 %v4866
        %4934 = vmatprep.subr.bf16.mxu0 %v4865
        %4935 = vmatpush2.bf16.msra.mxu0 %v4864
        %4936 = vmatprep.subr.bf16.mxu0 %v4863
        %4937 = vmatpush2.bf16.msra.mxu0 %v4862
        %4938 = vmatprep.subr.bf16.mxu0 %v4861
        %4939 = vmatpush2.bf16.msra.mxu0 %v4860
        %4940 = vmatprep.mubr.bf16.mxu0 %v4703
        %4941 = vmatmul.mubr.bf16.gmra.mxu0 %v4702
        %v4942 = vpop.f32.mrf.mxu0
        %v4943 = vadd.f32 %v4741, %v4942
        %v4944 = vpop.f32.mrf.mxu0
        %v4945 = vadd.f32 %v4745, %v4944
        %v4946 = vpop.f32.mrf.mxu0
        %v4947 = vpop.f32.mrf.mxu0
        %4948 = vdwg.mxu0
        %v4949 = vadd.f32 %v3807, %v4943
        %v4950 = vadd.f32 %v3808, %v4945
        %s4951 = scalar_lea.vmem %s440, 16 [#allocation14]
        %v4952 = vld [vmem:[%s4951] ss:$8 sm:$0x3]
        %s4953 = scalar_lea.vmem %s440, 17 [#allocation14]
        %v4954 = vld [vmem:[%s4953] ss:$8 sm:$0x3]
        %v4955 = vadd.f32 %v4949, %v4950
        %4956 = vadd.xlane.f32.xlu0 %v4955
        %v4957 = vpop.xlane.xlu0 %4956
        %v4958 = vmul.f32 %v4957, %v1995
        %v4959 = vsub.f32 %v4949, %v4958
        %v4960 = vsub.f32 %v4950, %v4958
        %v4961 = vmul.f32 %v4959, %v4959
        %v4962 = vmul.f32 %v4960, %v4960
        %v4963 = vadd.f32 %v4961, %v4962
        %4964 = vadd.xlane.f32.xlu0 %v4963
        %v4965 = vpop.xlane.xlu0 %4964
        %v4966 = vmul.f32 %v4965, %v1995
        %v4967 = vadd.f32 %v4966, 1e-05
        %v4968 = vrsqrt.pop %v4967
        %v4969 = vmul.f32 %v4959, %v4968
        %v4970 = vmul.f32 %v4960, %v4968
        %v4972 = vlaneseq
        %v4973 = vshrl.u32 %v4972, 7
        %v4974 = vsub.s32 0, %v4973
        %v4975 = vrot.slane %v4952, %v4974
        %v4976 = vlaneseq
        %v4977 = vshrl.u32 %v4976, 7
        %v4978 = vsub.s32 1, %v4977
        %v4979 = vrot.slane %v4952, %v4978
        %v4982 = vmul.f32 %v4969, %v4975
        %v4983 = vmul.f32 %v4970, %v4979
        %v4985 = vlaneseq
        %v4986 = vshrl.u32 %v4985, 7
        %v4987 = vsub.s32 0, %v4986
        %v4988 = vrot.slane %v4954, %v4987
        %v4989 = vlaneseq
        %v4990 = vshrl.u32 %v4989, 7
        %v4991 = vsub.s32 1, %v4990
        %v4992 = vrot.slane %v4954, %v4991
        %v4995 = vadd.f32 %v4982, %v4988
        %v4996 = vadd.f32 %v4983, %v4992
        %v4997 = vpack.c.bf16 %v4995, %v4995
        %v4998 = vpack.c.bf16 %v4996, %v4996
        %v4999 = vld [vmem:[%s422 + $0x78] sm:$0xff]
        %v5000 = vld [vmem:[%s422 + $0x100] sm:$0xff]
        %v5001 = vld [vmem:[%s422 + $0x188] sm:$0xff]
        %v5002 = vld [vmem:[%s422 + $0x210] sm:$0xff]
        %v5003 = vld [vmem:[%s422 + $0x298] sm:$0xff]
        %v5004 = vld [vmem:[%s422 + $0x320] sm:$0xff]
        %v5005 = vld [vmem:[%s422 + $0x3a8] sm:$0xff]
        %v5006 = vld [vmem:[%s422 + $0x430] sm:$0xff]
        %v5007 = vld [vmem:[%s422 + $0x4b8] sm:$0xff]
        %v5008 = vld [vmem:[%s422 + $0x540] sm:$0xff]
        %v5009 = vld [vmem:[%s422 + $0x5c8] sm:$0xff]
        %v5010 = vld [vmem:[%s422 + $0x650] sm:$0xff]
        %v5011 = vld [vmem:[%s422 + $0x6d8] sm:$0xff]
        %v5012 = vld [vmem:[%s422 + $0x760] sm:$0xff]
        %v5013 = vld [vmem:[%s422 + $0x7e8] sm:$0xff]
        %v5014 = vld [vmem:[%s422 + $0x870] sm:$0xff]
        %v5015 = vld [vmem:[%s422 + $0x8f8] sm:$0xff]
        %v5016 = vld [vmem:[%s422 + $0x980] sm:$0xff]
        %v5017 = vld [vmem:[%s422 + $0xa08] sm:$0xff]
        %v5018 = vld [vmem:[%s422 + $0xa90] sm:$0xff]
        %v5019 = vld [vmem:[%s422 + $0xb18] sm:$0xff]
        %v5020 = vld [vmem:[%s422 + $0xba0] sm:$0xff]
        %v5021 = vld [vmem:[%s422 + $0xc28] sm:$0xff]
        %v5022 = vld [vmem:[%s422 + $0xcb0] sm:$0xff]
        %v5023 = vld [vmem:[%s422 + $0xd38] sm:$0xff]
        %v5024 = vld [vmem:[%s422 + $0xdc0] sm:$0xff]
        %v5025 = vld [vmem:[%s422 + $0xe48] sm:$0xff]
        %v5026 = vld [vmem:[%s422 + $0xed0] sm:$0xff]
        %v5027 = vld [vmem:[%s422 + $0xf58] sm:$0xff]
        %v5028 = vld [vmem:[%s422 + $0xfe0] sm:$0xff]
        %v5029 = vld [vmem:[%s422 + $0x1068] sm:$0xff]
        %v5030 = vld [vmem:[%s422 + $0x10f0] sm:$0xff]
        %v5031 = vld [vmem:[%s431 + $0x1e] sm:$0x3]
        %v5033 = vlaneseq
        %v5034 = vshrl.u32 %v5033, 7
        %v5035 = vsub.s32 0, %v5034
        %v5036 = vrot.slane %v5031, %v5035
        %v5037 = vlaneseq
        %v5038 = vshrl.u32 %v5037, 7
        %v5039 = vsub.s32 1, %v5038
        %v5040 = vrot.slane %v5031, %v5039
        %v5075 = vunpack.c.l.b16 %v4999
        %v5076 = vunpack.c.h.b16 %v4999
        %v5077 = vunpack.c.l.b16 %v5000
        %v5078 = vunpack.c.h.b16 %v5000
        %v5079 = vunpack.c.l.b16 %v5001
        %v5080 = vunpack.c.h.b16 %v5001
        %v5081 = vunpack.c.l.b16 %v5002
        %v5082 = vunpack.c.h.b16 %v5002
        %v5083 = vunpack.c.l.b16 %v5003
        %v5084 = vunpack.c.h.b16 %v5003
        %v5085 = vunpack.c.l.b16 %v5004
        %v5086 = vunpack.c.h.b16 %v5004
        %v5087 = vunpack.c.l.b16 %v5005
        %v5088 = vunpack.c.h.b16 %v5005
        %v5089 = vunpack.c.l.b16 %v5006
        %v5090 = vunpack.c.h.b16 %v5006
        %v5091 = vunpack.c.l.b16 %v5007
        %v5092 = vunpack.c.h.b16 %v5007
        %v5093 = vunpack.c.l.b16 %v5008
        %v5094 = vunpack.c.h.b16 %v5008
        %v5095 = vunpack.c.l.b16 %v5009
        %v5096 = vunpack.c.h.b16 %v5009
        %v5097 = vunpack.c.l.b16 %v5010
        %v5098 = vunpack.c.h.b16 %v5010
        %v5099 = vunpack.c.l.b16 %v5011
        %v5100 = vunpack.c.h.b16 %v5011
        %v5101 = vunpack.c.l.b16 %v5012
        %v5102 = vunpack.c.h.b16 %v5012
        %v5103 = vunpack.c.l.b16 %v5013
        %v5104 = vunpack.c.h.b16 %v5013
        %v5105 = vunpack.c.l.b16 %v5014
        %v5106 = vunpack.c.h.b16 %v5014
        %v5107 = vunpack.c.l.b16 %v5015
        %v5108 = vunpack.c.h.b16 %v5015
        %v5109 = vunpack.c.l.b16 %v5016
        %v5110 = vunpack.c.h.b16 %v5016
        %v5111 = vunpack.c.l.b16 %v5017
        %v5112 = vunpack.c.h.b16 %v5017
        %v5113 = vunpack.c.l.b16 %v5018
        %v5114 = vunpack.c.h.b16 %v5018
        %v5115 = vunpack.c.l.b16 %v5019
        %v5116 = vunpack.c.h.b16 %v5019
        %v5117 = vunpack.c.l.b16 %v5020
        %v5118 = vunpack.c.h.b16 %v5020
        %v5119 = vunpack.c.l.b16 %v5021
        %v5120 = vunpack.c.h.b16 %v5021
        %v5121 = vunpack.c.l.b16 %v5022
        %v5122 = vunpack.c.h.b16 %v5022
        %v5123 = vunpack.c.l.b16 %v5023
        %v5124 = vunpack.c.h.b16 %v5023
        %v5125 = vunpack.c.l.b16 %v5024
        %v5126 = vunpack.c.h.b16 %v5024
        %v5127 = vunpack.c.l.b16 %v5025
        %v5128 = vunpack.c.h.b16 %v5025
        %v5129 = vunpack.c.l.b16 %v5026
        %v5130 = vunpack.c.h.b16 %v5026
        %v5131 = vunpack.c.l.b16 %v5027
        %v5132 = vunpack.c.h.b16 %v5027
        %v5133 = vunpack.c.l.b16 %v5028
        %v5134 = vunpack.c.h.b16 %v5028
        %v5135 = vunpack.c.l.b16 %v5029
        %v5136 = vunpack.c.h.b16 %v5029
        %v5137 = vunpack.c.l.b16 %v5030
        %v5138 = vunpack.c.h.b16 %v5030
        %v5139 = vpack.c.b16 %v5077, %v5075
        %v5140 = vpack.c.b16 %v5078, %v5076
        %v5141 = vpack.c.b16 %v5081, %v5079
        %v5142 = vpack.c.b16 %v5082, %v5080
        %v5143 = vpack.c.b16 %v5085, %v5083
        %v5144 = vpack.c.b16 %v5086, %v5084
        %v5145 = vpack.c.b16 %v5089, %v5087
        %v5146 = vpack.c.b16 %v5090, %v5088
        %v5147 = vpack.c.b16 %v5093, %v5091
        %v5148 = vpack.c.b16 %v5094, %v5092
        %v5149 = vpack.c.b16 %v5097, %v5095
        %v5150 = vpack.c.b16 %v5098, %v5096
        %v5151 = vpack.c.b16 %v5101, %v5099
        %v5152 = vpack.c.b16 %v5102, %v5100
        %v5153 = vpack.c.b16 %v5105, %v5103
        %v5154 = vpack.c.b16 %v5106, %v5104
        %v5155 = vpack.c.b16 %v5109, %v5107
        %v5156 = vpack.c.b16 %v5110, %v5108
        %v5157 = vpack.c.b16 %v5113, %v5111
        %v5158 = vpack.c.b16 %v5114, %v5112
        %v5159 = vpack.c.b16 %v5117, %v5115
        %v5160 = vpack.c.b16 %v5118, %v5116
        %v5161 = vpack.c.b16 %v5121, %v5119
        %v5162 = vpack.c.b16 %v5122, %v5120
        %v5163 = vpack.c.b16 %v5125, %v5123
        %v5164 = vpack.c.b16 %v5126, %v5124
        %v5165 = vpack.c.b16 %v5129, %v5127
        %v5166 = vpack.c.b16 %v5130, %v5128
        %v5167 = vpack.c.b16 %v5133, %v5131
        %v5168 = vpack.c.b16 %v5134, %v5132
        %v5169 = vpack.c.b16 %v5137, %v5135
        %v5170 = vpack.c.b16 %v5138, %v5136
        %5203 = vmatprep.subr.bf16.mxu0 %v5154
        %5204 = vmatpush1.bf16.msra.mxu0 %v5153
        %5205 = vmatprep.subr.bf16.mxu0 %v5152
        %5206 = vmatpush1.bf16.msra.mxu0 %v5151
        %5207 = vmatprep.subr.bf16.mxu0 %v5150
        %5208 = vmatpush1.bf16.msra.mxu0 %v5149
        %5209 = vmatprep.subr.bf16.mxu0 %v5148
        %5210 = vmatpush1.bf16.msra.mxu0 %v5147
        %5211 = vmatprep.subr.bf16.mxu0 %v5146
        %5212 = vmatpush1.bf16.msra.mxu0 %v5145
        %5213 = vmatprep.subr.bf16.mxu0 %v5144
        %5214 = vmatpush1.bf16.msra.mxu0 %v5143
        %5215 = vmatprep.subr.bf16.mxu0 %v5142
        %5216 = vmatpush1.bf16.msra.mxu0 %v5141
        %5217 = vmatprep.subr.bf16.mxu0 %v5140
        %5218 = vmatpush1.bf16.msra.mxu0 %v5139
        %5219 = vmatprep.subr.bf16.mxu0 %v5170
        %5220 = vmatpush2.bf16.msra.mxu0 %v5169
        %5221 = vmatprep.subr.bf16.mxu0 %v5168
        %5222 = vmatpush2.bf16.msra.mxu0 %v5167
        %5223 = vmatprep.subr.bf16.mxu0 %v5166
        %5224 = vmatpush2.bf16.msra.mxu0 %v5165
        %5225 = vmatprep.subr.bf16.mxu0 %v5164
        %5226 = vmatpush2.bf16.msra.mxu0 %v5163
        %5227 = vmatprep.subr.bf16.mxu0 %v5162
        %5228 = vmatpush2.bf16.msra.mxu0 %v5161
        %5229 = vmatprep.subr.bf16.mxu0 %v5160
        %5230 = vmatpush2.bf16.msra.mxu0 %v5159
        %5231 = vmatprep.subr.bf16.mxu0 %v5158
        %5232 = vmatpush2.bf16.msra.mxu0 %v5157
        %5233 = vmatprep.subr.bf16.mxu0 %v5156
        %5234 = vmatpush2.bf16.msra.mxu0 %v5155
        %5235 = vmatprep.mubr.bf16.mxu0 %v4998
        %5236 = vmatmul.mubr.bf16.gmra.mxu0 %v4997
        %v5237 = vpop.f32.mrf.mxu0
        %v5238 = vadd.f32 %v5036, %v5237
        %v5239 = vpop.f32.mrf.mxu0
        %v5240 = vadd.f32 %v5040, %v5239
        %v5241 = vpop.f32.mrf.mxu0
        %v5242 = vpop.f32.mrf.mxu0
        %5243 = vdwg.mxu0
        %v5244 = vmax.f32 %v5238, 0.0
        %v5245 = vmax.f32 %v5240, 0.0
        %v5246 = vpack.c.bf16 %v5244, %v5244
        %v5247 = vpack.c.bf16 %v5245, %v5245
        %v5248 = vld [vmem:[%s422 + $0x80] sm:$0xff]
        %v5249 = vld [vmem:[%s422 + $0x108] sm:$0xff]
        %v5250 = vld [vmem:[%s422 + $0x190] sm:$0xff]
        %v5251 = vld [vmem:[%s422 + $0x218] sm:$0xff]
        %v5252 = vld [vmem:[%s422 + $0x2a0] sm:$0xff]
        %v5253 = vld [vmem:[%s422 + $0x328] sm:$0xff]
        %v5254 = vld [vmem:[%s422 + $0x3b0] sm:$0xff]
        %v5255 = vld [vmem:[%s422 + $0x438] sm:$0xff]
        %v5256 = vld [vmem:[%s422 + $0x4c0] sm:$0xff]
        %v5257 = vld [vmem:[%s422 + $0x548] sm:$0xff]
        %v5258 = vld [vmem:[%s422 + $0x5d0] sm:$0xff]
        %v5259 = vld [vmem:[%s422 + $0x658] sm:$0xff]
        %v5260 = vld [vmem:[%s422 + $0x6e0] sm:$0xff]
        %v5261 = vld [vmem:[%s422 + $0x768] sm:$0xff]
        %v5262 = vld [vmem:[%s422 + $0x7f0] sm:$0xff]
        %v5263 = vld [vmem:[%s422 + $0x878] sm:$0xff]
        %v5264 = vld [vmem:[%s422 + $0x900] sm:$0xff]
        %v5265 = vld [vmem:[%s422 + $0x988] sm:$0xff]
        %v5266 = vld [vmem:[%s422 + $0xa10] sm:$0xff]
        %v5267 = vld [vmem:[%s422 + $0xa98] sm:$0xff]
        %v5268 = vld [vmem:[%s422 + $0xb20] sm:$0xff]
        %v5269 = vld [vmem:[%s422 + $0xba8] sm:$0xff]
        %v5270 = vld [vmem:[%s422 + $0xc30] sm:$0xff]
        %v5271 = vld [vmem:[%s422 + $0xcb8] sm:$0xff]
        %v5272 = vld [vmem:[%s422 + $0xd40] sm:$0xff]
        %v5273 = vld [vmem:[%s422 + $0xdc8] sm:$0xff]
        %v5274 = vld [vmem:[%s422 + $0xe50] sm:$0xff]
        %v5275 = vld [vmem:[%s422 + $0xed8] sm:$0xff]
        %v5276 = vld [vmem:[%s422 + $0xf60] sm:$0xff]
        %v5277 = vld [vmem:[%s422 + $0xfe8] sm:$0xff]
        %v5278 = vld [vmem:[%s422 + $0x1070] sm:$0xff]
        %v5279 = vld [vmem:[%s422 + $0x10f8] sm:$0xff]
        %v5280 = vld [vmem:[%s431 + $0x20] sm:$0x3]
        %v5282 = vlaneseq
        %v5283 = vshrl.u32 %v5282, 7
        %v5284 = vsub.s32 0, %v5283
        %v5285 = vrot.slane %v5280, %v5284
        %v5286 = vlaneseq
        %v5287 = vshrl.u32 %v5286, 7
        %v5288 = vsub.s32 1, %v5287
        %v5289 = vrot.slane %v5280, %v5288
        %v5324 = vunpack.c.l.b16 %v5248
        %v5325 = vunpack.c.h.b16 %v5248
        %v5326 = vunpack.c.l.b16 %v5249
        %v5327 = vunpack.c.h.b16 %v5249
        %v5328 = vunpack.c.l.b16 %v5250
        %v5329 = vunpack.c.h.b16 %v5250
        %v5330 = vunpack.c.l.b16 %v5251
        %v5331 = vunpack.c.h.b16 %v5251
        %v5332 = vunpack.c.l.b16 %v5252
        %v5333 = vunpack.c.h.b16 %v5252
        %v5334 = vunpack.c.l.b16 %v5253
        %v5335 = vunpack.c.h.b16 %v5253
        %v5336 = vunpack.c.l.b16 %v5254
        %v5337 = vunpack.c.h.b16 %v5254
        %v5338 = vunpack.c.l.b16 %v5255
        %v5339 = vunpack.c.h.b16 %v5255
        %v5340 = vunpack.c.l.b16 %v5256
        %v5341 = vunpack.c.h.b16 %v5256
        %v5342 = vunpack.c.l.b16 %v5257
        %v5343 = vunpack.c.h.b16 %v5257
        %v5344 = vunpack.c.l.b16 %v5258
        %v5345 = vunpack.c.h.b16 %v5258
        %v5346 = vunpack.c.l.b16 %v5259
        %v5347 = vunpack.c.h.b16 %v5259
        %v5348 = vunpack.c.l.b16 %v5260
        %v5349 = vunpack.c.h.b16 %v5260
        %v5350 = vunpack.c.l.b16 %v5261
        %v5351 = vunpack.c.h.b16 %v5261
        %v5352 = vunpack.c.l.b16 %v5262
        %v5353 = vunpack.c.h.b16 %v5262
        %v5354 = vunpack.c.l.b16 %v5263
        %v5355 = vunpack.c.h.b16 %v5263
        %v5356 = vunpack.c.l.b16 %v5264
        %v5357 = vunpack.c.h.b16 %v5264
        %v5358 = vunpack.c.l.b16 %v5265
        %v5359 = vunpack.c.h.b16 %v5265
        %v5360 = vunpack.c.l.b16 %v5266
        %v5361 = vunpack.c.h.b16 %v5266
        %v5362 = vunpack.c.l.b16 %v5267
        %v5363 = vunpack.c.h.b16 %v5267
        %v5364 = vunpack.c.l.b16 %v5268
        %v5365 = vunpack.c.h.b16 %v5268
        %v5366 = vunpack.c.l.b16 %v5269
        %v5367 = vunpack.c.h.b16 %v5269
        %v5368 = vunpack.c.l.b16 %v5270
        %v5369 = vunpack.c.h.b16 %v5270
        %v5370 = vunpack.c.l.b16 %v5271
        %v5371 = vunpack.c.h.b16 %v5271
        %v5372 = vunpack.c.l.b16 %v5272
        %v5373 = vunpack.c.h.b16 %v5272
        %v5374 = vunpack.c.l.b16 %v5273
        %v5375 = vunpack.c.h.b16 %v5273
        %v5376 = vunpack.c.l.b16 %v5274
        %v5377 = vunpack.c.h.b16 %v5274
        %v5378 = vunpack.c.l.b16 %v5275
        %v5379 = vunpack.c.h.b16 %v5275
        %v5380 = vunpack.c.l.b16 %v5276
        %v5381 = vunpack.c.h.b16 %v5276
        %v5382 = vunpack.c.l.b16 %v5277
        %v5383 = vunpack.c.h.b16 %v5277
        %v5384 = vunpack.c.l.b16 %v5278
        %v5385 = vunpack.c.h.b16 %v5278
        %v5386 = vunpack.c.l.b16 %v5279
        %v5387 = vunpack.c.h.b16 %v5279
        %v5388 = vpack.c.b16 %v5326, %v5324
        %v5389 = vpack.c.b16 %v5327, %v5325
        %v5390 = vpack.c.b16 %v5330, %v5328
        %v5391 = vpack.c.b16 %v5331, %v5329
        %v5392 = vpack.c.b16 %v5334, %v5332
        %v5393 = vpack.c.b16 %v5335, %v5333
        %v5394 = vpack.c.b16 %v5338, %v5336
        %v5395 = vpack.c.b16 %v5339, %v5337
        %v5396 = vpack.c.b16 %v5342, %v5340
        %v5397 = vpack.c.b16 %v5343, %v5341
        %v5398 = vpack.c.b16 %v5346, %v5344
        %v5399 = vpack.c.b16 %v5347, %v5345
        %v5400 = vpack.c.b16 %v5350, %v5348
        %v5401 = vpack.c.b16 %v5351, %v5349
        %v5402 = vpack.c.b16 %v5354, %v5352
        %v5403 = vpack.c.b16 %v5355, %v5353
        %v5404 = vpack.c.b16 %v5358, %v5356
        %v5405 = vpack.c.b16 %v5359, %v5357
        %v5406 = vpack.c.b16 %v5362, %v5360
        %v5407 = vpack.c.b16 %v5363, %v5361
        %v5408 = vpack.c.b16 %v5366, %v5364
        %v5409 = vpack.c.b16 %v5367, %v5365
        %v5410 = vpack.c.b16 %v5370, %v5368
        %v5411 = vpack.c.b16 %v5371, %v5369
        %v5412 = vpack.c.b16 %v5374, %v5372
        %v5413 = vpack.c.b16 %v5375, %v5373
        %v5414 = vpack.c.b16 %v5378, %v5376
        %v5415 = vpack.c.b16 %v5379, %v5377
        %v5416 = vpack.c.b16 %v5382, %v5380
        %v5417 = vpack.c.b16 %v5383, %v5381
        %v5418 = vpack.c.b16 %v5386, %v5384
        %v5419 = vpack.c.b16 %v5387, %v5385
        %5452 = vmatprep.subr.bf16.mxu0 %v5403
        %5453 = vmatpush1.bf16.msra.mxu0 %v5402
        %5454 = vmatprep.subr.bf16.mxu0 %v5401
        %5455 = vmatpush1.bf16.msra.mxu0 %v5400
        %5456 = vmatprep.subr.bf16.mxu0 %v5399
        %5457 = vmatpush1.bf16.msra.mxu0 %v5398
        %5458 = vmatprep.subr.bf16.mxu0 %v5397
        %5459 = vmatpush1.bf16.msra.mxu0 %v5396
        %5460 = vmatprep.subr.bf16.mxu0 %v5395
        %5461 = vmatpush1.bf16.msra.mxu0 %v5394
        %5462 = vmatprep.subr.bf16.mxu0 %v5393
        %5463 = vmatpush1.bf16.msra.mxu0 %v5392
        %5464 = vmatprep.subr.bf16.mxu0 %v5391
        %5465 = vmatpush1.bf16.msra.mxu0 %v5390
        %5466 = vmatprep.subr.bf16.mxu0 %v5389
        %5467 = vmatpush1.bf16.msra.mxu0 %v5388
        %5468 = vmatprep.subr.bf16.mxu0 %v5419
        %5469 = vmatpush2.bf16.msra.mxu0 %v5418
        %5470 = vmatprep.subr.bf16.mxu0 %v5417
        %5471 = vmatpush2.bf16.msra.mxu0 %v5416
        %5472 = vmatprep.subr.bf16.mxu0 %v5415
        %5473 = vmatpush2.bf16.msra.mxu0 %v5414
        %5474 = vmatprep.subr.bf16.mxu0 %v5413
        %5475 = vmatpush2.bf16.msra.mxu0 %v5412
        %5476 = vmatprep.subr.bf16.mxu0 %v5411
        %5477 = vmatpush2.bf16.msra.mxu0 %v5410
        %5478 = vmatprep.subr.bf16.mxu0 %v5409
        %5479 = vmatpush2.bf16.msra.mxu0 %v5408
        %5480 = vmatprep.subr.bf16.mxu0 %v5407
        %5481 = vmatpush2.bf16.msra.mxu0 %v5406
        %5482 = vmatprep.subr.bf16.mxu0 %v5405
        %5483 = vmatpush2.bf16.msra.mxu0 %v5404
        %5484 = vmatprep.mubr.bf16.mxu0 %v5247
        %5485 = vmatmul.mubr.bf16.gmra.mxu0 %v5246
        %v5486 = vpop.f32.mrf.mxu0
        %v5487 = vadd.f32 %v5285, %v5486
        %v5488 = vpop.f32.mrf.mxu0
        %v5489 = vadd.f32 %v5289, %v5488
        %v5490 = vpop.f32.mrf.mxu0
        %v5491 = vpop.f32.mrf.mxu0
        %5492 = vdwg.mxu0
        %v5493 = vadd.f32 %v4995, %v5487
        %v5494 = vadd.f32 %v4996, %v5489
        %s5495 = scalar_lea.vmem %s440, 18 [#allocation14]
        %v5496 = vld [vmem:[%s5495] ss:$8 sm:$0x3]
        %s5497 = scalar_lea.vmem %s440, 19 [#allocation14]
        %v5498 = vld [vmem:[%s5497] ss:$8 sm:$0x3]
        %v5499 = vadd.f32 %v5493, %v5494
        %5500 = vadd.xlane.f32.xlu0 %v5499
        %v5501 = vpop.xlane.xlu0 %5500
        %v5502 = vmul.f32 %v5501, %v1995
        %v5503 = vsub.f32 %v5493, %v5502
        %v5504 = vsub.f32 %v5494, %v5502
        %v5505 = vmul.f32 %v5503, %v5503
        %v5506 = vmul.f32 %v5504, %v5504
        %v5507 = vadd.f32 %v5505, %v5506
        %5508 = vadd.xlane.f32.xlu0 %v5507
        %v5509 = vpop.xlane.xlu0 %5508
        %v5510 = vmul.f32 %v5509, %v1995
        %v5511 = vadd.f32 %v5510, 1e-05
        %v5512 = vrsqrt.pop %v5511
        %v5513 = vmul.f32 %v5503, %v5512
        %v5514 = vmul.f32 %v5504, %v5512
        %v5516 = vlaneseq
        %v5517 = vshrl.u32 %v5516, 7
        %v5518 = vsub.s32 0, %v5517
        %v5519 = vrot.slane %v5496, %v5518
        %v5520 = vlaneseq
        %v5521 = vshrl.u32 %v5520, 7
        %v5522 = vsub.s32 1, %v5521
        %v5523 = vrot.slane %v5496, %v5522
        %v5526 = vmul.f32 %v5513, %v5519
        %v5527 = vmul.f32 %v5514, %v5523
        %v5529 = vlaneseq
        %v5530 = vshrl.u32 %v5529, 7
        %v5531 = vsub.s32 0, %v5530
        %v5532 = vrot.slane %v5498, %v5531
        %v5533 = vlaneseq
        %v5534 = vshrl.u32 %v5533, 7
        %v5535 = vsub.s32 1, %v5534
        %v5536 = vrot.slane %v5498, %v5535
        %v5539 = vadd.f32 %v5526, %v5532
        %v5540 = vadd.f32 %v5527, %v5536
        %s5541 = scalar_lea.vmem %s440, 20 [#allocation14]
        %v5542 = vld [vmem:[%s5541] ss:$8 sm:$0x3]
        %s5543 = scalar_lea.vmem %s440, 21 [#allocation14]
        %v5544 = vld [vmem:[%s5543] ss:$8 sm:$0x3]
        %v5545 = vadd.f32 %v5539, %v5540
        %5546 = vadd.xlane.f32.xlu0 %v5545
        %v5547 = vpop.xlane.xlu0 %5546
        %v5548 = vmul.f32 %v5547, %v1995
        %v5549 = vsub.f32 %v5539, %v5548
        %v5550 = vsub.f32 %v5540, %v5548
        %v5551 = vmul.f32 %v5549, %v5549
        %v5552 = vmul.f32 %v5550, %v5550
        %v5553 = vadd.f32 %v5551, %v5552
        %5554 = vadd.xlane.f32.xlu0 %v5553
        %v5555 = vpop.xlane.xlu0 %5554
        %v5556 = vmul.f32 %v5555, %v1995
        %v5557 = vadd.f32 %v5556, 1e-05
        %v5558 = vrsqrt.pop %v5557
        %v5559 = vmul.f32 %v5549, %v5558
        %v5560 = vmul.f32 %v5550, %v5558
        %v5562 = vlaneseq
        %v5563 = vshrl.u32 %v5562, 7
        %v5564 = vsub.s32 0, %v5563
        %v5565 = vrot.slane %v5542, %v5564
        %v5566 = vlaneseq
        %v5567 = vshrl.u32 %v5566, 7
        %v5568 = vsub.s32 1, %v5567
        %v5569 = vrot.slane %v5542, %v5568
        %v5572 = vmul.f32 %v5559, %v5565
        %v5573 = vmul.f32 %v5560, %v5569
        %v5575 = vlaneseq
        %v5576 = vshrl.u32 %v5575, 7
        %v5577 = vsub.s32 0, %v5576
        %v5578 = vrot.slane %v5544, %v5577
        %v5579 = vlaneseq
        %v5580 = vshrl.u32 %v5579, 7
        %v5581 = vsub.s32 1, %v5580
        %v5582 = vrot.slane %v5544, %v5581
        %v5585 = vadd.f32 %v5572, %v5578
        %v5586 = vadd.f32 %v5573, %v5582
        %v5587 = vmax.f32 %v5585, 0.0
        %v5588 = vmax.f32 %v5586, 0.0
        %v5589 = vadd.f32 %v593, %v5587
        %v5590 = vadd.f32 %v594, %v5588
        %5591 = vst [vmem:[#allocation2] sm:$0xff] %v5589
        %5592 = vst [vmem:[#allocation2 + $0x8] sm:$0xff] %v5590
        %p5593 = scmp.eq.s32.totalorder %s29, 2
        // Predicated region
        $region93: #{humann_forward.1} parent=55 // pred_check
          %p5594 = pneg %p5593
        $region94: #{humann_forward.1} parent=55 // pred_check_branch
          %5596 = sbr.rel (%p5594) target = $region96
        $region95: #{humann_forward.1} parent=55 // pred_region
          %v5597 = vld [vmem:[#allocation2] sm:$0xff]
          %v5598 = vld [vmem:[#allocation2 + $0x8] sm:$0xff]
          %v5599 = vld [vmem:[#allocation8] sm:$0xff]
          %v5600 = vld [vmem:[#allocation8 + $0x8] sm:$0xff]
          %v5601 = vld [vmem:[#allocation8 + $0x10] sm:$0xff]
          %v5602 = vld [vmem:[#allocation8 + $0x18] sm:$0xff]
          %v5603 = vld [vmem:[#allocation8 + $0x20] sm:$0xff]
          %v5604 = vld [vmem:[#allocation8 + $0x28] sm:$0xff]
          %v5605 = vld [vmem:[#allocation8 + $0x30] sm:$0xff]
          %v5606 = vld [vmem:[#allocation8 + $0x38] sm:$0xff]
          %v5607 = vld [vmem:[#allocation8 + $0x40] sm:$0xff]
          %v5608 = vld [vmem:[#allocation8 + $0x48] sm:$0xff]
          %v5609 = vld [vmem:[#allocation8 + $0x50] sm:$0xff]
          %v5610 = vld [vmem:[#allocation8 + $0x58] sm:$0xff]
          %v5611 = vld [vmem:[#allocation8 + $0x60] sm:$0xff]
          %v5612 = vld [vmem:[#allocation8 + $0x68] sm:$0xff]
          %v5613 = vld [vmem:[#allocation8 + $0x70] sm:$0xff]
          %v5614 = vld [vmem:[#allocation8 + $0x78] sm:$0xff]
          %v5615 = vld [vmem:[#allocation8 + $0x80] sm:$0xff]
          %v5616 = vld [vmem:[#allocation8 + $0x88] sm:$0xff]
          %v5617 = vld [vmem:[#allocation8 + $0x90] sm:$0xff]
          %v5618 = vld [vmem:[#allocation8 + $0x98] sm:$0xff]
          %v5619 = vld [vmem:[#allocation8 + $0xa0] sm:$0xff]
          %v5620 = vld [vmem:[#allocation8 + $0xa8] sm:$0xff]
          %v5621 = vld [vmem:[#allocation8 + $0xb0] sm:$0xff]
          %v5622 = vld [vmem:[#allocation8 + $0xb8] sm:$0xff]
          %v5623 = vld [vmem:[#allocation8 + $0xc0] sm:$0xff]
          %v5624 = vld [vmem:[#allocation8 + $0xc8] sm:$0xff]
          %v5625 = vld [vmem:[#allocation8 + $0xd0] sm:$0xff]
          %v5626 = vld [vmem:[#allocation8 + $0xd8] sm:$0xff]
          %v5627 = vld [vmem:[#allocation8 + $0xe0] sm:$0xff]
          %v5628 = vld [vmem:[#allocation8 + $0xe8] sm:$0xff]
          %v5629 = vld [vmem:[#allocation8 + $0xf0] sm:$0xff]
          %v5630 = vld [vmem:[#allocation8 + $0xf8] sm:$0xff]
          %v5631 = vld [vmem:[#allocation10] sm:$0x1]
          %v5633 = vlaneseq
          %v5634 = vshrl.u32 %v5633, 7
          %v5635 = vsub.s32 0, %v5634
          %v5636 = vrot.slane %v5631, %v5635
          %5638 = vmatprep.subr.mxu0 0.0
          %5639 = vmatpush1.msra.mxu0 %v5614
          %5640 = vmatprep.subr.mxu0 0.0
          %5641 = vmatpush1.msra.mxu0 %v5613
          %5642 = vmatprep.subr.mxu0 0.0
          %5643 = vmatpush1.msra.mxu0 %v5612
          %5644 = vmatprep.subr.mxu0 0.0
          %5645 = vmatpush1.msra.mxu0 %v5611
          %5646 = vmatprep.subr.mxu0 0.0
          %5647 = vmatpush1.msra.mxu0 %v5610
          %5648 = vmatprep.subr.mxu0 0.0
          %5649 = vmatpush1.msra.mxu0 %v5609
          %5650 = vmatprep.subr.mxu0 0.0
          %5651 = vmatpush1.msra.mxu0 %v5608
          %5652 = vmatprep.subr.mxu0 0.0
          %5653 = vmatpush1.msra.mxu0 %v5607
          %5654 = vmatprep.subr.mxu0 0.0
          %5655 = vmatpush1.msra.mxu0 %v5606
          %5656 = vmatprep.subr.mxu0 0.0
          %5657 = vmatpush1.msra.mxu0 %v5605
          %5658 = vmatprep.subr.mxu0 0.0
          %5659 = vmatpush1.msra.mxu0 %v5604
          %5660 = vmatprep.subr.mxu0 0.0
          %5661 = vmatpush1.msra.mxu0 %v5603
          %5662 = vmatprep.subr.mxu0 0.0
          %5663 = vmatpush1.msra.mxu0 %v5602
          %5664 = vmatprep.subr.mxu0 0.0
          %5665 = vmatpush1.msra.mxu0 %v5601
          %5666 = vmatprep.subr.mxu0 0.0
          %5667 = vmatpush1.msra.mxu0 %v5600
          %5668 = vmatprep.subr.mxu0 0.0
          %5669 = vmatpush1.msra.mxu0 %v5599
          %5670 = vmatprep.subr.mxu0 0.0
          %5671 = vmatpush2.msra.mxu0 %v5630
          %5672 = vmatprep.subr.mxu0 0.0
          %5673 = vmatpush2.msra.mxu0 %v5629
          %5674 = vmatprep.subr.mxu0 0.0
          %5675 = vmatpush2.msra.mxu0 %v5628
          %5676 = vmatprep.subr.mxu0 0.0
          %5677 = vmatpush2.msra.mxu0 %v5627
          %5678 = vmatprep.subr.mxu0 0.0
          %5679 = vmatpush2.msra.mxu0 %v5626
          %5680 = vmatprep.subr.mxu0 0.0
          %5681 = vmatpush2.msra.mxu0 %v5625
          %5682 = vmatprep.subr.mxu0 0.0
          %5683 = vmatpush2.msra.mxu0 %v5624
          %5684 = vmatprep.subr.mxu0 0.0
          %5685 = vmatpush2.msra.mxu0 %v5623
          %5686 = vmatprep.subr.mxu0 0.0
          %5687 = vmatpush2.msra.mxu0 %v5622
          %5688 = vmatprep.subr.mxu0 0.0
          %5689 = vmatpush2.msra.mxu0 %v5621
          %5690 = vmatprep.subr.mxu0 0.0
          %5691 = vmatpush2.msra.mxu0 %v5620
          %5692 = vmatprep.subr.mxu0 0.0
          %5693 = vmatpush2.msra.mxu0 %v5619
          %5694 = vmatprep.subr.mxu0 0.0
          %5695 = vmatpush2.msra.mxu0 %v5618
          %5696 = vmatprep.subr.mxu0 0.0
          %5697 = vmatpush2.msra.mxu0 %v5617
          %5698 = vmatprep.subr.mxu0 0.0
          %5699 = vmatpush2.msra.mxu0 %v5616
          %5700 = vmatprep.subr.mxu0 0.0
          %5701 = vmatpush2.msra.mxu0 %v5615
          %5702 = vmatprep.mubr.f32.mxu0 %v5598
          %5703 = vmatmul.mubr.f32.gmra.mxu0 %v5597
          %v5704 = vpop.f32.mrf.mxu0
          %v5705 = vadd.f32 %v5636, %v5704
          %v5706 = vpop.f32.mrf.mxu0
          %5707 = vdwg.mxu0
          %5708 = vst [vmem:[%s9] sm:$0xff] %v5705
        $region96: #{humann_forward.1} parent=55 // pred_fallthru
          _
        // Predicated region
        $region97: #{humann_forward.1} parent=55 // pred_check
          %p5709 = pneg %p246
        $region98: #{humann_forward.1} parent=55 // pred_check_branch
          %5711 = sbr.rel (%p5709) target = $region100
        $region99: #{humann_forward.1} parent=55 // pred_region
          _
        $region100: #{humann_forward.1} parent=55 // pred_fallthru
          _
        // Predicated region
        $region101: #{humann_forward.1} parent=55 // pred_check
          %p5712 = pneg %p246
        $region102: #{humann_forward.1} parent=55 // pred_check_branch
          %5714 = sbr.rel (%p5712) target = $region104
        $region103: #{humann_forward.1} parent=55 // pred_region
          _
        $region104: #{humann_forward.1} parent=55 // pred_fallthru
          _
      $region56: #{humann_forward.1} parent=5 // pred_fallthru
        _
      %p5715 = scmp.le.s32.totalorder 2, %s24
      // Predicated region
      $region105: #{humann_forward.1} parent=5 // pred_check
        %p5716 = pneg %p5715
      $region106: #{humann_forward.1} parent=5 // pred_check_branch
        %5718 = sbr.rel (%p5716) target = $region108
      $region107: #{humann_forward.1} parent=5 // pred_region
        %s5719 = ssub.s32 %s24, 2
      $region108: #{humann_forward.1} parent=5 // pred_fallthru
        _
    $region6: #{humann_forward.1} parent=1 // loop_footer
      %s28 = sadd.s32 1, %s24
    $region7: #{humann_forward.1} parent=1 // loop_footer_branch
      %23 = sbr.rel target = $region3
    $region8: #{humann_forward.1} parent=1 // loop_exit
      _
    %5720 = vsyncpa [#allocation4], 1
    %s5721 = scalar_lea.sflag [#allocation4], 1
    %5722 = vsyncpa %s5721, 1
    %5723 = vsyncpa [#allocation6], 1
    %5724 = vsyncpa [#allocation9], 1
    %5725 = vsyncpa [#allocation12], 1
    %s5726 = scalar_lea.sflag [#allocation12], 1
    %5727 = vsyncpa %s5726, 1
    %5728 = vsyncpa [#allocation15], 1
    %s5729 = scalar_lea.sflag [#allocation15], 1
    %5730 = vsyncpa %s5729, 1

</llo_original>
